<compile_context>
chip_gen: v7x
topology: tpu7x:2x2x1
jax: 0.10.0
libtpu: 0.0.40
codegen_flags: <defaults>
</compile_context>

<pallas_src>
import functools

import jax
import jax.numpy as jnp
from jax.experimental import pallas as pl
from jax.experimental.pallas import tpu as pltpu

C_PAIR = 128     # c_pair (module default)
NUM_HEAD = 4     # num_head (module default)
LN_EPS = 1e-5
NEG_BIG = 1e9
VMEM_LIMIT = 48 * 1024 * 1024


# ---------------------------------------------------------------------------
# Kernel 1: LayerNorm + fused pair-bias projection (emitted in (H, row, key)
#           layout, bf16) + fused k|v projection (bf16).
#   grid = (B//tb, N//tn), block = (tb, tn, C) pair rows.
# ---------------------------------------------------------------------------
def ln_bias_kv_kernel(x_ref, g_ref, b_ref, wb_ref, wkv_ref,
                      y_ref, bias_ref, kv_ref):
    tb, tn, c = x_ref.shape
    x = x_ref[...].reshape(tb * tn, c).astype(jnp.float32)
    mu = jnp.mean(x, axis=-1, keepdims=True)
    xc = x - mu
    var = jnp.mean(xc * xc, axis=-1, keepdims=True)
    y = xc * jax.lax.rsqrt(var + LN_EPS) * g_ref[...] + b_ref[...]   # f32 stats
    y16 = y.astype(jnp.bfloat16)
    y_ref[...] = y16.reshape(tb, tn, c)

    # fused k|v projection (C -> 2C), bf16 operands, f32 accumulation
    kv = jnp.dot(y16, wkv_ref[...], preferred_element_type=jnp.float32)
    kv_ref[...] = kv.astype(jnp.bfloat16).reshape(tb, tn, 2 * c)

    # pair bias directly in (head, query-row, key) layout, lane-dense over keys,
    # stored bf16.  One small (H,C) x (C,tn) matmul per local pair row.
    for t in range(tb):
        bt = jax.lax.dot_general(
            wb_ref[...], y16[t * tn:(t + 1) * tn, :],
            dimension_numbers=(((1,), (1,)), ((), ())),
            preferred_element_type=jnp.float32)                      # (H, tn)
        bias_ref[:, t, :] = bt.astype(jnp.bfloat16)


# ---------------------------------------------------------------------------
# Kernel 2: fused q|gate projection + biased & masked softmax attention +
#           gating + output projection.
#   grid = (query tile qi, batch row b): the bias tile (H, tq, N) is constant
#   across the inner b loop, so it is fetched from HBM once per qi.
# ---------------------------------------------------------------------------
def attention_kernel(x_q_ref, kv_ref, amask_ref, bias_ref, w_qg_ref, w_o_ref,
                     o_ref, *, num_head):
    tq, c = x_q_ref.shape[1], x_q_ref.shape[2]
    h = num_head
    d = c // h

    # fused q | gate projection for this query tile (1/sqrt(D) folded into Wq)
    qg = jnp.dot(x_q_ref[0], w_qg_ref[...],
                 preferred_element_type=jnp.float32)                 # (tq, 2C)
    gate = jax.nn.sigmoid(qg[:, c:])                                 # f32 (EUP)
    q = qg[:, :c].astype(jnp.bfloat16)

    kv = kv_ref[0]                                                   # (N, 2C)
    amask = amask_ref[0]                                             # (1, N)

    outs = []
    for hh in range(h):                       # static head loop, lane slices
        q_h = q[:, hh * d:(hh + 1) * d]                              # (tq, D)
        k_h = kv[:, hh * d:(hh + 1) * d]                             # (N, D)
        v_h = kv[:, c + hh * d:c + (hh + 1) * d]                     # (N, D)
        s = jax.lax.dot_general(q_h, k_h,
                                dimension_numbers=(((1,), (1,)), ((), ())),
                                preferred_element_type=jnp.float32)  # (tq, N)
        s = s + bias_ref[hh].astype(jnp.float32) + amask
        s = s - jnp.max(s, axis=-1, keepdims=True)
        p = jnp.exp(s)
        p = p * pl.reciprocal(jnp.sum(p, axis=-1, keepdims=True), approx=True)
        outs.append(jnp.dot(p.astype(jnp.bfloat16), v_h,
                            preferred_element_type=jnp.float32))     # (tq, D)

    wa = (jnp.concatenate(outs, axis=-1) * gate).astype(jnp.bfloat16)  # (tq, C)
    o_ref[0] = jnp.dot(wa, w_o_ref[...],
                       preferred_element_type=jnp.float32).astype(o_ref.dtype)


# ---------------------------------------------------------------------------
# Wrapper
# ---------------------------------------------------------------------------
def attention_mix(pair, mask, params, *, tq=None, tb=None, tn=None):
    B, N, C = pair.shape
    H = NUM_HEAD
    assert C % H == 0
    D = C // H
    assert B == N, "pair-bias broadcast (as in the PyTorch ref) requires B == N"

    if tb is None:
        tb = 8 if B % 8 == 0 else B
    assert B % tb == 0 and (tb == B or tb % 8 == 0)
    if tn is None:
        tn = N
        if N > 1024:
            for cand in (1024, 512, 256, 128):
                if N % cand == 0:
                    tn = cand
                    break
    assert N % tn == 0 and (tn == N or tn % 128 == 0)
    if tq is None:
        tq = N
        for cand in (256, 128):
            if N > cand and N % cand == 0:
                tq = cand
                break
    assert N % tq == 0 and (tq == N or tq % 8 == 0)

    f32, bf16 = jnp.float32, jnp.bfloat16

    gamma = params["ln_gamma"].reshape(1, C).astype(f32)
    beta = params["ln_beta"].reshape(1, C).astype(f32)
    wb_hc = params["w_bias"].T.astype(bf16)                          # (H, C)
    # Fold the 1/sqrt(D) scale into Wq; fuse q|gate and k|v weight pairs.
    w_qg = jnp.concatenate([params["w_q"] * (D ** -0.5), params["w_gate"]],
                           axis=1).astype(bf16)                      # (C, 2C)
    w_kv = jnp.concatenate([params["w_k"], params["w_v"]],
                           axis=1).astype(bf16)                      # (C, 2C)
    w_o = params["w_out"].astype(bf16)                               # (C, C)

    # --- Kernel 1: LayerNorm + bias (H,B,N) bf16 + kv (B,N,2C) bf16 ---
    ln_cost = pl.CostEstimate(
        flops=int(B * N * (10 * C + 4 * C * C + 2 * C * H)),
        transcendentals=int(B * N),
        bytes_accessed=int(B * N * C * 4 + B * N * C * 2 + B * N * 2 * C * 2
                           + H * B * N * 2 + (2 * C * C + H * C) * 2))

    pair_n, bias_hbn, kv = pl.pallas_call(
        ln_bias_kv_kernel,
        out_shape=(jax.ShapeDtypeStruct((B, N, C), bf16),
                   jax.ShapeDtypeStruct((H, B, N), bf16),
                   jax.ShapeDtypeStruct((B, N, 2 * C), bf16)),
        grid=(B // tb, N // tn),
        in_specs=[
            pl.BlockSpec((tb, tn, C), lambda i, j: (i, j, 0)),
            pl.BlockSpec((1, C), lambda i, j: (0, 0)),
            pl.BlockSpec((1, C), lambda i, j: (0, 0)),
            pl.BlockSpec((H, C), lambda i, j: (0, 0)),
            pl.BlockSpec((C, 2 * C), lambda i, j: (0, 0)),
        ],
        out_specs=(pl.BlockSpec((tb, tn, C), lambda i, j: (i, j, 0)),
                   pl.BlockSpec((H, tb, tn), lambda i, j: (0, i, j)),
                   pl.BlockSpec((tb, tn, 2 * C), lambda i, j: (i, j, 0))),
        compiler_params=pltpu.CompilerParams(
            dimension_semantics=("parallel", "arbitrary"),
            vmem_limit_bytes=VMEM_LIMIT),
        cost_estimate=ln_cost,
    )(pair, gamma, beta, wb_hc, w_kv)

    # Additive key mask: 0 where kept, -1e9 where masked (equals masked_fill
    # for any key row that has at least one unmasked key).
    add_mask = ((mask.astype(f32) - 1.0) * NEG_BIG).reshape(B, 1, N)

    # --- Kernel 2: fused attention ---
    attn_cost = pl.CostEstimate(
        flops=int(B * N * (4 * C * C + 2 * C * C) + 4 * B * N * N * C),
        transcendentals=int(B * H * N * N + B * N * C),
        bytes_accessed=int(B * N * C * 2 + B * (N // tq) * N * 2 * C * 2
                           + H * N * N * 2 + B * (N // tq) * N * 4
                           + B * N * C * 2 + (4 * C * C + C * C) * 2))

    out = pl.pallas_call(
        functools.partial(attention_kernel, num_head=H),
        out_shape=jax.ShapeDtypeStruct((B, N, C), bf16),
        grid=(N // tq, B),
        in_specs=[
            pl.BlockSpec((1, tq, C), lambda qi, b: (b, qi, 0)),     # queries
            pl.BlockSpec((1, N, 2 * C), lambda qi, b: (b, 0, 0)),   # k|v row
            pl.BlockSpec((1, 1, N), lambda qi, b: (b, 0, 0)),       # add. mask
            pl.BlockSpec((H, tq, N), lambda qi, b: (0, qi, 0)),     # pair bias
            pl.BlockSpec((C, 2 * C), lambda qi, b: (0, 0)),         # Wq|Wg
            pl.BlockSpec((C, C), lambda qi, b: (0, 0)),             # Wo
        ],
        out_specs=pl.BlockSpec((1, tq, C), lambda qi, b: (b, qi, 0)),
        compiler_params=pltpu.CompilerParams(
            dimension_semantics=("parallel", "arbitrary"),
            vmem_limit_bytes=VMEM_LIMIT),
        cost_estimate=attn_cost,
    )(pair_n, kv, add_mask, bias_hbn, w_qg, w_o)
    return out


# ---------------------------------------------------------------------------
# Pure-JAX f32 reference (mirrors the PyTorch forward) for verification.
# ---------------------------------------------------------------------------
def attention_mix_ref(pair, mask, params):
    B, N, C = pair.shape
    H, D = NUM_HEAD, C // NUM_HEAD
    mu = jnp.mean(pair, axis=-1, keepdims=True)
    var = jnp.mean((pair - mu) ** 2, axis=-1, keepdims=True)
    x = (pair - mu) * jax.lax.rsqrt(var + LN_EPS) * params["ln_gamma"] + params["ln_beta"]
    bias = jnp.einsum("ijc,ch->hij", x, params["w_bias"])            # (H, B, N)
    q = (x @ params["w_q"]).reshape(B, N, H, D).transpose(0, 2, 1, 3)
    k = (x @ params["w_k"]).reshape(B, N, H, D).transpose(0, 2, 1, 3)
    v = (x @ params["w_v"]).reshape(B, N, H, D).transpose(0, 2, 1, 3)
    logits = jnp.einsum("bhid,bhjd->bhij", q, k) * (D ** -0.5) + bias[None]
    logits = jnp.where(mask[:, None, None, :] > 0, logits, -NEG_BIG)
    w = jax.nn.softmax(logits, axis=-1)
    wa = jnp.einsum("bhij,bhjd->bhid", w, v)
    wa = wa.transpose(0, 2, 1, 3).reshape(B, N, C)
    wa = wa * jax.nn.sigmoid(x @ params["w_gate"])
    return wa @ params["w_out"]


if __name__ == "__main__":
    B = N = 16           # num_res (B == N, required by the pair-bias broadcast)
    C = C_PAIR           # 128
    H = NUM_HEAD         # 4

    key = jax.random.PRNGKey(0)
    ks = jax.random.split(key, 8)

    def w_init(k, shape, scale=0.05):
        return jax.random.normal(k, shape, dtype=jnp.float32) * scale

    # nn.Linear(in, out, bias=False).weight is (out, in); we store the
    # transposed (in, out) matrices directly and compute x @ W.
    params = {
        "ln_gamma": jnp.ones((C,), jnp.float32),
        "ln_beta": jnp.zeros((C,), jnp.float32),
        "w_bias": w_init(ks[0], (C, H)),     # pair_bias_projection
        "w_q": w_init(ks[1], (C, C)),
        "w_k": w_init(ks[2], (C, C)),
        "w_v": w_init(ks[3], (C, C)),
        "w_gate": w_init(ks[4], (C, C)),
        "w_out": w_init(ks[5], (C, C)),
    }

    pair = jax.random.normal(ks[6], (B, N, C), dtype=jnp.float32)
    mask = (jax.random.uniform(ks[7], (B, N)) < 0.9).astype(jnp.float32)

    fn = jax.jit(functools.partial(attention_mix, tq=8, tb=8))
    out = jax.block_until_ready(fn(pair, mask, params))

    ref = attention_mix_ref(pair, mask, params)
    assert out.shape == (B, N, C)
    max_err = float(jnp.max(jnp.abs(out.astype(jnp.float32) - ref)))
    # bf16 matmul operands / bf16 bias + output, f32 accumulation -> relaxed tol
    assert max_err < 3e-2, max_err

    print("KERNEL_OK")
</pallas_src>

<mosaic_0001>
module attributes {stable_mosaic.version = 11 : i64} {
  func.func @ln_bias_kv_kernel(%arg0: i32, %arg1: i32, %arg2: memref<8x16x128xf32, #tpu.memory_space<vmem>>, %arg3: memref<1x128xf32, #tpu.memory_space<vmem>>, %arg4: memref<1x128xf32, #tpu.memory_space<vmem>>, %arg5: memref<4x128xbf16, #tpu.memory_space<vmem>>, %arg6: memref<128x256xbf16, #tpu.memory_space<vmem>>, %arg7: memref<8x16x128xbf16, #tpu.memory_space<vmem>>, %arg8: memref<4x8x16xbf16, #tpu.memory_space<vmem>>, %arg9: memref<8x16x256xbf16, #tpu.memory_space<vmem>>) attributes {dimension_semantics = [#tpu.dimension_semantics<parallel>, #tpu.dimension_semantics<arbitrary>], iteration_bounds = array<i64: 2, 1>, scalar_prefetch = 0 : i64, scratch_operands = 0 : i64, tpu.core_type = #tpu.core_type<tc>, window_params = [{transform_indices = @transform_0, window_bounds = array<i64: 8, 16, 128>}, {pipeline_mode = #tpu.pipeline_mode<synchronous>, transform_indices = @transform_1, window_bounds = array<i64: 1, 128>}, {pipeline_mode = #tpu.pipeline_mode<synchronous>, transform_indices = @transform_2, window_bounds = array<i64: 1, 128>}, {pipeline_mode = #tpu.pipeline_mode<synchronous>, transform_indices = @transform_3, window_bounds = array<i64: 4, 128>}, {pipeline_mode = #tpu.pipeline_mode<synchronous>, transform_indices = @transform_4, window_bounds = array<i64: 128, 256>}, {transform_indices = @transform_5, window_bounds = array<i64: 8, 16, 128>}, {transform_indices = @transform_6, window_bounds = array<i64: 4, 8, 16>}, {transform_indices = @transform_7, window_bounds = array<i64: 8, 16, 256>}]} {
    %c0 = arith.constant 0 : index
    %c0_0 = arith.constant 0 : index
    %c0_1 = arith.constant 0 : index
    %0 = vector.load %arg2[%c0, %c0_0, %c0_1] : memref<8x16x128xf32, #tpu.memory_space<vmem>>, vector<8x16x128xf32>
    %1 = vector.shape_cast %0 : vector<8x16x128xf32> to vector<128x128xf32>
    %cst = arith.constant dense<0.000000e+00> : vector<128xf32>
    %2 = vector.multi_reduction <add>, %1, %cst [1] : vector<128x128xf32> to vector<128xf32>
    %3 = vector.shape_cast %2 : vector<128xf32> to vector<128x1xf32>
    %cst_2 = arith.constant 1.280000e+02 : f32
    %4 = vector.broadcast %cst_2 : f32 to vector<128x1xf32>
    %5 = arith.divf %3, %4 : vector<128x1xf32>
    %6 = vector.broadcast %5 : vector<128x1xf32> to vector<128x128xf32>
    %7 = arith.subf %1, %6 : vector<128x128xf32>
    %8 = arith.mulf %7, %7 : vector<128x128xf32>
    %cst_3 = arith.constant dense<0.000000e+00> : vector<128xf32>
    %9 = vector.multi_reduction <add>, %8, %cst_3 [1] : vector<128x128xf32> to vector<128xf32>
    %10 = vector.shape_cast %9 : vector<128xf32> to vector<128x1xf32>
    %cst_4 = arith.constant 1.280000e+02 : f32
    %11 = vector.broadcast %cst_4 : f32 to vector<128x1xf32>
    %12 = arith.divf %10, %11 : vector<128x1xf32>
    %cst_5 = arith.constant 9.99999974E-6 : f32
    %13 = vector.broadcast %cst_5 : f32 to vector<128x1xf32>
    %14 = arith.addf %12, %13 : vector<128x1xf32>
    %15 = math.rsqrt %14 : vector<128x1xf32>
    %16 = vector.broadcast %15 : vector<128x1xf32> to vector<128x128xf32>
    %17 = arith.mulf %7, %16 : vector<128x128xf32>
    %c0_6 = arith.constant 0 : index
    %c0_7 = arith.constant 0 : index
    %18 = vector.load %arg3[%c0_6, %c0_7] : memref<1x128xf32, #tpu.memory_space<vmem>>, vector<1x128xf32>
    %19 = vector.broadcast %18 : vector<1x128xf32> to vector<128x128xf32>
    %20 = arith.mulf %17, %19 : vector<128x128xf32>
    %c0_8 = arith.constant 0 : index
    %c0_9 = arith.constant 0 : index
    %21 = vector.load %arg4[%c0_8, %c0_9] : memref<1x128xf32, #tpu.memory_space<vmem>>, vector<1x128xf32>
    %22 = vector.broadcast %21 : vector<1x128xf32> to vector<128x128xf32>
    %23 = arith.addf %20, %22 : vector<128x128xf32>
    %24 = arith.truncf %23 : vector<128x128xf32> to vector<128x128xbf16>
    %25 = vector.shape_cast %24 : vector<128x128xbf16> to vector<8x16x128xbf16>
    %c0_10 = arith.constant 0 : index
    %c0_11 = arith.constant 0 : index
    %c0_12 = arith.constant 0 : index
    %26 = vector.load %arg7[%c0_10, %c0_11, %c0_12] : memref<8x16x128xbf16, #tpu.memory_space<vmem>>, vector<8x16x128xbf16>
    tpu.vector_store %arg7[%c0_10, %c0_11, %c0_12], %25 {strides = array<i32>} : memref<8x16x128xbf16, #tpu.memory_space<vmem>>, vector<8x16x128xbf16>,
    %c0_13 = arith.constant 0 : index
    %c0_14 = arith.constant 0 : index
    %27 = vector.load %arg6[%c0_13, %c0_14] : memref<128x256xbf16, #tpu.memory_space<vmem>>, vector<128x256xbf16>
    %cst_15 = arith.constant dense<0.000000e+00> : vector<128x256xf32>
    %28 = tpu.matmul %24, %27, %cst_15 {dimension_numbers = #tpu.dot_dimension_numbers<[1], [0], [0], [1], [0, 0, 1, 1], [], []>} : vector<128x128xbf16>, vector<128x256xbf16>, vector<128x256xf32> -> vector<128x256xf32>
    %29 = arith.truncf %28 : vector<128x256xf32> to vector<128x256xbf16>
    %30 = vector.shape_cast %29 : vector<128x256xbf16> to vector<8x16x256xbf16>
    %c0_16 = arith.constant 0 : index
    %c0_17 = arith.constant 0 : index
    %c0_18 = arith.constant 0 : index
    %31 = vector.load %arg9[%c0_16, %c0_17, %c0_18] : memref<8x16x256xbf16, #tpu.memory_space<vmem>>, vector<8x16x256xbf16>
    tpu.vector_store %arg9[%c0_16, %c0_17, %c0_18], %30 {strides = array<i32>} : memref<8x16x256xbf16, #tpu.memory_space<vmem>>, vector<8x16x256xbf16>,
    %c0_19 = arith.constant 0 : index
    %c0_20 = arith.constant 0 : index
    %32 = vector.load %arg5[%c0_19, %c0_20] : memref<4x128xbf16, #tpu.memory_space<vmem>>, vector<4x128xbf16>
    %33 = vector.extract_strided_slice %24 {offsets = [0, 0], sizes = [16, 128], strides = [1, 1]} : vector<128x128xbf16> to vector<16x128xbf16>
    %cst_21 = arith.constant dense<0.000000e+00> : vector<4x16xf32>
    %34 = tpu.matmul %32, %33, %cst_21 {dimension_numbers = #tpu.dot_dimension_numbers<[1], [1], [0], [0], [0, 0, 1, 0], [], []>} : vector<4x128xbf16>, vector<16x128xbf16>, vector<4x16xf32> -> vector<4x16xf32>
    %35 = arith.truncf %34 : vector<4x16xf32> to vector<4x16xbf16>
    %c0_22 = arith.constant 0 : index
    %c0_23 = arith.constant 0 : index
    %c0_24 = arith.constant 0 : index
    %36 = vector.load %arg8[%c0_22, %c0_23, %c0_24] : memref<4x8x16xbf16, #tpu.memory_space<vmem>>, vector<4x1x16xbf16>
    %37 = vector.shape_cast %36 : vector<4x1x16xbf16> to vector<4x16xbf16>
    %38 = vector.shape_cast %35 : vector<4x16xbf16> to vector<4x1x16xbf16>
    tpu.vector_store %arg8[%c0_22, %c0_23, %c0_24], %38 {strides = array<i32>} : memref<4x8x16xbf16, #tpu.memory_space<vmem>>, vector<4x1x16xbf16>,
    %c0_25 = arith.constant 0 : index
    %c0_26 = arith.constant 0 : index
    %39 = vector.load %arg5[%c0_25, %c0_26] : memref<4x128xbf16, #tpu.memory_space<vmem>>, vector<4x128xbf16>
    %40 = vector.extract_strided_slice %24 {offsets = [16, 0], sizes = [16, 128], strides = [1, 1]} : vector<128x128xbf16> to vector<16x128xbf16>
    %cst_27 = arith.constant dense<0.000000e+00> : vector<4x16xf32>
    %41 = tpu.matmul %39, %40, %cst_27 {dimension_numbers = #tpu.dot_dimension_numbers<[1], [1], [0], [0], [0, 0, 1, 0], [], []>} : vector<4x128xbf16>, vector<16x128xbf16>, vector<4x16xf32> -> vector<4x16xf32>
    %42 = arith.truncf %41 : vector<4x16xf32> to vector<4x16xbf16>
    %c0_28 = arith.constant 0 : index
    %c1 = arith.constant 1 : index
    %c0_29 = arith.constant 0 : index
    %43 = vector.load %arg8[%c0_28, %c1, %c0_29] : memref<4x8x16xbf16, #tpu.memory_space<vmem>>, vector<4x1x16xbf16>
    %44 = vector.shape_cast %43 : vector<4x1x16xbf16> to vector<4x16xbf16>
    %45 = vector.shape_cast %42 : vector<4x16xbf16> to vector<4x1x16xbf16>
    tpu.vector_store %arg8[%c0_28, %c1, %c0_29], %45 {strides = array<i32>} : memref<4x8x16xbf16, #tpu.memory_space<vmem>>, vector<4x1x16xbf16>,
    %c0_30 = arith.constant 0 : index
    %c0_31 = arith.constant 0 : index
    %46 = vector.load %arg5[%c0_30, %c0_31] : memref<4x128xbf16, #tpu.memory_space<vmem>>, vector<4x128xbf16>
    %47 = vector.extract_strided_slice %24 {offsets = [32, 0], sizes = [16, 128], strides = [1, 1]} : vector<128x128xbf16> to vector<16x128xbf16>
    %cst_32 = arith.constant dense<0.000000e+00> : vector<4x16xf32>
    %48 = tpu.matmul %46, %47, %cst_32 {dimension_numbers = #tpu.dot_dimension_numbers<[1], [1], [0], [0], [0, 0, 1, 0], [], []>} : vector<4x128xbf16>, vector<16x128xbf16>, vector<4x16xf32> -> vector<4x16xf32>
    %49 = arith.truncf %48 : vector<4x16xf32> to vector<4x16xbf16>
    %c0_33 = arith.constant 0 : index
    %c2 = arith.constant 2 : index
    %c0_34 = arith.constant 0 : index
    %50 = vector.load %arg8[%c0_33, %c2, %c0_34] : memref<4x8x16xbf16, #tpu.memory_space<vmem>>, vector<4x1x16xbf16>
    %51 = vector.shape_cast %50 : vector<4x1x16xbf16> to vector<4x16xbf16>
    %52 = vector.shape_cast %49 : vector<4x16xbf16> to vector<4x1x16xbf16>
    tpu.vector_store %arg8[%c0_33, %c2, %c0_34], %52 {strides = array<i32>} : memref<4x8x16xbf16, #tpu.memory_space<vmem>>, vector<4x1x16xbf16>,
    %c0_35 = arith.constant 0 : index
    %c0_36 = arith.constant 0 : index
    %53 = vector.load %arg5[%c0_35, %c0_36] : memref<4x128xbf16, #tpu.memory_space<vmem>>, vector<4x128xbf16>
    %54 = vector.extract_strided_slice %24 {offsets = [48, 0], sizes = [16, 128], strides = [1, 1]} : vector<128x128xbf16> to vector<16x128xbf16>
    %cst_37 = arith.constant dense<0.000000e+00> : vector<4x16xf32>
    %55 = tpu.matmul %53, %54, %cst_37 {dimension_numbers = #tpu.dot_dimension_numbers<[1], [1], [0], [0], [0, 0, 1, 0], [], []>} : vector<4x128xbf16>, vector<16x128xbf16>, vector<4x16xf32> -> vector<4x16xf32>
    %56 = arith.truncf %55 : vector<4x16xf32> to vector<4x16xbf16>
    %c0_38 = arith.constant 0 : index
    %c3 = arith.constant 3 : index
    %c0_39 = arith.constant 0 : index
    %57 = vector.load %arg8[%c0_38, %c3, %c0_39] : memref<4x8x16xbf16, #tpu.memory_space<vmem>>, vector<4x1x16xbf16>
    %58 = vector.shape_cast %57 : vector<4x1x16xbf16> to vector<4x16xbf16>
    %59 = vector.shape_cast %56 : vector<4x16xbf16> to vector<4x1x16xbf16>
    tpu.vector_store %arg8[%c0_38, %c3, %c0_39], %59 {strides = array<i32>} : memref<4x8x16xbf16, #tpu.memory_space<vmem>>, vector<4x1x16xbf16>,
    %c0_40 = arith.constant 0 : index
    %c0_41 = arith.constant 0 : index
    %60 = vector.load %arg5[%c0_40, %c0_41] : memref<4x128xbf16, #tpu.memory_space<vmem>>, vector<4x128xbf16>
    %61 = vector.extract_strided_slice %24 {offsets = [64, 0], sizes = [16, 128], strides = [1, 1]} : vector<128x128xbf16> to vector<16x128xbf16>
    %cst_42 = arith.constant dense<0.000000e+00> : vector<4x16xf32>
    %62 = tpu.matmul %60, %61, %cst_42 {dimension_numbers = #tpu.dot_dimension_numbers<[1], [1], [0], [0], [0, 0, 1, 0], [], []>} : vector<4x128xbf16>, vector<16x128xbf16>, vector<4x16xf32> -> vector<4x16xf32>
    %63 = arith.truncf %62 : vector<4x16xf32> to vector<4x16xbf16>
    %c0_43 = arith.constant 0 : index
    %c4 = arith.constant 4 : index
    %c0_44 = arith.constant 0 : index
    %64 = vector.load %arg8[%c0_43, %c4, %c0_44] : memref<4x8x16xbf16, #tpu.memory_space<vmem>>, vector<4x1x16xbf16>
    %65 = vector.shape_cast %64 : vector<4x1x16xbf16> to vector<4x16xbf16>
    %66 = vector.shape_cast %63 : vector<4x16xbf16> to vector<4x1x16xbf16>
    tpu.vector_store %arg8[%c0_43, %c4, %c0_44], %66 {strides = array<i32>} : memref<4x8x16xbf16, #tpu.memory_space<vmem>>, vector<4x1x16xbf16>,
    %c0_45 = arith.constant 0 : index
    %c0_46 = arith.constant 0 : index
    %67 = vector.load %arg5[%c0_45, %c0_46] : memref<4x128xbf16, #tpu.memory_space<vmem>>, vector<4x128xbf16>
    %68 = vector.extract_strided_slice %24 {offsets = [80, 0], sizes = [16, 128], strides = [1, 1]} : vector<128x128xbf16> to vector<16x128xbf16>
    %cst_47 = arith.constant dense<0.000000e+00> : vector<4x16xf32>
    %69 = tpu.matmul %67, %68, %cst_47 {dimension_numbers = #tpu.dot_dimension_numbers<[1], [1], [0], [0], [0, 0, 1, 0], [], []>} : vector<4x128xbf16>, vector<16x128xbf16>, vector<4x16xf32> -> vector<4x16xf32>
    %70 = arith.truncf %69 : vector<4x16xf32> to vector<4x16xbf16>
    %c0_48 = arith.constant 0 : index
    %c5 = arith.constant 5 : index
    %c0_49 = arith.constant 0 : index
    %71 = vector.load %arg8[%c0_48, %c5, %c0_49] : memref<4x8x16xbf16, #tpu.memory_space<vmem>>, vector<4x1x16xbf16>
    %72 = vector.shape_cast %71 : vector<4x1x16xbf16> to vector<4x16xbf16>
    %73 = vector.shape_cast %70 : vector<4x16xbf16> to vector<4x1x16xbf16>
    tpu.vector_store %arg8[%c0_48, %c5, %c0_49], %73 {strides = array<i32>} : memref<4x8x16xbf16, #tpu.memory_space<vmem>>, vector<4x1x16xbf16>,
    %c0_50 = arith.constant 0 : index
    %c0_51 = arith.constant 0 : index
    %74 = vector.load %arg5[%c0_50, %c0_51] : memref<4x128xbf16, #tpu.memory_space<vmem>>, vector<4x128xbf16>
    %75 = vector.extract_strided_slice %24 {offsets = [96, 0], sizes = [16, 128], strides = [1, 1]} : vector<128x128xbf16> to vector<16x128xbf16>
    %cst_52 = arith.constant dense<0.000000e+00> : vector<4x16xf32>
    %76 = tpu.matmul %74, %75, %cst_52 {dimension_numbers = #tpu.dot_dimension_numbers<[1], [1], [0], [0], [0, 0, 1, 0], [], []>} : vector<4x128xbf16>, vector<16x128xbf16>, vector<4x16xf32> -> vector<4x16xf32>
    %77 = arith.truncf %76 : vector<4x16xf32> to vector<4x16xbf16>
    %c0_53 = arith.constant 0 : index
    %c6 = arith.constant 6 : index
    %c0_54 = arith.constant 0 : index
    %78 = vector.load %arg8[%c0_53, %c6, %c0_54] : memref<4x8x16xbf16, #tpu.memory_space<vmem>>, vector<4x1x16xbf16>
    %79 = vector.shape_cast %78 : vector<4x1x16xbf16> to vector<4x16xbf16>
    %80 = vector.shape_cast %77 : vector<4x16xbf16> to vector<4x1x16xbf16>
    tpu.vector_store %arg8[%c0_53, %c6, %c0_54], %80 {strides = array<i32>} : memref<4x8x16xbf16, #tpu.memory_space<vmem>>, vector<4x1x16xbf16>,
    %c0_55 = arith.constant 0 : index
    %c0_56 = arith.constant 0 : index
    %81 = vector.load %arg5[%c0_55, %c0_56] : memref<4x128xbf16, #tpu.memory_space<vmem>>, vector<4x128xbf16>
    %82 = vector.extract_strided_slice %24 {offsets = [112, 0], sizes = [16, 128], strides = [1, 1]} : vector<128x128xbf16> to vector<16x128xbf16>
    %cst_57 = arith.constant dense<0.000000e+00> : vector<4x16xf32>
    %83 = tpu.matmul %81, %82, %cst_57 {dimension_numbers = #tpu.dot_dimension_numbers<[1], [1], [0], [0], [0, 0, 1, 0], [], []>} : vector<4x128xbf16>, vector<16x128xbf16>, vector<4x16xf32> -> vector<4x16xf32>
    %84 = arith.truncf %83 : vector<4x16xf32> to vector<4x16xbf16>
    %c0_58 = arith.constant 0 : index
    %c7 = arith.constant 7 : index
    %c0_59 = arith.constant 0 : index
    %85 = vector.load %arg8[%c0_58, %c7, %c0_59] : memref<4x8x16xbf16, #tpu.memory_space<vmem>>, vector<4x1x16xbf16>
    %86 = vector.shape_cast %85 : vector<4x1x16xbf16> to vector<4x16xbf16>
    %87 = vector.shape_cast %84 : vector<4x16xbf16> to vector<4x1x16xbf16>
    tpu.vector_store %arg8[%c0_58, %c7, %c0_59], %87 {strides = array<i32>} : memref<4x8x16xbf16, #tpu.memory_space<vmem>>, vector<4x1x16xbf16>,
    return
  }
  func.func @transform_0(%arg0: i32, %arg1: i32) -> (i32, i32, i32) {
    %c0_i32 = arith.constant 0 : i32
    %c0_i32_0 = arith.constant 0 : i32
    return %arg0, %arg1, %c0_i32 : i32, i32, i32
  }
  func.func @transform_1(%arg0: i32, %arg1: i32) -> (i32, i32) {
    %c0_i32 = arith.constant 0 : i32
    %c0_i32_0 = arith.constant 0 : i32
    %c0_i32_1 = arith.constant 0 : i32
    return %c0_i32, %c0_i32_0 : i32, i32
  }
  func.func @transform_2(%arg0: i32, %arg1: i32) -> (i32, i32) {
    %c0_i32 = arith.constant 0 : i32
    %c0_i32_0 = arith.constant 0 : i32
    %c0_i32_1 = arith.constant 0 : i32
    return %c0_i32, %c0_i32_0 : i32, i32
  }
  func.func @transform_3(%arg0: i32, %arg1: i32) -> (i32, i32) {
    %c0_i32 = arith.constant 0 : i32
    %c0_i32_0 = arith.constant 0 : i32
    %c0_i32_1 = arith.constant 0 : i32
    return %c0_i32, %c0_i32_0 : i32, i32
  }
  func.func @transform_4(%arg0: i32, %arg1: i32) -> (i32, i32) {
    %c0_i32 = arith.constant 0 : i32
    %c0_i32_0 = arith.constant 0 : i32
    %c0_i32_1 = arith.constant 0 : i32
    return %c0_i32, %c0_i32_0 : i32, i32
  }
  func.func @transform_5(%arg0: i32, %arg1: i32) -> (i32, i32, i32) {
    %c0_i32 = arith.constant 0 : i32
    %c0_i32_0 = arith.constant 0 : i32
    return %arg0, %arg1, %c0_i32 : i32, i32, i32
  }
  func.func @transform_6(%arg0: i32, %arg1: i32) -> (i32, i32, i32) {
    %c0_i32 = arith.constant 0 : i32
    %c0_i32_0 = arith.constant 0 : i32
    return %c0_i32, %arg0, %arg1 : i32, i32, i32
  }
  func.func @transform_7(%arg0: i32, %arg1: i32) -> (i32, i32, i32) {
    %c0_i32 = arith.constant 0 : i32
    %c0_i32_0 = arith.constant 0 : i32
    return %arg0, %arg1, %c0_i32 : i32, i32, i32
  }
}

module attributes {stable_mosaic.version = 11 : i64} {
  func.func @attention_kernel(%arg0: i32, %arg1: i32, %arg2: memref<1x8x128xbf16, #tpu.memory_space<vmem>>, %arg3: memref<1x16x256xbf16, #tpu.memory_space<vmem>>, %arg4: memref<1x1x16xf32, #tpu.memory_space<vmem>>, %arg5: memref<4x8x16xbf16, #tpu.memory_space<vmem>>, %arg6: memref<128x256xbf16, #tpu.memory_space<vmem>>, %arg7: memref<128x128xbf16, #tpu.memory_space<vmem>>, %arg8: memref<1x8x128xbf16, #tpu.memory_space<vmem>>) attributes {dimension_semantics = [#tpu.dimension_semantics<parallel>, #tpu.dimension_semantics<arbitrary>], iteration_bounds = array<i64: 2, 16>, scalar_prefetch = 0 : i64, scratch_operands = 0 : i64, tpu.core_type = #tpu.core_type<tc>, window_params = [{transform_indices = @transform_0, window_bounds = array<i64: 1, 8, 128>}, {transform_indices = @transform_1, window_bounds = array<i64: 1, 16, 256>}, {transform_indices = @transform_2, window_bounds = array<i64: 1, 1, 16>}, {transform_indices = @transform_3, window_bounds = array<i64: 4, 8, 16>}, {pipeline_mode = #tpu.pipeline_mode<synchronous>, transform_indices = @transform_4, window_bounds = array<i64: 128, 256>}, {pipeline_mode = #tpu.pipeline_mode<synchronous>, transform_indices = @transform_5, window_bounds = array<i64: 128, 128>}, {transform_indices = @transform_6, window_bounds = array<i64: 1, 8, 128>}]} {
    %c0 = arith.constant 0 : index
    %c0_0 = arith.constant 0 : index
    %c0_1 = arith.constant 0 : index
    %0 = vector.load %arg2[%c0, %c0_0, %c0_1] : memref<1x8x128xbf16, #tpu.memory_space<vmem>>, vector<1x8x128xbf16>
    %1 = vector.shape_cast %0 : vector<1x8x128xbf16> to vector<8x128xbf16>
    %c0_2 = arith.constant 0 : index
    %c0_3 = arith.constant 0 : index
    %2 = vector.load %arg6[%c0_2, %c0_3] : memref<128x256xbf16, #tpu.memory_space<vmem>>, vector<128x256xbf16>
    %cst = arith.constant dense<0.000000e+00> : vector<8x256xf32>
    %3 = tpu.matmul %1, %2, %cst {dimension_numbers = #tpu.dot_dimension_numbers<[1], [0], [0], [1], [0, 0, 1, 1], [], []>} : vector<8x128xbf16>, vector<128x256xbf16>, vector<8x256xf32> -> vector<8x256xf32>
    %4 = vector.extract_strided_slice %3 {offsets = [0, 128], sizes = [8, 128], strides = [1, 1]} : vector<8x256xf32> to vector<8x128xf32>
    %5 = arith.negf %4 : vector<8x128xf32>
    %6 = math.exp %5 : vector<8x128xf32>
    %cst_4 = arith.constant 1.000000e+00 : f32
    %7 = vector.broadcast %cst_4 : f32 to vector<8x128xf32>
    %8 = arith.addf %7, %6 : vector<8x128xf32>
    %9 = arith.divf %7, %8 : vector<8x128xf32>
    %10 = vector.extract_strided_slice %3 {offsets = [0, 0], sizes = [8, 128], strides = [1, 1]} : vector<8x256xf32> to vector<8x128xf32>
    %11 = arith.truncf %10 : vector<8x128xf32> to vector<8x128xbf16>
    %c0_5 = arith.constant 0 : index
    %c0_6 = arith.constant 0 : index
    %c0_7 = arith.constant 0 : index
    %12 = vector.load %arg3[%c0_5, %c0_6, %c0_7] : memref<1x16x256xbf16, #tpu.memory_space<vmem>>, vector<1x16x256xbf16>
    %13 = vector.shape_cast %12 : vector<1x16x256xbf16> to vector<16x256xbf16>
    %c0_8 = arith.constant 0 : index
    %c0_9 = arith.constant 0 : index
    %c0_10 = arith.constant 0 : index
    %14 = vector.load %arg4[%c0_8, %c0_9, %c0_10] : memref<1x1x16xf32, #tpu.memory_space<vmem>>, vector<1x1x16xf32>
    %15 = vector.shape_cast %14 : vector<1x1x16xf32> to vector<1x16xf32>
    %16 = vector.extract_strided_slice %11 {offsets = [0, 0], sizes = [8, 32], strides = [1, 1]} : vector<8x128xbf16> to vector<8x32xbf16>
    %17 = vector.extract_strided_slice %13 {offsets = [0, 0], sizes = [16, 32], strides = [1, 1]} : vector<16x256xbf16> to vector<16x32xbf16>
    %18 = vector.extract_strided_slice %13 {offsets = [0, 128], sizes = [16, 32], strides = [1, 1]} : vector<16x256xbf16> to vector<16x32xbf16>
    %cst_11 = arith.constant dense<0.000000e+00> : vector<8x16xf32>
    %19 = tpu.matmul %16, %17, %cst_11 {dimension_numbers = #tpu.dot_dimension_numbers<[1], [1], [0], [0], [0, 0, 1, 0], [], []>} : vector<8x32xbf16>, vector<16x32xbf16>, vector<8x16xf32> -> vector<8x16xf32>
    %c0_12 = arith.constant 0 : index
    %c0_13 = arith.constant 0 : index
    %c0_14 = arith.constant 0 : index
    %20 = vector.load %arg5[%c0_12, %c0_13, %c0_14] : memref<4x8x16xbf16, #tpu.memory_space<vmem>>, vector<1x8x16xbf16>
    %21 = vector.shape_cast %20 : vector<1x8x16xbf16> to vector<8x16xbf16>
    %22 = arith.extf %21 : vector<8x16xbf16> to vector<8x16xf32>
    %23 = arith.addf %19, %22 : vector<8x16xf32>
    %24 = vector.broadcast %15 : vector<1x16xf32> to vector<8x16xf32>
    %25 = arith.addf %23, %24 : vector<8x16xf32>
    %cst_15 = arith.constant dense<0xFF800000> : vector<8xf32>
    %26 = vector.multi_reduction <maximumf>, %25, %cst_15 [1] : vector<8x16xf32> to vector<8xf32>
    %27 = vector.shape_cast %26 : vector<8xf32> to vector<8x1xf32>
    %28 = vector.broadcast %27 : vector<8x1xf32> to vector<8x16xf32>
    %29 = arith.subf %25, %28 : vector<8x16xf32>
    %30 = math.exp %29 : vector<8x16xf32>
    %cst_16 = arith.constant dense<0.000000e+00> : vector<8xf32>
    %31 = vector.multi_reduction <add>, %30, %cst_16 [1] : vector<8x16xf32> to vector<8xf32>
    %32 = vector.shape_cast %31 : vector<8xf32> to vector<8x1xf32>
    %33 = tpu.reciprocal %32 {approx = true} : vector<8x1xf32> -> vector<8x1xf32>
    %34 = vector.broadcast %33 : vector<8x1xf32> to vector<8x16xf32>
    %35 = arith.mulf %30, %34 : vector<8x16xf32>
    %36 = arith.truncf %35 : vector<8x16xf32> to vector<8x16xbf16>
    %cst_17 = arith.constant dense<0.000000e+00> : vector<8x32xf32>
    %37 = tpu.matmul %36, %18, %cst_17 {dimension_numbers = #tpu.dot_dimension_numbers<[1], [0], [0], [1], [0, 0, 1, 1], [], []>} : vector<8x16xbf16>, vector<16x32xbf16>, vector<8x32xf32> -> vector<8x32xf32>
    %38 = vector.extract_strided_slice %11 {offsets = [0, 32], sizes = [8, 32], strides = [1, 1]} : vector<8x128xbf16> to vector<8x32xbf16>
    %39 = vector.extract_strided_slice %13 {offsets = [0, 32], sizes = [16, 32], strides = [1, 1]} : vector<16x256xbf16> to vector<16x32xbf16>
    %40 = vector.extract_strided_slice %13 {offsets = [0, 160], sizes = [16, 32], strides = [1, 1]} : vector<16x256xbf16> to vector<16x32xbf16>
    %cst_18 = arith.constant dense<0.000000e+00> : vector<8x16xf32>
    %41 = tpu.matmul %38, %39, %cst_18 {dimension_numbers = #tpu.dot_dimension_numbers<[1], [1], [0], [0], [0, 0, 1, 0], [], []>} : vector<8x32xbf16>, vector<16x32xbf16>, vector<8x16xf32> -> vector<8x16xf32>
    %c1 = arith.constant 1 : index
    %c0_19 = arith.constant 0 : index
    %c0_20 = arith.constant 0 : index
    %42 = vector.load %arg5[%c1, %c0_19, %c0_20] : memref<4x8x16xbf16, #tpu.memory_space<vmem>>, vector<1x8x16xbf16>
    %43 = vector.shape_cast %42 : vector<1x8x16xbf16> to vector<8x16xbf16>
    %44 = arith.extf %43 : vector<8x16xbf16> to vector<8x16xf32>
    %45 = arith.addf %41, %44 : vector<8x16xf32>
    %46 = vector.broadcast %15 : vector<1x16xf32> to vector<8x16xf32>
    %47 = arith.addf %45, %46 : vector<8x16xf32>
    %cst_21 = arith.constant dense<0xFF800000> : vector<8xf32>
    %48 = vector.multi_reduction <maximumf>, %47, %cst_21 [1] : vector<8x16xf32> to vector<8xf32>
    %49 = vector.shape_cast %48 : vector<8xf32> to vector<8x1xf32>
    %50 = vector.broadcast %49 : vector<8x1xf32> to vector<8x16xf32>
    %51 = arith.subf %47, %50 : vector<8x16xf32>
    %52 = math.exp %51 : vector<8x16xf32>
    %cst_22 = arith.constant dense<0.000000e+00> : vector<8xf32>
    %53 = vector.multi_reduction <add>, %52, %cst_22 [1] : vector<8x16xf32> to vector<8xf32>
    %54 = vector.shape_cast %53 : vector<8xf32> to vector<8x1xf32>
    %55 = tpu.reciprocal %54 {approx = true} : vector<8x1xf32> -> vector<8x1xf32>
    %56 = vector.broadcast %55 : vector<8x1xf32> to vector<8x16xf32>
    %57 = arith.mulf %52, %56 : vector<8x16xf32>
    %58 = arith.truncf %57 : vector<8x16xf32> to vector<8x16xbf16>
    %cst_23 = arith.constant dense<0.000000e+00> : vector<8x32xf32>
    %59 = tpu.matmul %58, %40, %cst_23 {dimension_numbers = #tpu.dot_dimension_numbers<[1], [0], [0], [1], [0, 0, 1, 1], [], []>} : vector<8x16xbf16>, vector<16x32xbf16>, vector<8x32xf32> -> vector<8x32xf32>
    %60 = vector.extract_strided_slice %11 {offsets = [0, 64], sizes = [8, 32], strides = [1, 1]} : vector<8x128xbf16> to vector<8x32xbf16>
    %61 = vector.extract_strided_slice %13 {offsets = [0, 64], sizes = [16, 32], strides = [1, 1]} : vector<16x256xbf16> to vector<16x32xbf16>
    %62 = vector.extract_strided_slice %13 {offsets = [0, 192], sizes = [16, 32], strides = [1, 1]} : vector<16x256xbf16> to vector<16x32xbf16>
    %cst_24 = arith.constant dense<0.000000e+00> : vector<8x16xf32>
    %63 = tpu.matmul %60, %61, %cst_24 {dimension_numbers = #tpu.dot_dimension_numbers<[1], [1], [0], [0], [0, 0, 1, 0], [], []>} : vector<8x32xbf16>, vector<16x32xbf16>, vector<8x16xf32> -> vector<8x16xf32>
    %c2 = arith.constant 2 : index
    %c0_25 = arith.constant 0 : index
    %c0_26 = arith.constant 0 : index
    %64 = vector.load %arg5[%c2, %c0_25, %c0_26] : memref<4x8x16xbf16, #tpu.memory_space<vmem>>, vector<1x8x16xbf16>
    %65 = vector.shape_cast %64 : vector<1x8x16xbf16> to vector<8x16xbf16>
    %66 = arith.extf %65 : vector<8x16xbf16> to vector<8x16xf32>
    %67 = arith.addf %63, %66 : vector<8x16xf32>
    %68 = vector.broadcast %15 : vector<1x16xf32> to vector<8x16xf32>
    %69 = arith.addf %67, %68 : vector<8x16xf32>
    %cst_27 = arith.constant dense<0xFF800000> : vector<8xf32>
    %70 = vector.multi_reduction <maximumf>, %69, %cst_27 [1] : vector<8x16xf32> to vector<8xf32>
    %71 = vector.shape_cast %70 : vector<8xf32> to vector<8x1xf32>
    %72 = vector.broadcast %71 : vector<8x1xf32> to vector<8x16xf32>
    %73 = arith.subf %69, %72 : vector<8x16xf32>
    %74 = math.exp %73 : vector<8x16xf32>
    %cst_28 = arith.constant dense<0.000000e+00> : vector<8xf32>
    %75 = vector.multi_reduction <add>, %74, %cst_28 [1] : vector<8x16xf32> to vector<8xf32>
    %76 = vector.shape_cast %75 : vector<8xf32> to vector<8x1xf32>
    %77 = tpu.reciprocal %76 {approx = true} : vector<8x1xf32> -> vector<8x1xf32>
    %78 = vector.broadcast %77 : vector<8x1xf32> to vector<8x16xf32>
    %79 = arith.mulf %74, %78 : vector<8x16xf32>
    %80 = arith.truncf %79 : vector<8x16xf32> to vector<8x16xbf16>
    %cst_29 = arith.constant dense<0.000000e+00> : vector<8x32xf32>
    %81 = tpu.matmul %80, %62, %cst_29 {dimension_numbers = #tpu.dot_dimension_numbers<[1], [0], [0], [1], [0, 0, 1, 1], [], []>} : vector<8x16xbf16>, vector<16x32xbf16>, vector<8x32xf32> -> vector<8x32xf32>
    %82 = vector.extract_strided_slice %11 {offsets = [0, 96], sizes = [8, 32], strides = [1, 1]} : vector<8x128xbf16> to vector<8x32xbf16>
    %83 = vector.extract_strided_slice %13 {offsets = [0, 96], sizes = [16, 32], strides = [1, 1]} : vector<16x256xbf16> to vector<16x32xbf16>
    %84 = vector.extract_strided_slice %13 {offsets = [0, 224], sizes = [16, 32], strides = [1, 1]} : vector<16x256xbf16> to vector<16x32xbf16>
    %cst_30 = arith.constant dense<0.000000e+00> : vector<8x16xf32>
    %85 = tpu.matmul %82, %83, %cst_30 {dimension_numbers = #tpu.dot_dimension_numbers<[1], [1], [0], [0], [0, 0, 1, 0], [], []>} : vector<8x32xbf16>, vector<16x32xbf16>, vector<8x16xf32> -> vector<8x16xf32>
    %c3 = arith.constant 3 : index
    %c0_31 = arith.constant 0 : index
    %c0_32 = arith.constant 0 : index
    %86 = vector.load %arg5[%c3, %c0_31, %c0_32] : memref<4x8x16xbf16, #tpu.memory_space<vmem>>, vector<1x8x16xbf16>
    %87 = vector.shape_cast %86 : vector<1x8x16xbf16> to vector<8x16xbf16>
    %88 = arith.extf %87 : vector<8x16xbf16> to vector<8x16xf32>
    %89 = arith.addf %85, %88 : vector<8x16xf32>
    %90 = vector.broadcast %15 : vector<1x16xf32> to vector<8x16xf32>
    %91 = arith.addf %89, %90 : vector<8x16xf32>
    %cst_33 = arith.constant dense<0xFF800000> : vector<8xf32>
    %92 = vector.multi_reduction <maximumf>, %91, %cst_33 [1] : vector<8x16xf32> to vector<8xf32>
    %93 = vector.shape_cast %92 : vector<8xf32> to vector<8x1xf32>
    %94 = vector.broadcast %93 : vector<8x1xf32> to vector<8x16xf32>
    %95 = arith.subf %91, %94 : vector<8x16xf32>
    %96 = math.exp %95 : vector<8x16xf32>
    %cst_34 = arith.constant dense<0.000000e+00> : vector<8xf32>
    %97 = vector.multi_reduction <add>, %96, %cst_34 [1] : vector<8x16xf32> to vector<8xf32>
    %98 = vector.shape_cast %97 : vector<8xf32> to vector<8x1xf32>
    %99 = tpu.reciprocal %98 {approx = true} : vector<8x1xf32> -> vector<8x1xf32>
    %100 = vector.broadcast %99 : vector<8x1xf32> to vector<8x16xf32>
    %101 = arith.mulf %96, %100 : vector<8x16xf32>
    %102 = arith.truncf %101 : vector<8x16xf32> to vector<8x16xbf16>
    %cst_35 = arith.constant dense<0.000000e+00> : vector<8x32xf32>
    %103 = tpu.matmul %102, %84, %cst_35 {dimension_numbers = #tpu.dot_dimension_numbers<[1], [0], [0], [1], [0, 0, 1, 1], [], []>} : vector<8x16xbf16>, vector<16x32xbf16>, vector<8x32xf32> -> vector<8x32xf32>
    %104 = tpu.concatenate %37, %59, %81, %103 in 1 : vector<8x32xf32>, vector<8x32xf32>, vector<8x32xf32>, vector<8x32xf32> -> vector<8x128xf32>
    %105 = arith.mulf %104, %9 : vector<8x128xf32>
    %106 = arith.truncf %105 : vector<8x128xf32> to vector<8x128xbf16>
    %c0_36 = arith.constant 0 : index
    %c0_37 = arith.constant 0 : index
    %107 = vector.load %arg7[%c0_36, %c0_37] : memref<128x128xbf16, #tpu.memory_space<vmem>>, vector<128x128xbf16>
    %cst_38 = arith.constant dense<0.000000e+00> : vector<8x128xf32>
    %108 = tpu.matmul %106, %107, %cst_38 {dimension_numbers = #tpu.dot_dimension_numbers<[1], [0], [0], [1], [0, 0, 1, 1], [], []>} : vector<8x128xbf16>, vector<128x128xbf16>, vector<8x128xf32> -> vector<8x128xf32>
    %109 = arith.truncf %108 : vector<8x128xf32> to vector<8x128xbf16>
    %c0_39 = arith.constant 0 : index
    %c0_40 = arith.constant 0 : index
    %c0_41 = arith.constant 0 : index
    %110 = vector.load %arg8[%c0_39, %c0_40, %c0_41] : memref<1x8x128xbf16, #tpu.memory_space<vmem>>, vector<1x8x128xbf16>
    %111 = vector.shape_cast %110 : vector<1x8x128xbf16> to vector<8x128xbf16>
    %112 = vector.shape_cast %109 : vector<8x128xbf16> to vector<1x8x128xbf16>
    tpu.vector_store %arg8[%c0_39, %c0_40, %c0_41], %112 {strides = array<i32>} : memref<1x8x128xbf16, #tpu.memory_space<vmem>>, vector<1x8x128xbf16>,
    return
  }
  func.func @transform_0(%arg0: i32, %arg1: i32) -> (i32, i32, i32) {
    %c0_i32 = arith.constant 0 : i32
    %c0_i32_0 = arith.constant 0 : i32
    return %arg1, %arg0, %c0_i32 : i32, i32, i32
  }
  func.func @transform_1(%arg0: i32, %arg1: i32) -> (i32, i32, i32) {
    %c0_i32 = arith.constant 0 : i32
    %c0_i32_0 = arith.constant 0 : i32
    %c0_i32_1 = arith.constant 0 : i32
    return %arg1, %c0_i32, %c0_i32_0 : i32, i32, i32
  }
  func.func @transform_2(%arg0: i32, %arg1: i32) -> (i32, i32, i32) {
    %c0_i32 = arith.constant 0 : i32
    %c0_i32_0 = arith.constant 0 : i32
    %c0_i32_1 = arith.constant 0 : i32
    return %arg1, %c0_i32, %c0_i32_0 : i32, i32, i32
  }
  func.func @transform_3(%arg0: i32, %arg1: i32) -> (i32, i32, i32) {
    %c0_i32 = arith.constant 0 : i32
    %c0_i32_0 = arith.constant 0 : i32
    %c0_i32_1 = arith.constant 0 : i32
    return %c0_i32, %arg0, %c0_i32_0 : i32, i32, i32
  }
  func.func @transform_4(%arg0: i32, %arg1: i32) -> (i32, i32) {
    %c0_i32 = arith.constant 0 : i32
    %c0_i32_0 = arith.constant 0 : i32
    %c0_i32_1 = arith.constant 0 : i32
    return %c0_i32, %c0_i32_0 : i32, i32
  }
  func.func @transform_5(%arg0: i32, %arg1: i32) -> (i32, i32) {
    %c0_i32 = arith.constant 0 : i32
    %c0_i32_0 = arith.constant 0 : i32
    %c0_i32_1 = arith.constant 0 : i32
    return %c0_i32, %c0_i32_0 : i32, i32
  }
  func.func @transform_6(%arg0: i32, %arg1: i32) -> (i32, i32, i32) {
    %c0_i32 = arith.constant 0 : i32
    %c0_i32_0 = arith.constant 0 : i32
    return %arg1, %arg0, %c0_i32 : i32, i32, i32
  }
}

</mosaic_0001>

<llo_original>
// kernel: attention_mix.3
$region0: #{attention_mix.3}
  #allocation0 [shape = 'u32[]', space=smem, size = 0x4, offset = 0x4, fixed_abs, tag = 'smem constant byte address 0x4 - core index']
  #allocation1 [shape = 'u32[144,128]{1,0:T(1,128)}', space=vmem, size = 0x12000, scoped, tag = 'internal scratch']
  %s0 = inlined_call_operand.vmem [shape: bf16[16,16,128], index: 0, kind: input, shape index: {}]
  %s1 = inlined_call_operand.vmem [shape: bf16[16,16,256], index: 1, kind: input, shape index: {}]
  %s2 = inlined_call_operand.vmem [shape: f32[16,1,16], index: 2, kind: input, shape index: {}]
  %s3 = inlined_call_operand.vmem [shape: bf16[4,16,16], index: 3, kind: input, shape index: {}]
  %s4 = inlined_call_operand.vmem [shape: bf16[128,256], index: 4, kind: input, shape index: {}]
  %s5 = inlined_call_operand.vmem [shape: bf16[128,128], index: 5, kind: input, shape index: {}]
  %s6 = inlined_call_operand.hbm [shape: bf16[16,16,128], index: 6, kind: output, shape index: {}]
  %s7 = sld [smem:[#allocation0]]
  $region98: #{attention_mix.3} parent=0
    _
  %s9 = ssub.s32 1, %s7
  %s10 = scalar_select 0, %s9, %s7
  $region1: #{attention_mix.3} parent=0
    #allocation2 [shape = 'u8[16384]{0}', space=vmem, size = 0x4000, scoped, tag = 'input window, operand 3']
    #allocation3 [shape = 'u8[4096]{0}', space=vmem, size = 0x1000, scoped, tag = 'output window, operand 0']
    #allocation4 [shape = 's32[2]{0}', space=sflag, size = 0x8, scoped, tag = 'scoped memory for attention_mix.3']
    %11 = vsyncpa [#allocation4], 0
    %s12 = scalar_lea.sflag [#allocation4], 1
    %13 = vsyncpa %s12, 0
    loop: start=0, step=1, limit=34
    $region2: #{attention_mix.3} parent=1 // loop_pre_header
      _
    $region3: #{attention_mix.3} parent=1 // loop_header
      %s15 = sphi 0, %s19
      %p16 = scmp.ge.s32.totalorder %s15, 34
      %s22 = sphi 0, %s34
      %s23 = sphi 0, %s30
      %s24 = sphi 0, %s22
      %s25 = sphi 0, %s23
      %s26 = sphi 0, %s24
      %s27 = sphi 0, %s25
      %s39 = sphi 0, %s41
      %s42 = sphi 0, %s39
      %s43 = sphi 0, %s42
      %s59 = sphi 0, %s43
      %s65 = sphi 0, %s67
      %s68 = sphi 0, %s65
      %s69 = sphi 0, %s68
      %s85 = sphi 0, %s69
      %s91 = sphi 0, %s93
      %s94 = sphi 0, %s91
      %s95 = sphi 0, %s94
      %s111 = sphi 0, %s95
      %s117 = sphi 0, %s119
      %s120 = sphi 0, %s117
      %s121 = sphi 0, %s120
      %s137 = sphi 0, %s121
      %s141 = sphi 0, %s141
      %s143 = sphi 0, %s141
      %s144 = sphi 0, %s143
      %s158 = sphi 0, %s144
      %s162 = sphi 0, %s162
      %s164 = sphi 0, %s162
      %s165 = sphi 0, %s164
      %s179 = sphi 0, %s165
      %s187 = sphi 0, %s189
      %s190 = sphi 0, %s187
      %s191 = sphi 0, %s190
      %s207 = sphi 0, %s191
    $region4: #{attention_mix.3} parent=1 // loop_header_branch
      %18 = sbr.rel (%p16) target = $region8
    $region5: #{attention_mix.3} parent=1 // loop_body
      %s20 = ssub.s32 %s15, 1
      %s21 = ssub.s32 %s15, 2
      %s28 = sadd.s32 1, %s23
      %p29 = scmp.ge.s32.totalorder %s28, 16
      %s30 = scalar_select %p29, 0, %s28
      %s31 = sadd.s32 1, %s22
      %s32 = scalar_select %p29, %s31, %s22
      %p33 = scmp.ge.s32.totalorder %s32, 2
      %s34 = scalar_select %p33, 0, %s32
      %s35 = ssub.s32 %s23, %s30
      %s36 = ssub.s32 %s22, %s34
      %s37 = sor.u32 %s35, %s36
      %p38 = scmp.eq.s32.totalorder %s37, 0
      %s40 = sadd.s32 %s39, 1
      %s41 = scalar_select %p38, %s39, %s40
      %p44 = pneg %p38
      %p45 = scmp.eq.s32.totalorder %s15, 31
      %p46 = por %p44, %p45
      %p47 = scmp.ne.s32.totalorder %s39, %s42
      %p48 = scmp.eq.s32.totalorder %s15, 0
      %p49 = por %p47, %p48
      %p50 = scmp.ne.s32.totalorder %s39, %s42
      %p51 = scmp.eq.s32.totalorder %s20, 31
      %p52 = por %p50, %p51
      %p53 = scmp.ne.s32.totalorder %s42, %s43
      %p54 = scmp.eq.s32.totalorder %s20, 0
      %p55 = por %p53, %p54
      %p56 = scmp.ne.s32.totalorder %s42, %s43
      %p57 = scmp.eq.s32.totalorder %s21, 31
      %p58 = por %p56, %p57
      %p60 = scmp.ne.s32.totalorder %s43, %s59
      %p61 = scmp.eq.s32.totalorder %s21, 0
      %p62 = por %p60, %p61
      %s63 = ssub.s32 %s23, %s30
      %p64 = scmp.eq.s32.totalorder %s63, 0
      %s66 = sadd.s32 %s65, 1
      %s67 = scalar_select %p64, %s65, %s66
      %p70 = pneg %p64
      %p71 = scmp.eq.s32.totalorder %s15, 31
      %p72 = por %p70, %p71
      %p73 = scmp.ne.s32.totalorder %s65, %s68
      %p74 = scmp.eq.s32.totalorder %s15, 0
      %p75 = por %p73, %p74
      %p76 = scmp.ne.s32.totalorder %s65, %s68
      %p77 = scmp.eq.s32.totalorder %s20, 31
      %p78 = por %p76, %p77
      %p79 = scmp.ne.s32.totalorder %s68, %s69
      %p80 = scmp.eq.s32.totalorder %s20, 0
      %p81 = por %p79, %p80
      %p82 = scmp.ne.s32.totalorder %s68, %s69
      %p83 = scmp.eq.s32.totalorder %s21, 31
      %p84 = por %p82, %p83
      %p86 = scmp.ne.s32.totalorder %s69, %s85
      %p87 = scmp.eq.s32.totalorder %s21, 0
      %p88 = por %p86, %p87
      %s89 = ssub.s32 %s23, %s30
      %p90 = scmp.eq.s32.totalorder %s89, 0
      %s92 = sadd.s32 %s91, 1
      %s93 = scalar_select %p90, %s91, %s92
      %p96 = pneg %p90
      %p97 = scmp.eq.s32.totalorder %s15, 31
      %p98 = por %p96, %p97
      %p99 = scmp.ne.s32.totalorder %s91, %s94
      %p100 = scmp.eq.s32.totalorder %s15, 0
      %p101 = por %p99, %p100
      %p102 = scmp.ne.s32.totalorder %s91, %s94
      %p103 = scmp.eq.s32.totalorder %s20, 31
      %p104 = por %p102, %p103
      %p105 = scmp.ne.s32.totalorder %s94, %s95
      %p106 = scmp.eq.s32.totalorder %s20, 0
      %p107 = por %p105, %p106
      %p108 = scmp.ne.s32.totalorder %s94, %s95
      %p109 = scmp.eq.s32.totalorder %s21, 31
      %p110 = por %p108, %p109
      %p112 = scmp.ne.s32.totalorder %s95, %s111
      %p113 = scmp.eq.s32.totalorder %s21, 0
      %p114 = por %p112, %p113
      %s115 = ssub.s32 %s22, %s34
      %p116 = scmp.eq.s32.totalorder %s115, 0
      %s118 = sadd.s32 %s117, 1
      %s119 = scalar_select %p116, %s117, %s118
      %p122 = pneg %p116
      %p123 = scmp.eq.s32.totalorder %s15, 31
      %p124 = por %p122, %p123
      %p125 = scmp.ne.s32.totalorder %s117, %s120
      %p126 = scmp.eq.s32.totalorder %s15, 0
      %p127 = por %p125, %p126
      %p128 = scmp.ne.s32.totalorder %s117, %s120
      %p129 = scmp.eq.s32.totalorder %s20, 31
      %p130 = por %p128, %p129
      %p131 = scmp.ne.s32.totalorder %s120, %s121
      %p132 = scmp.eq.s32.totalorder %s20, 0
      %p133 = por %p131, %p132
      %p134 = scmp.ne.s32.totalorder %s120, %s121
      %p135 = scmp.eq.s32.totalorder %s21, 31
      %p136 = por %p134, %p135
      %p138 = scmp.ne.s32.totalorder %s121, %s137
      %p139 = scmp.eq.s32.totalorder %s21, 0
      %p140 = por %p138, %p139
      %s142 = sadd.s32 %s141, 1
      %p145 = scmp.eq.s32.totalorder %s15, 31
      %p146 = scmp.ne.s32.totalorder %s141, %s143
      %p147 = scmp.eq.s32.totalorder %s15, 0
      %p148 = por %p146, %p147
      %p149 = scmp.ne.s32.totalorder %s141, %s143
      %p150 = scmp.eq.s32.totalorder %s20, 31
      %p151 = por %p149, %p150
      %p152 = scmp.ne.s32.totalorder %s143, %s144
      %p153 = scmp.eq.s32.totalorder %s20, 0
      %p154 = por %p152, %p153
      %p155 = scmp.ne.s32.totalorder %s143, %s144
      %p156 = scmp.eq.s32.totalorder %s21, 31
      %p157 = por %p155, %p156
      %p159 = scmp.ne.s32.totalorder %s144, %s158
      %p160 = scmp.eq.s32.totalorder %s21, 0
      %p161 = por %p159, %p160
      %s163 = sadd.s32 %s162, 1
      %p166 = scmp.eq.s32.totalorder %s15, 31
      %p167 = scmp.ne.s32.totalorder %s162, %s164
      %p168 = scmp.eq.s32.totalorder %s15, 0
      %p169 = por %p167, %p168
      %p170 = scmp.ne.s32.totalorder %s162, %s164
      %p171 = scmp.eq.s32.totalorder %s20, 31
      %p172 = por %p170, %p171
      %p173 = scmp.ne.s32.totalorder %s164, %s165
      %p174 = scmp.eq.s32.totalorder %s20, 0
      %p175 = por %p173, %p174
      %p176 = scmp.ne.s32.totalorder %s164, %s165
      %p177 = scmp.eq.s32.totalorder %s21, 31
      %p178 = por %p176, %p177
      %p180 = scmp.ne.s32.totalorder %s165, %s179
      %p181 = scmp.eq.s32.totalorder %s21, 0
      %p182 = por %p180, %p181
      %s183 = ssub.s32 %s23, %s30
      %s184 = ssub.s32 %s22, %s34
      %s185 = sor.u32 %s183, %s184
      %p186 = scmp.eq.s32.totalorder %s185, 0
      %s188 = sadd.s32 %s187, 1
      %s189 = scalar_select %p186, %s187, %s188
      %p192 = pneg %p186
      %p193 = scmp.eq.s32.totalorder %s15, 31
      %p194 = por %p192, %p193
      %p195 = scmp.ne.s32.totalorder %s187, %s190
      %p196 = scmp.eq.s32.totalorder %s15, 0
      %p197 = por %p195, %p196
      %p198 = scmp.ne.s32.totalorder %s187, %s190
      %p199 = scmp.eq.s32.totalorder %s20, 31
      %p200 = por %p198, %p199
      %p201 = scmp.ne.s32.totalorder %s190, %s191
      %p202 = scmp.eq.s32.totalorder %s20, 0
      %p203 = por %p201, %p202
      %p204 = scmp.ne.s32.totalorder %s190, %s191
      %p205 = scmp.eq.s32.totalorder %s21, 31
      %p206 = por %p204, %p205
      %p208 = scmp.ne.s32.totalorder %s191, %s207
      %p209 = scmp.eq.s32.totalorder %s21, 0
      %p210 = por %p208, %p209
      %p211 = scmp.le.s32.totalorder 1, %s15
      %p212 = scmp.lt.s32.totalorder %s15, 33
      %p213 = pnand %p211, %p212
      %p214 = pneg %p213
      // Predicated region
      $region9: #{attention_mix.3} parent=5 // pred_check
        _
      $region10: #{attention_mix.3} parent=5 // pred_check_branch
        %216 = sbr.rel (%p213) target = $region12
      $region11: #{attention_mix.3} parent=5 // pred_region
        %s217 = ssub.s32 %s15, 1
        // Predicated region
        $region13: #{attention_mix.3} parent=11 // pred_check
          %p218 = pneg %p154
        $region14: #{attention_mix.3} parent=11 // pred_check_branch
          %220 = sbr.rel (%p218) target = $region16
        $region15: #{attention_mix.3} parent=11 // pred_region
          _
        $region16: #{attention_mix.3} parent=11 // pred_fallthru
          _
        // Predicated region
        $region17: #{attention_mix.3} parent=11 // pred_check
          %p221 = pneg %p175
        $region18: #{attention_mix.3} parent=11 // pred_check_branch
          %223 = sbr.rel (%p221) target = $region20
        $region19: #{attention_mix.3} parent=11 // pred_region
          _
        $region20: #{attention_mix.3} parent=11 // pred_fallthru
          _
      $region12: #{attention_mix.3} parent=5 // pred_fallthru
        _
      %p224 = scmp.lt.s32.totalorder %s15, 32
      // Predicated region
      $region21: #{attention_mix.3} parent=5 // pred_check
        %p225 = pneg %p224
      $region22: #{attention_mix.3} parent=5 // pred_check_branch
        %227 = sbr.rel (%p225) target = $region24
      $region23: #{attention_mix.3} parent=5 // pred_region
        // Predicated region
        $region25: #{attention_mix.3} parent=23 // pred_check
          %p228 = pneg %p49
        $region26: #{attention_mix.3} parent=23 // pred_check_branch
          %230 = sbr.rel (%p228) target = $region28
        $region27: #{attention_mix.3} parent=23 // pred_region
          %p231 = scmp.lt.s32.totalorder %s23, 15
          %s232 = scalar_select %p231, %s23, 15
          %p233 = scmp.lt.s32.totalorder %s22, 1
          %s234 = scalar_select %p233, %s22, 1
          %s235 = smul.addr %s232, 2
          %s236 = sadd.s32 %s234, %s235
          %s237 = smul.addr %s236, 4
          %s238 = scalar_lea.vmem %s0, %s237
        $region28: #{attention_mix.3} parent=23 // pred_fallthru
          _
        // Predicated region
        $region29: #{attention_mix.3} parent=23 // pred_check
          %p239 = pneg %p75
        $region30: #{attention_mix.3} parent=23 // pred_check_branch
          %241 = sbr.rel (%p239) target = $region32
        $region31: #{attention_mix.3} parent=23 // pred_region
          %p242 = scmp.lt.s32.totalorder %s23, 15
          %s243 = scalar_select %p242, %s23, 15
          %s244 = smul.addr %s243, 4
          %s245 = smul.addr %s244, 4
          %s246 = scalar_lea.vmem %s1, %s245
        $region32: #{attention_mix.3} parent=23 // pred_fallthru
          _
        // Predicated region
        $region33: #{attention_mix.3} parent=23 // pred_check
          %p247 = pneg %p101
        $region34: #{attention_mix.3} parent=23 // pred_check_branch
          %249 = sbr.rel (%p247) target = $region36
        $region35: #{attention_mix.3} parent=23 // pred_region
          %p250 = scmp.lt.s32.totalorder %s23, 15
          %s251 = scalar_select %p250, %s23, 15
          %s252 = scalar_lea.vmem %s2, %s251
        $region36: #{attention_mix.3} parent=23 // pred_fallthru
          _
        // Predicated region
        $region37: #{attention_mix.3} parent=23 // pred_check
          %p253 = pneg %p127
        $region38: #{attention_mix.3} parent=23 // pred_check_branch
          %255 = sbr.rel (%p253) target = $region40
        $region39: #{attention_mix.3} parent=23 // pred_region
          %s256 = sand.u32 %s117, 1
          %s257 = sand.u32 %s117, 1
          %s258 = smul.addr %s257, 16
          %s259 = scalar_lea.vmem [#allocation2], %s258
          %s260 = smul.addr %s22, 4
          %s261 = scalar_lea.vmem %s3, %s260
          // Predicated region
          $region41: #{attention_mix.3} parent=39 // pred_check
            _
          $region42: #{attention_mix.3} parent=39 // pred_check_branch
            %263 = sbr.rel (0) target = $region44
          $region43: #{attention_mix.3} parent=39 // pred_region
            // Predicated region
            $region45: #{attention_mix.3} parent=43 // pred_check
              _
            $region46: #{attention_mix.3} parent=43 // pred_check_branch
              %265 = sbr.rel target = $region48
            $region47: #{attention_mix.3} parent=43 // pred_region
              // Predicated region
              $region60: #{attention_mix.3} parent=47 // pred_check
                _
              $region61: #{attention_mix.3} parent=47 // pred_check_branch
                %286 = sbr.rel (0) target = $region63
              $region62: #{attention_mix.3} parent=47 // pred_region
                loop: start=0, step=1, limit=1
                $region64: #{attention_mix.3} parent=62 // loop_pre_header
                  _
                $region65: #{attention_mix.3} parent=62 // loop_header
                  %s288 = sphi 0, %s292
                  %p289 = scmp.ge.s32.totalorder %s288, 1
                  %s293 = sphi %s261, %s261
                  %s294 = sphi %s259, %s259
                $region66: #{attention_mix.3} parent=62 // loop_header_branch
                  %291 = sbr.rel (%p289) target = $region70
                $region67: #{attention_mix.3} parent=62 // loop_body
                  _
                $region68: #{attention_mix.3} parent=62 // loop_footer
                  %s292 = sadd.s32 1, %s288
                $region69: #{attention_mix.3} parent=62 // loop_footer_branch
                  %287 = sbr.rel target = $region65
                $region70: #{attention_mix.3} parent=62 // loop_exit
                  _
                loop: start=0, step=1, limit=1
                $region71: #{attention_mix.3} parent=62 // loop_pre_header
                  _
                $region72: #{attention_mix.3} parent=62 // loop_header
                  %s297 = sphi 0, %s301
                  %p298 = scmp.ge.s32.totalorder %s297, 1
                  %s302 = sphi %s261, %s261
                  %s303 = sphi %s259, %s259
                $region73: #{attention_mix.3} parent=62 // loop_header_branch
                  %300 = sbr.rel (%p298) target = $region77
                $region74: #{attention_mix.3} parent=62 // loop_body
                  %v304 = vld [vmem:[%s302] sm:$0xf]
                  %305 = vst [vmem:[%s303] sm:$0xf] %v304
                  %v306 = vld [vmem:[%s302 + $0x8] sm:$0xf]
                  %307 = vst [vmem:[%s303 + $0x4] sm:$0xf] %v306
                  %v308 = vld [vmem:[%s302 + $0x10] sm:$0xf]
                  %309 = vst [vmem:[%s303 + $0x8] sm:$0xf] %v308
                  %v310 = vld [vmem:[%s302 + $0x18] sm:$0xf]
                  %311 = vst [vmem:[%s303 + $0xc] sm:$0xf] %v310
                $region75: #{attention_mix.3} parent=62 // loop_footer
                  %s301 = sadd.s32 1, %s297
                $region76: #{attention_mix.3} parent=62 // loop_footer_branch
                  %296 = sbr.rel target = $region72
                $region77: #{attention_mix.3} parent=62 // loop_exit
                  _
              $region63: #{attention_mix.3} parent=47 // pred_fallthru
                _
            $region48: #{attention_mix.3} parent=43 // pred_fallthru
              _
            // Predicated region
            $region49: #{attention_mix.3} parent=43 // pred_check
              _
            $region50: #{attention_mix.3} parent=43 // pred_check_branch
              %267 = sbr.rel (0) target = $region52
            $region51: #{attention_mix.3} parent=43 // pred_region
              loop: start=0, step=1, limit=1
              $region53: #{attention_mix.3} parent=51 // loop_pre_header
                _
              $region54: #{attention_mix.3} parent=51 // loop_header
                %s270 = sphi 0, %s274
                %p271 = scmp.ge.s32.totalorder %s270, 1
                %s275 = sphi %s261, %s261
                %s276 = sphi %s259, %s259
              $region55: #{attention_mix.3} parent=51 // loop_header_branch
                %273 = sbr.rel (%p271) target = $region59
              $region56: #{attention_mix.3} parent=51 // loop_body
                %v277 = vld [vmem:[%s275] sm:$0xf]
                %278 = vst [vmem:[%s276] sm:$0xf] %v277
                %v279 = vld [vmem:[%s275 + $0x8] sm:$0xf]
                %280 = vst [vmem:[%s276 + $0x4] sm:$0xf] %v279
                %v281 = vld [vmem:[%s275 + $0x10] sm:$0xf]
                %282 = vst [vmem:[%s276 + $0x8] sm:$0xf] %v281
                %v283 = vld [vmem:[%s275 + $0x18] sm:$0xf]
                %284 = vst [vmem:[%s276 + $0xc] sm:$0xf] %v283
              $region57: #{attention_mix.3} parent=51 // loop_footer
                %s274 = sadd.s32 1, %s270
              $region58: #{attention_mix.3} parent=51 // loop_footer_branch
                %269 = sbr.rel target = $region54
              $region59: #{attention_mix.3} parent=51 // loop_exit
                _
            $region52: #{attention_mix.3} parent=43 // pred_fallthru
              _
          $region44: #{attention_mix.3} parent=39 // pred_fallthru
            _
          %312 = vnop
        $region40: #{attention_mix.3} parent=23 // pred_fallthru
          _
      $region24: #{attention_mix.3} parent=5 // pred_fallthru
        _
      %p313 = scmp.le.s32.totalorder 1, %s15
      %p314 = scmp.lt.s32.totalorder %s15, 33
      %p315 = pnand %p313, %p314
      %p316 = pneg %p315
      // Predicated region
      $region78: #{attention_mix.3} parent=5 // pred_check
        _
      $region79: #{attention_mix.3} parent=5 // pred_check_branch
        %318 = sbr.rel (%p315) target = $region81
      $region80: #{attention_mix.3} parent=5 // pred_region
        %s319 = ssub.s32 %s15, 1
        %s320 = sand.u32 %s120, 1
        %s321 = sand.u32 %s120, 1
        %s322 = smul.addr %s321, 16
        %s323 = scalar_lea.vmem [#allocation2], %s322
        // Predicated region
        $region82: #{attention_mix.3} parent=80 // pred_check
          %p324 = pneg %p133
        $region83: #{attention_mix.3} parent=80 // pred_check_branch
          %326 = sbr.rel (%p324) target = $region85
        $region84: #{attention_mix.3} parent=80 // pred_region
          _
        $region85: #{attention_mix.3} parent=80 // pred_fallthru
          _
        %p327 = scmp.lt.s32.totalorder %s25, 15
        %s328 = scalar_select %p327, %s25, 15
        %p329 = scmp.lt.s32.totalorder %s24, 1
        %s330 = scalar_select %p329, %s24, 1
        %s331 = smul.addr %s328, 2
        %s332 = sadd.s32 %s330, %s331
        %s333 = smul.addr %s332, 4
        %s334 = scalar_lea.vmem %s0, %s333
        %p335 = pneg %p55
        %p336 = pneg %p52
        %p337 = scmp.lt.s32.totalorder %s25, 15
        %s338 = scalar_select %p337, %s25, 15
        %s339 = smul.addr %s338, 4
        %s340 = smul.addr %s339, 4
        %s341 = scalar_lea.vmem %s1, %s340
        %p342 = pneg %p81
        %p343 = pneg %p78
        %p344 = scmp.lt.s32.totalorder %s25, 15
        %s345 = scalar_select %p344, %s25, 15
        %s346 = scalar_lea.vmem %s2, %s345
        %p347 = pneg %p107
        %p348 = pneg %p104
        %s349 = sand.u32 %s120, 1
        %s350 = sand.u32 %s120, 1
        %s351 = smul.addr %s350, 16
        %s352 = scalar_lea.vmem [#allocation2], %s351
        %p353 = pneg %p133
        %p354 = pneg %p130
        %p355 = pneg %p154
        %p356 = pneg %p151
        %p357 = pneg %p175
        %p358 = pneg %p172
        %p359 = pneg %p203
        %p360 = pneg %p200
        %s361 = sand.u32 %s190, 1
        %s362 = scalar_lea.sflag [#allocation4], %s361
        %s363 = sand.u32 %s190, 1
        %s364 = smul.addr %s363, 4
        %s365 = scalar_lea.vmem [#allocation3], %s364
        %p366 = scmp.lt.s32.totalorder %s25, 15
        %s367 = scalar_select %p366, %s25, 15
        %p368 = scmp.lt.s32.totalorder %s24, 1
        %s369 = scalar_select %p368, %s24, 1
        %s370 = smul.addr %s367, 2
        %s371 = sadd.s32 %s369, %s370
        %s372 = smul.addr %s371, 4
        %s373 = scalar_lea.vmem %s0, %s372
        %p374 = scmp.lt.s32.totalorder %s25, 15
        %s375 = scalar_select %p374, %s25, 15
        %s376 = smul.addr %s375, 4
        %s377 = smul.addr %s376, 4
        %s378 = scalar_lea.vmem %s1, %s377
        %p379 = scmp.lt.s32.totalorder %s25, 15
        %s380 = scalar_select %p379, %s25, 15
        %s381 = scalar_lea.vmem %s2, %s380
        %v383 = vld [vmem:[%s373] sm:$0xf]
        %v384 = vld [vmem:[%s4] sm:$0xff]
        %v385 = vld [vmem:[%s4 + $0x8] sm:$0xff]
        %v386 = vld [vmem:[%s4 + $0x10] sm:$0xff]
        %v387 = vld [vmem:[%s4 + $0x18] sm:$0xff]
        %v388 = vld [vmem:[%s4 + $0x20] sm:$0xff]
        %v389 = vld [vmem:[%s4 + $0x28] sm:$0xff]
        %v390 = vld [vmem:[%s4 + $0x30] sm:$0xff]
        %v391 = vld [vmem:[%s4 + $0x38] sm:$0xff]
        %v392 = vld [vmem:[%s4 + $0x40] sm:$0xff]
        %v393 = vld [vmem:[%s4 + $0x48] sm:$0xff]
        %v394 = vld [vmem:[%s4 + $0x50] sm:$0xff]
        %v395 = vld [vmem:[%s4 + $0x58] sm:$0xff]
        %v396 = vld [vmem:[%s4 + $0x60] sm:$0xff]
        %v397 = vld [vmem:[%s4 + $0x68] sm:$0xff]
        %v398 = vld [vmem:[%s4 + $0x70] sm:$0xff]
        %v399 = vld [vmem:[%s4 + $0x78] sm:$0xff]
        %v416 = vunpack.c.l.b16 %v384
        %v417 = vunpack.c.h.b16 %v384
        %v418 = vunpack.c.l.b16 %v385
        %v419 = vunpack.c.h.b16 %v385
        %v420 = vunpack.c.l.b16 %v386
        %v421 = vunpack.c.h.b16 %v386
        %v422 = vunpack.c.l.b16 %v387
        %v423 = vunpack.c.h.b16 %v387
        %v424 = vunpack.c.l.b16 %v388
        %v425 = vunpack.c.h.b16 %v388
        %v426 = vunpack.c.l.b16 %v389
        %v427 = vunpack.c.h.b16 %v389
        %v428 = vunpack.c.l.b16 %v390
        %v429 = vunpack.c.h.b16 %v390
        %v430 = vunpack.c.l.b16 %v391
        %v431 = vunpack.c.h.b16 %v391
        %v432 = vunpack.c.l.b16 %v392
        %v433 = vunpack.c.h.b16 %v392
        %v434 = vunpack.c.l.b16 %v393
        %v435 = vunpack.c.h.b16 %v393
        %v436 = vunpack.c.l.b16 %v394
        %v437 = vunpack.c.h.b16 %v394
        %v438 = vunpack.c.l.b16 %v395
        %v439 = vunpack.c.h.b16 %v395
        %v440 = vunpack.c.l.b16 %v396
        %v441 = vunpack.c.h.b16 %v396
        %v442 = vunpack.c.l.b16 %v397
        %v443 = vunpack.c.h.b16 %v397
        %v444 = vunpack.c.l.b16 %v398
        %v445 = vunpack.c.h.b16 %v398
        %v446 = vunpack.c.l.b16 %v399
        %v447 = vunpack.c.h.b16 %v399
        %v448 = vpack.c.b16 %v418, %v416
        %v449 = vpack.c.b16 %v419, %v417
        %v450 = vpack.c.b16 %v422, %v420
        %v451 = vpack.c.b16 %v423, %v421
        %v452 = vpack.c.b16 %v426, %v424
        %v453 = vpack.c.b16 %v427, %v425
        %v454 = vpack.c.b16 %v430, %v428
        %v455 = vpack.c.b16 %v431, %v429
        %v456 = vpack.c.b16 %v434, %v432
        %v457 = vpack.c.b16 %v435, %v433
        %v458 = vpack.c.b16 %v438, %v436
        %v459 = vpack.c.b16 %v439, %v437
        %v460 = vpack.c.b16 %v442, %v440
        %v461 = vpack.c.b16 %v443, %v441
        %v462 = vpack.c.b16 %v446, %v444
        %v463 = vpack.c.b16 %v447, %v445
        %480 = vmatprep.subr.bf16.mxu0 %v449
        %481 = vmatpush1.bf16.msra.mxu0 %v448
        %482 = vmatprep.subr.bf16.mxu0 %v451
        %483 = vmatpush1.bf16.msra.mxu0 %v450
        %484 = vmatprep.subr.bf16.mxu0 %v453
        %485 = vmatpush1.bf16.msra.mxu0 %v452
        %486 = vmatprep.subr.bf16.mxu0 %v455
        %487 = vmatpush1.bf16.msra.mxu0 %v454
        %488 = vmatprep.subr.bf16.mxu0 %v457
        %489 = vmatpush1.bf16.msra.mxu0 %v456
        %490 = vmatprep.subr.bf16.mxu0 %v459
        %491 = vmatpush1.bf16.msra.mxu0 %v458
        %492 = vmatprep.subr.bf16.mxu0 %v461
        %493 = vmatpush1.bf16.msra.mxu0 %v460
        %494 = vmatprep.subr.bf16.mxu0 %v463
        %495 = vmatpush1.bf16.msra.mxu0 %v462
        %496 = vmatprep.subr.bf16.mxu0 0
        %497 = vmatpush1.bf16.msra.mxu0 0
        %498 = vmatprep.subr.bf16.mxu0 0
        %499 = vmatpush1.bf16.msra.mxu0 0
        %500 = vmatprep.subr.bf16.mxu0 0
        %501 = vmatpush1.bf16.msra.mxu0 0
        %502 = vmatprep.subr.bf16.mxu0 0
        %503 = vmatpush1.bf16.msra.mxu0 0
        %504 = vmatprep.subr.bf16.mxu0 0
        %505 = vmatpush1.bf16.msra.mxu0 0
        %506 = vmatprep.subr.bf16.mxu0 0
        %507 = vmatpush1.bf16.msra.mxu0 0
        %508 = vmatprep.subr.bf16.mxu0 0
        %509 = vmatpush1.bf16.msra.mxu0 0
        %510 = vmatprep.subr.bf16.mxu0 0
        %511 = vmatpush1.bf16.msra.mxu0 0
        %512 = vmatprep.mubr.bf16.mxu0 0
        %513 = vmatmul.mubr.bf16.gmra.mrb[0].mxu0 %v383
        %v514 = vpop.f32.mrb[0].mxu0
        %v515 = vadd.f32 0.0, %v514
        %v516 = vpop.f32.mrb[0].mxu0
        %v517 = vadd.f32 0.0, %v516
        %v518 = vpop.f32.mrb[0].mxu0
        %v519 = vpop.f32.mrb[0].mxu0
        %520 = vdwg.mxu0
        %v521 = vxor.u32 %v517, 2147483648
        %v522 = vmul.f32 %v521, 1.442695
        %v523 = vpow.pop %v522
        %v524 = vadd.f32 %v523, 1.0
        %v525 = vrcp.pop %v524
        %v526 = vmul.f32 1.0, %v525
        %v527 = vpack.c.bf16 %v515, %v515
        %v528 = vld [vmem:[%s378] sm:$0xff]
        %v529 = vld [vmem:[%s378 + $0x8] sm:$0xff]
        %v530 = vld [vmem:[%s381] sm:$0x1]
        %v531 = vld [vmem:[%s323] sm:$0xf]
        %v532 = vunpack.c.l.bf16 %v531
        %v535 = vunpack.c.l.b16 %v528
        %v536 = vunpack.c.l.b16 %v529
        %v537 = vpack.c.b16 %v536, %v535
        %vm538 = vcmask 261120
        %v540 = vsel %vm538, %v527, 0
        %v543 = vsel %vm538, %v537, 0
        %545 = vmatprep.subr.bf16.mxu0 0
        %546 = vmatpush1.bf16.xpose.msra.mxu0 %v543
        %547 = vmatprep.subr.bf16.mxu0 0
        %548 = vmatpush1.bf16.xpose.msra.mxu0 0
        %549 = vmatprep.subr.bf16.mxu0 0
        %550 = vmatpush1.bf16.xpose.msra.mxu0 0
        %551 = vmatprep.subr.bf16.mxu0 0
        %552 = vmatpush1.bf16.xpose.msra.mxu0 0
        %553 = vmatprep.subr.bf16.mxu0 0
        %554 = vmatpush1.bf16.xpose.msra.mxu0 0
        %555 = vmatprep.subr.bf16.mxu0 0
        %556 = vmatpush1.bf16.xpose.msra.mxu0 0
        %557 = vmatprep.subr.bf16.mxu0 0
        %558 = vmatpush1.bf16.xpose.msra.mxu0 0
        %559 = vmatprep.subr.bf16.mxu0 0
        %560 = vmatpush1.bf16.xpose.msra.mxu0 0
        %561 = vmatprep.subr.bf16.mxu0 0
        %562 = vmatpush1.bf16.xpose.msra.mxu0 0
        %563 = vmatprep.subr.bf16.mxu0 0
        %564 = vmatpush1.bf16.xpose.msra.mxu0 0
        %565 = vmatprep.subr.bf16.mxu0 0
        %566 = vmatpush1.bf16.xpose.msra.mxu0 0
        %567 = vmatprep.subr.bf16.mxu0 0
        %568 = vmatpush1.bf16.xpose.msra.mxu0 0
        %569 = vmatprep.subr.bf16.mxu0 0
        %570 = vmatpush1.bf16.xpose.msra.mxu0 0
        %571 = vmatprep.subr.bf16.mxu0 0
        %572 = vmatpush1.bf16.xpose.msra.mxu0 0
        %573 = vmatprep.subr.bf16.mxu0 0
        %574 = vmatpush1.bf16.xpose.msra.mxu0 0
        %575 = vmatprep.subr.bf16.mxu0 0
        %576 = vmatpush1.bf16.xpose.msra.mxu0 0
        %577 = vmatprep.mubr.bf16.mxu0 0
        %578 = vmatmul.mubr.bf16.gmra.mrb[0].mxu0 %v540
        %v579 = vpop.f32.mrb[0].mxu0
        %v580 = vadd.f32 %v532, %v579
        %v581 = vpop.f32.mrb[0].mxu0
        %v582 = vpop.f32.mrb[0].mxu0
        %v583 = vpop.f32.mrb[0].mxu0
        %584 = vdwg.mxu0
        %v586 = vlaneseq
        %v587 = vshrl.u32 %v586, 7
        %v588 = vsub.s32 0, %v587
        %v589 = vrot.slane %v530, %v588
        %v591 = vadd.f32 %v580, %v589
        %vm592 = vcmask 130048
        %v593 = vsel %vm592, %v591, -inf
        %594 = vmax.xlane.f32.xlu0 %v593
        %v595 = vpop.xlane.xlu0 %594
        %v596 = vsub.f32 %v591, %v595
        %v597 = vmul.f32 %v596, 1.442695
        %v598 = vpow.pop %v597
        %v599 = vsel %vm592, %v598, 0.0
        %600 = vadd.xlane.f32.xlu0 %v599
        %v601 = vpop.xlane.xlu0 %600
        %v602 = vrcp.pop %v601
        %v603 = vmul.f32 %v598, %v602
        %v604 = vpack.c.bf16 %v603, %v603
        %v605 = vunpack.c.h.b16 %v528
        %v606 = vunpack.c.h.b16 %v529
        %v607 = vpack.c.b16 %v606, %v605
        %v610 = vsel %vm592, %v604, 0
        %612 = vmatprep.subr.bf16.mxu0 0
        %613 = vmatpush1.bf16.msra.mxu0 %v607
        %614 = vmatprep.subr.bf16.mxu0 0
        %615 = vmatpush1.bf16.msra.mxu0 0
        %616 = vmatprep.subr.bf16.mxu0 0
        %617 = vmatpush1.bf16.msra.mxu0 0
        %618 = vmatprep.subr.bf16.mxu0 0
        %619 = vmatpush1.bf16.msra.mxu0 0
        %620 = vmatprep.subr.bf16.mxu0 0
        %621 = vmatpush1.bf16.msra.mxu0 0
        %622 = vmatprep.subr.bf16.mxu0 0
        %623 = vmatpush1.bf16.msra.mxu0 0
        %624 = vmatprep.subr.bf16.mxu0 0
        %625 = vmatpush1.bf16.msra.mxu0 0
        %626 = vmatprep.subr.bf16.mxu0 0
        %627 = vmatpush1.bf16.msra.mxu0 0
        %628 = vmatprep.subr.bf16.mxu0 0
        %629 = vmatpush1.bf16.msra.mxu0 0
        %630 = vmatprep.subr.bf16.mxu0 0
        %631 = vmatpush1.bf16.msra.mxu0 0
        %632 = vmatprep.subr.bf16.mxu0 0
        %633 = vmatpush1.bf16.msra.mxu0 0
        %634 = vmatprep.subr.bf16.mxu0 0
        %635 = vmatpush1.bf16.msra.mxu0 0
        %636 = vmatprep.subr.bf16.mxu0 0
        %637 = vmatpush1.bf16.msra.mxu0 0
        %638 = vmatprep.subr.bf16.mxu0 0
        %639 = vmatpush1.bf16.msra.mxu0 0
        %640 = vmatprep.subr.bf16.mxu0 0
        %641 = vmatpush1.bf16.msra.mxu0 0
        %642 = vmatprep.subr.bf16.mxu0 0
        %643 = vmatpush1.bf16.msra.mxu0 0
        %644 = vmatprep.mubr.bf16.mxu0 0
        %645 = vmatmul.mubr.bf16.gmra.mrb[0].mxu0 %v610
        %v646 = vpop.f32.mrb[0].mxu0
        %v647 = vadd.f32 0.0, %v646
        %v648 = vpop.f32.mrb[0].mxu0
        %v649 = vpop.f32.mrb[0].mxu0
        %v650 = vpop.f32.mrb[0].mxu0
        %651 = vdwg.mxu0
        %s652 = scalar_lea.vmem %s323, 4 [#allocation2]
        %v653 = vld [vmem:[%s652] sm:$0xf]
        %v654 = vunpack.c.l.bf16 %v653
        %656 = vrot.lane.b32.xlu0 %v527, 96
        %v657 = vpop.permute.xlu0 %656
        %658 = vrot.lane.b32.xlu0 %v537, 96
        %v659 = vpop.permute.xlu0 %658
        %v661 = vsel %vm538, %v657, 0
        %v664 = vsel %vm538, %v659, 0
        %666 = vmatprep.subr.bf16.mxu0 0
        %667 = vmatpush1.bf16.xpose.msra.mxu0 %v664
        %668 = vmatprep.subr.bf16.mxu0 0
        %669 = vmatpush1.bf16.xpose.msra.mxu0 0
        %670 = vmatprep.subr.bf16.mxu0 0
        %671 = vmatpush1.bf16.xpose.msra.mxu0 0
        %672 = vmatprep.subr.bf16.mxu0 0
        %673 = vmatpush1.bf16.xpose.msra.mxu0 0
        %674 = vmatprep.subr.bf16.mxu0 0
        %675 = vmatpush1.bf16.xpose.msra.mxu0 0
        %676 = vmatprep.subr.bf16.mxu0 0
        %677 = vmatpush1.bf16.xpose.msra.mxu0 0
        %678 = vmatprep.subr.bf16.mxu0 0
        %679 = vmatpush1.bf16.xpose.msra.mxu0 0
        %680 = vmatprep.subr.bf16.mxu0 0
        %681 = vmatpush1.bf16.xpose.msra.mxu0 0
        %682 = vmatprep.subr.bf16.mxu0 0
        %683 = vmatpush1.bf16.xpose.msra.mxu0 0
        %684 = vmatprep.subr.bf16.mxu0 0
        %685 = vmatpush1.bf16.xpose.msra.mxu0 0
        %686 = vmatprep.subr.bf16.mxu0 0
        %687 = vmatpush1.bf16.xpose.msra.mxu0 0
        %688 = vmatprep.subr.bf16.mxu0 0
        %689 = vmatpush1.bf16.xpose.msra.mxu0 0
        %690 = vmatprep.subr.bf16.mxu0 0
        %691 = vmatpush1.bf16.xpose.msra.mxu0 0
        %692 = vmatprep.subr.bf16.mxu0 0
        %693 = vmatpush1.bf16.xpose.msra.mxu0 0
        %694 = vmatprep.subr.bf16.mxu0 0
        %695 = vmatpush1.bf16.xpose.msra.mxu0 0
        %696 = vmatprep.subr.bf16.mxu0 0
        %697 = vmatpush1.bf16.xpose.msra.mxu0 0
        %698 = vmatprep.mubr.bf16.mxu0 0
        %699 = vmatmul.mubr.bf16.gmra.mrb[0].mxu0 %v661
        %v700 = vpop.f32.mrb[0].mxu0
        %v701 = vadd.f32 %v654, %v700
        %v702 = vpop.f32.mrb[0].mxu0
        %v703 = vpop.f32.mrb[0].mxu0
        %v704 = vpop.f32.mrb[0].mxu0
        %705 = vdwg.mxu0
        %v706 = vadd.f32 %v701, %v589
        %v707 = vsel %vm592, %v706, -inf
        %708 = vmax.xlane.f32.xlu0 %v707
        %v709 = vpop.xlane.xlu0 %708
        %v710 = vsub.f32 %v706, %v709
        %v711 = vmul.f32 %v710, 1.442695
        %v712 = vpow.pop %v711
        %v713 = vsel %vm592, %v712, 0.0
        %714 = vadd.xlane.f32.xlu0 %v713
        %v715 = vpop.xlane.xlu0 %714
        %v716 = vrcp.pop %v715
        %v717 = vmul.f32 %v712, %v716
        %v718 = vpack.c.bf16 %v717, %v717
        %719 = vrot.lane.b32.xlu0 %v607, 96
        %v720 = vpop.permute.xlu0 %719
        %v723 = vsel %vm592, %v718, 0
        %725 = vmatprep.subr.bf16.mxu0 0
        %726 = vmatpush1.bf16.msra.mxu0 %v720
        %727 = vmatprep.subr.bf16.mxu0 0
        %728 = vmatpush1.bf16.msra.mxu0 0
        %729 = vmatprep.subr.bf16.mxu0 0
        %730 = vmatpush1.bf16.msra.mxu0 0
        %731 = vmatprep.subr.bf16.mxu0 0
        %732 = vmatpush1.bf16.msra.mxu0 0
        %733 = vmatprep.subr.bf16.mxu0 0
        %734 = vmatpush1.bf16.msra.mxu0 0
        %735 = vmatprep.subr.bf16.mxu0 0
        %736 = vmatpush1.bf16.msra.mxu0 0
        %737 = vmatprep.subr.bf16.mxu0 0
        %738 = vmatpush1.bf16.msra.mxu0 0
        %739 = vmatprep.subr.bf16.mxu0 0
        %740 = vmatpush1.bf16.msra.mxu0 0
        %741 = vmatprep.subr.bf16.mxu0 0
        %742 = vmatpush1.bf16.msra.mxu0 0
        %743 = vmatprep.subr.bf16.mxu0 0
        %744 = vmatpush1.bf16.msra.mxu0 0
        %745 = vmatprep.subr.bf16.mxu0 0
        %746 = vmatpush1.bf16.msra.mxu0 0
        %747 = vmatprep.subr.bf16.mxu0 0
        %748 = vmatpush1.bf16.msra.mxu0 0
        %749 = vmatprep.subr.bf16.mxu0 0
        %750 = vmatpush1.bf16.msra.mxu0 0
        %751 = vmatprep.subr.bf16.mxu0 0
        %752 = vmatpush1.bf16.msra.mxu0 0
        %753 = vmatprep.subr.bf16.mxu0 0
        %754 = vmatpush1.bf16.msra.mxu0 0
        %755 = vmatprep.subr.bf16.mxu0 0
        %756 = vmatpush1.bf16.msra.mxu0 0
        %757 = vmatprep.mubr.bf16.mxu0 0
        %758 = vmatmul.mubr.bf16.gmra.mrb[0].mxu0 %v723
        %v759 = vpop.f32.mrb[0].mxu0
        %v760 = vadd.f32 0.0, %v759
        %v761 = vpop.f32.mrb[0].mxu0
        %v762 = vpop.f32.mrb[0].mxu0
        %v763 = vpop.f32.mrb[0].mxu0
        %764 = vdwg.mxu0
        %s765 = scalar_lea.vmem %s323, 8 [#allocation2]
        %v766 = vld [vmem:[%s765] sm:$0xf]
        %v767 = vunpack.c.l.bf16 %v766
        %768 = vrot.lane.b32.xlu0 %v527, 64
        %v769 = vpop.permute.xlu0 %768
        %770 = vrot.lane.b32.xlu0 %v537, 64
        %v771 = vpop.permute.xlu0 %770
        %v773 = vsel %vm538, %v769, 0
        %v776 = vsel %vm538, %v771, 0
        %778 = vmatprep.subr.bf16.mxu0 0
        %779 = vmatpush1.bf16.xpose.msra.mxu0 %v776
        %780 = vmatprep.subr.bf16.mxu0 0
        %781 = vmatpush1.bf16.xpose.msra.mxu0 0
        %782 = vmatprep.subr.bf16.mxu0 0
        %783 = vmatpush1.bf16.xpose.msra.mxu0 0
        %784 = vmatprep.subr.bf16.mxu0 0
        %785 = vmatpush1.bf16.xpose.msra.mxu0 0
        %786 = vmatprep.subr.bf16.mxu0 0
        %787 = vmatpush1.bf16.xpose.msra.mxu0 0
        %788 = vmatprep.subr.bf16.mxu0 0
        %789 = vmatpush1.bf16.xpose.msra.mxu0 0
        %790 = vmatprep.subr.bf16.mxu0 0
        %791 = vmatpush1.bf16.xpose.msra.mxu0 0
        %792 = vmatprep.subr.bf16.mxu0 0
        %793 = vmatpush1.bf16.xpose.msra.mxu0 0
        %794 = vmatprep.subr.bf16.mxu0 0
        %795 = vmatpush1.bf16.xpose.msra.mxu0 0
        %796 = vmatprep.subr.bf16.mxu0 0
        %797 = vmatpush1.bf16.xpose.msra.mxu0 0
        %798 = vmatprep.subr.bf16.mxu0 0
        %799 = vmatpush1.bf16.xpose.msra.mxu0 0
        %800 = vmatprep.subr.bf16.mxu0 0
        %801 = vmatpush1.bf16.xpose.msra.mxu0 0
        %802 = vmatprep.subr.bf16.mxu0 0
        %803 = vmatpush1.bf16.xpose.msra.mxu0 0
        %804 = vmatprep.subr.bf16.mxu0 0
        %805 = vmatpush1.bf16.xpose.msra.mxu0 0
        %806 = vmatprep.subr.bf16.mxu0 0
        %807 = vmatpush1.bf16.xpose.msra.mxu0 0
        %808 = vmatprep.subr.bf16.mxu0 0
        %809 = vmatpush1.bf16.xpose.msra.mxu0 0
        %810 = vmatprep.mubr.bf16.mxu0 0
        %811 = vmatmul.mubr.bf16.gmra.mrb[0].mxu0 %v773
        %v812 = vpop.f32.mrb[0].mxu0
        %v813 = vadd.f32 %v767, %v812
        %v814 = vpop.f32.mrb[0].mxu0
        %v815 = vpop.f32.mrb[0].mxu0
        %v816 = vpop.f32.mrb[0].mxu0
        %817 = vdwg.mxu0
        %v818 = vadd.f32 %v813, %v589
        %v819 = vsel %vm592, %v818, -inf
        %820 = vmax.xlane.f32.xlu0 %v819
        %v821 = vpop.xlane.xlu0 %820
        %v822 = vsub.f32 %v818, %v821
        %v823 = vmul.f32 %v822, 1.442695
        %v824 = vpow.pop %v823
        %v825 = vsel %vm592, %v824, 0.0
        %826 = vadd.xlane.f32.xlu0 %v825
        %v827 = vpop.xlane.xlu0 %826
        %v828 = vrcp.pop %v827
        %v829 = vmul.f32 %v824, %v828
        %v830 = vpack.c.bf16 %v829, %v829
        %831 = vrot.lane.b32.xlu0 %v607, 64
        %v832 = vpop.permute.xlu0 %831
        %v835 = vsel %vm592, %v830, 0
        %837 = vmatprep.subr.bf16.mxu0 0
        %838 = vmatpush1.bf16.msra.mxu0 %v832
        %839 = vmatprep.subr.bf16.mxu0 0
        %840 = vmatpush1.bf16.msra.mxu0 0
        %841 = vmatprep.subr.bf16.mxu0 0
        %842 = vmatpush1.bf16.msra.mxu0 0
        %843 = vmatprep.subr.bf16.mxu0 0
        %844 = vmatpush1.bf16.msra.mxu0 0
        %845 = vmatprep.subr.bf16.mxu0 0
        %846 = vmatpush1.bf16.msra.mxu0 0
        %847 = vmatprep.subr.bf16.mxu0 0
        %848 = vmatpush1.bf16.msra.mxu0 0
        %849 = vmatprep.subr.bf16.mxu0 0
        %850 = vmatpush1.bf16.msra.mxu0 0
        %851 = vmatprep.subr.bf16.mxu0 0
        %852 = vmatpush1.bf16.msra.mxu0 0
        %853 = vmatprep.subr.bf16.mxu0 0
        %854 = vmatpush1.bf16.msra.mxu0 0
        %855 = vmatprep.subr.bf16.mxu0 0
        %856 = vmatpush1.bf16.msra.mxu0 0
        %857 = vmatprep.subr.bf16.mxu0 0
        %858 = vmatpush1.bf16.msra.mxu0 0
        %859 = vmatprep.subr.bf16.mxu0 0
        %860 = vmatpush1.bf16.msra.mxu0 0
        %861 = vmatprep.subr.bf16.mxu0 0
        %862 = vmatpush1.bf16.msra.mxu0 0
        %863 = vmatprep.subr.bf16.mxu0 0
        %864 = vmatpush1.bf16.msra.mxu0 0
        %865 = vmatprep.subr.bf16.mxu0 0
        %866 = vmatpush1.bf16.msra.mxu0 0
        %867 = vmatprep.subr.bf16.mxu0 0
        %868 = vmatpush1.bf16.msra.mxu0 0
        %869 = vmatprep.mubr.bf16.mxu0 0
        %870 = vmatmul.mubr.bf16.gmra.mrb[0].mxu0 %v835
        %v871 = vpop.f32.mrb[0].mxu0
        %v872 = vadd.f32 0.0, %v871
        %v873 = vpop.f32.mrb[0].mxu0
        %v874 = vpop.f32.mrb[0].mxu0
        %v875 = vpop.f32.mrb[0].mxu0
        %876 = vdwg.mxu0
        %s877 = scalar_lea.vmem %s323, 12 [#allocation2]
        %v878 = vld [vmem:[%s877] sm:$0xf]
        %v879 = vunpack.c.l.bf16 %v878
        %880 = vrot.lane.b32.xlu0 %v527, 32
        %v881 = vpop.permute.xlu0 %880
        %882 = vrot.lane.b32.xlu0 %v537, 32
        %v883 = vpop.permute.xlu0 %882
        %v885 = vsel %vm538, %v881, 0
        %v888 = vsel %vm538, %v883, 0
        %890 = vmatprep.subr.bf16.mxu0 0
        %891 = vmatpush1.bf16.xpose.msra.mxu0 %v888
        %892 = vmatprep.subr.bf16.mxu0 0
        %893 = vmatpush1.bf16.xpose.msra.mxu0 0
        %894 = vmatprep.subr.bf16.mxu0 0
        %895 = vmatpush1.bf16.xpose.msra.mxu0 0
        %896 = vmatprep.subr.bf16.mxu0 0
        %897 = vmatpush1.bf16.xpose.msra.mxu0 0
        %898 = vmatprep.subr.bf16.mxu0 0
        %899 = vmatpush1.bf16.xpose.msra.mxu0 0
        %900 = vmatprep.subr.bf16.mxu0 0
        %901 = vmatpush1.bf16.xpose.msra.mxu0 0
        %902 = vmatprep.subr.bf16.mxu0 0
        %903 = vmatpush1.bf16.xpose.msra.mxu0 0
        %904 = vmatprep.subr.bf16.mxu0 0
        %905 = vmatpush1.bf16.xpose.msra.mxu0 0
        %906 = vmatprep.subr.bf16.mxu0 0
        %907 = vmatpush1.bf16.xpose.msra.mxu0 0
        %908 = vmatprep.subr.bf16.mxu0 0
        %909 = vmatpush1.bf16.xpose.msra.mxu0 0
        %910 = vmatprep.subr.bf16.mxu0 0
        %911 = vmatpush1.bf16.xpose.msra.mxu0 0
        %912 = vmatprep.subr.bf16.mxu0 0
        %913 = vmatpush1.bf16.xpose.msra.mxu0 0
        %914 = vmatprep.subr.bf16.mxu0 0
        %915 = vmatpush1.bf16.xpose.msra.mxu0 0
        %916 = vmatprep.subr.bf16.mxu0 0
        %917 = vmatpush1.bf16.xpose.msra.mxu0 0
        %918 = vmatprep.subr.bf16.mxu0 0
        %919 = vmatpush1.bf16.xpose.msra.mxu0 0
        %920 = vmatprep.subr.bf16.mxu0 0
        %921 = vmatpush1.bf16.xpose.msra.mxu0 0
        %922 = vmatprep.mubr.bf16.mxu0 0
        %923 = vmatmul.mubr.bf16.gmra.mrb[0].mxu0 %v885
        %v924 = vpop.f32.mrb[0].mxu0
        %v925 = vadd.f32 %v879, %v924
        %v926 = vpop.f32.mrb[0].mxu0
        %v927 = vpop.f32.mrb[0].mxu0
        %v928 = vpop.f32.mrb[0].mxu0
        %929 = vdwg.mxu0
        %v930 = vadd.f32 %v925, %v589
        %v931 = vsel %vm592, %v930, -inf
        %932 = vmax.xlane.f32.xlu0 %v931
        %v933 = vpop.xlane.xlu0 %932
        %v934 = vsub.f32 %v930, %v933
        %v935 = vmul.f32 %v934, 1.442695
        %v936 = vpow.pop %v935
        %v937 = vsel %vm592, %v936, 0.0
        %938 = vadd.xlane.f32.xlu0 %v937
        %v939 = vpop.xlane.xlu0 %938
        %v940 = vrcp.pop %v939
        %v941 = vmul.f32 %v936, %v940
        %v942 = vpack.c.bf16 %v941, %v941
        %943 = vrot.lane.b32.xlu0 %v607, 32
        %v944 = vpop.permute.xlu0 %943
        %v947 = vsel %vm592, %v942, 0
        %949 = vmatprep.subr.bf16.mxu0 0
        %950 = vmatpush1.bf16.msra.mxu0 %v944
        %951 = vmatprep.subr.bf16.mxu0 0
        %952 = vmatpush1.bf16.msra.mxu0 0
        %953 = vmatprep.subr.bf16.mxu0 0
        %954 = vmatpush1.bf16.msra.mxu0 0
        %955 = vmatprep.subr.bf16.mxu0 0
        %956 = vmatpush1.bf16.msra.mxu0 0
        %957 = vmatprep.subr.bf16.mxu0 0
        %958 = vmatpush1.bf16.msra.mxu0 0
        %959 = vmatprep.subr.bf16.mxu0 0
        %960 = vmatpush1.bf16.msra.mxu0 0
        %961 = vmatprep.subr.bf16.mxu0 0
        %962 = vmatpush1.bf16.msra.mxu0 0
        %963 = vmatprep.subr.bf16.mxu0 0
        %964 = vmatpush1.bf16.msra.mxu0 0
        %965 = vmatprep.subr.bf16.mxu0 0
        %966 = vmatpush1.bf16.msra.mxu0 0
        %967 = vmatprep.subr.bf16.mxu0 0
        %968 = vmatpush1.bf16.msra.mxu0 0
        %969 = vmatprep.subr.bf16.mxu0 0
        %970 = vmatpush1.bf16.msra.mxu0 0
        %971 = vmatprep.subr.bf16.mxu0 0
        %972 = vmatpush1.bf16.msra.mxu0 0
        %973 = vmatprep.subr.bf16.mxu0 0
        %974 = vmatpush1.bf16.msra.mxu0 0
        %975 = vmatprep.subr.bf16.mxu0 0
        %976 = vmatpush1.bf16.msra.mxu0 0
        %977 = vmatprep.subr.bf16.mxu0 0
        %978 = vmatpush1.bf16.msra.mxu0 0
        %979 = vmatprep.subr.bf16.mxu0 0
        %980 = vmatpush1.bf16.msra.mxu0 0
        %981 = vmatprep.mubr.bf16.mxu0 0
        %982 = vmatmul.mubr.bf16.gmra.mrb[0].mxu0 %v947
        %v983 = vpop.f32.mrb[0].mxu0
        %v984 = vadd.f32 0.0, %v983
        %v985 = vpop.f32.mrb[0].mxu0
        %v986 = vpop.f32.mrb[0].mxu0
        %v987 = vpop.f32.mrb[0].mxu0
        %988 = vdwg.mxu0
        %990 = vrot.lane.b32.xlu0 %v760, 32
        %v991 = vpop.permute.xlu0 %990
        %994 = vrot.lane.b32.xlu0 %v872, 64
        %v995 = vpop.permute.xlu0 %994
        %998 = vrot.lane.b32.xlu0 %v984, 96
        %v999 = vpop.permute.xlu0 %998
        %v1001 = vsel %vm538, %v647, %v991
        %vm1002 = vcmask 523264
        %v1003 = vsel %vm1002, %v1001, %v995
        %vm1004 = vcmask 785408
        %v1005 = vsel %vm1004, %v1003, %v999
        %v1006 = vmul.f32 %v1005, %v526
        %v1007 = vpack.c.bf16 %v1006, %v1006
        %v1008 = vld [vmem:[%s5] sm:$0xf]
        %v1009 = vld [vmem:[%s5 + $0x4] sm:$0xf]
        %v1010 = vld [vmem:[%s5 + $0x8] sm:$0xf]
        %v1011 = vld [vmem:[%s5 + $0xc] sm:$0xf]
        %v1012 = vld [vmem:[%s5 + $0x10] sm:$0xf]
        %v1013 = vld [vmem:[%s5 + $0x14] sm:$0xf]
        %v1014 = vld [vmem:[%s5 + $0x18] sm:$0xf]
        %v1015 = vld [vmem:[%s5 + $0x1c] sm:$0xf]
        %v1016 = vld [vmem:[%s5 + $0x20] sm:$0xf]
        %v1017 = vld [vmem:[%s5 + $0x24] sm:$0xf]
        %v1018 = vld [vmem:[%s5 + $0x28] sm:$0xf]
        %v1019 = vld [vmem:[%s5 + $0x2c] sm:$0xf]
        %v1020 = vld [vmem:[%s5 + $0x30] sm:$0xf]
        %v1021 = vld [vmem:[%s5 + $0x34] sm:$0xf]
        %v1022 = vld [vmem:[%s5 + $0x38] sm:$0xf]
        %v1023 = vld [vmem:[%s5 + $0x3c] sm:$0xf]
        %v1040 = vunpack.c.l.b16 %v1008
        %v1041 = vunpack.c.l.b16 %v1009
        %v1042 = vunpack.c.l.b16 %v1010
        %v1043 = vunpack.c.l.b16 %v1011
        %v1044 = vunpack.c.l.b16 %v1012
        %v1045 = vunpack.c.l.b16 %v1013
        %v1046 = vunpack.c.l.b16 %v1014
        %v1047 = vunpack.c.l.b16 %v1015
        %v1048 = vunpack.c.l.b16 %v1016
        %v1049 = vunpack.c.l.b16 %v1017
        %v1050 = vunpack.c.l.b16 %v1018
        %v1051 = vunpack.c.l.b16 %v1019
        %v1052 = vunpack.c.l.b16 %v1020
        %v1053 = vunpack.c.l.b16 %v1021
        %v1054 = vunpack.c.l.b16 %v1022
        %v1055 = vunpack.c.l.b16 %v1023
        %v1056 = vpack.c.b16 %v1041, %v1040
        %v1057 = vpack.c.b16 %v1043, %v1042
        %v1058 = vpack.c.b16 %v1045, %v1044
        %v1059 = vpack.c.b16 %v1047, %v1046
        %v1060 = vpack.c.b16 %v1049, %v1048
        %v1061 = vpack.c.b16 %v1051, %v1050
        %v1062 = vpack.c.b16 %v1053, %v1052
        %v1063 = vpack.c.b16 %v1055, %v1054
        %1072 = vmatprep.subr.bf16.mxu0 0
        %1073 = vmatpush1.bf16.msra.mxu0 %v1056
        %1074 = vmatprep.subr.bf16.mxu0 0
        %1075 = vmatpush1.bf16.msra.mxu0 %v1057
        %1076 = vmatprep.subr.bf16.mxu0 0
        %1077 = vmatpush1.bf16.msra.mxu0 %v1058
        %1078 = vmatprep.subr.bf16.mxu0 0
        %1079 = vmatpush1.bf16.msra.mxu0 %v1059
        %1080 = vmatprep.subr.bf16.mxu0 0
        %1081 = vmatpush1.bf16.msra.mxu0 %v1060
        %1082 = vmatprep.subr.bf16.mxu0 0
        %1083 = vmatpush1.bf16.msra.mxu0 %v1061
        %1084 = vmatprep.subr.bf16.mxu0 0
        %1085 = vmatpush1.bf16.msra.mxu0 %v1062
        %1086 = vmatprep.subr.bf16.mxu0 0
        %1087 = vmatpush1.bf16.msra.mxu0 %v1063
        %1088 = vmatprep.subr.bf16.mxu0 0
        %1089 = vmatpush1.bf16.msra.mxu0 0
        %1090 = vmatprep.subr.bf16.mxu0 0
        %1091 = vmatpush1.bf16.msra.mxu0 0
        %1092 = vmatprep.subr.bf16.mxu0 0
        %1093 = vmatpush1.bf16.msra.mxu0 0
        %1094 = vmatprep.subr.bf16.mxu0 0
        %1095 = vmatpush1.bf16.msra.mxu0 0
        %1096 = vmatprep.subr.bf16.mxu0 0
        %1097 = vmatpush1.bf16.msra.mxu0 0
        %1098 = vmatprep.subr.bf16.mxu0 0
        %1099 = vmatpush1.bf16.msra.mxu0 0
        %1100 = vmatprep.subr.bf16.mxu0 0
        %1101 = vmatpush1.bf16.msra.mxu0 0
        %1102 = vmatprep.subr.bf16.mxu0 0
        %1103 = vmatpush1.bf16.msra.mxu0 0
        %1104 = vmatprep.mubr.bf16.mxu0 0
        %1105 = vmatmul.mubr.bf16.gmra.mrb[0].mxu0 %v1007
        %v1106 = vpop.f32.mrb[0].mxu0
        %v1107 = vadd.f32 0.0, %v1106
        %v1108 = vpop.f32.mrb[0].mxu0
        %v1109 = vpop.f32.mrb[0].mxu0
        %v1110 = vpop.f32.mrb[0].mxu0
        %1111 = vdwg.mxu0
        %v1112 = vpack.c.bf16 %v1107, %v1107
        %1113 = vst [vmem:[%s365] sm:$0xf] %v1112
        %s1114 = sand.u32 %s190, 1
        %s1115 = scalar_lea.sflag [#allocation4], %s1114
        %s1116 = sand.u32 %s190, 1
        %s1117 = smul.addr %s1116, 4
        %s1118 = scalar_lea.vmem [#allocation3], %s1117
        // Predicated region
        $region86: #{attention_mix.3} parent=80 // pred_check
          %p1119 = pneg %p200
        $region87: #{attention_mix.3} parent=80 // pred_check_branch
          %1121 = sbr.rel (%p1119) target = $region89
        $region88: #{attention_mix.3} parent=80 // pred_region
          %s1123 = ssub.s32 64, 64
          %1124 = vsyncadd %s1115, %s1123
          %s1125 = smul.addr %s25, 2
          %s1126 = sadd.s32 %s24, %s1125
          %s1127 = smul.addr %s1126, 64
          %s1128 = scalar_lea.hbm %s6, %s1127
          %s1130 = sshll.u32 %s1118, 4
          %s1131 = int_to_ptr.vmem [resolvable:$true] %s1130
          %1133 = dma.vmem_to_hbm [thread:$0]  %s1131, 64, %s1128, %s1115
        $region89: #{attention_mix.3} parent=80 // pred_fallthru
          _
      $region81: #{attention_mix.3} parent=5 // pred_fallthru
        _
      %p1134 = scmp.le.s32.totalorder 2, %s15
      // Predicated region
      $region90: #{attention_mix.3} parent=5 // pred_check
        %p1135 = pneg %p1134
      $region91: #{attention_mix.3} parent=5 // pred_check_branch
        %1137 = sbr.rel (%p1135) target = $region93
      $region92: #{attention_mix.3} parent=5 // pred_region
        %s1138 = ssub.s32 %s15, 2
        // Predicated region
        $region94: #{attention_mix.3} parent=92 // pred_check
          %p1139 = pneg %p206
        $region95: #{attention_mix.3} parent=92 // pred_check_branch
          %1141 = sbr.rel (%p1139) target = $region97
        $region96: #{attention_mix.3} parent=92 // pred_region
          %s1142 = sand.u32 %s191, 1
          %s1143 = scalar_lea.sflag [#allocation4], %s1142
          %s1144 = sand.u32 %s191, 1
          %s1145 = smul.addr %s1144, 4
          %s1146 = scalar_lea.vmem [#allocation3], %s1145
          %1147 = dma.done %s1143, 64
        $region97: #{attention_mix.3} parent=92 // pred_fallthru
          _
      $region93: #{attention_mix.3} parent=5 // pred_fallthru
        _
    $region6: #{attention_mix.3} parent=1 // loop_footer
      %s19 = sadd.s32 1, %s15
    $region7: #{attention_mix.3} parent=1 // loop_footer_branch
      %14 = sbr.rel target = $region3
    $region8: #{attention_mix.3} parent=1 // loop_exit
      _
    %1148 = vsyncpa [#allocation4], 1
    %s1149 = scalar_lea.sflag [#allocation4], 1
    %1150 = vsyncpa %s1149, 1

// kernel: attention_mix.2
$region0: #{attention_mix.2}
  #allocation0 [shape = 'u32[]', space=smem, size = 0x4, offset = 0x4, fixed_abs, tag = 'smem constant byte address 0x4 - core index']
  #allocation1 [shape = 'u32[144,128]{1,0:T(1,128)}', space=vmem, size = 0x12000, scoped, tag = 'internal scratch']
  %s0 = inlined_call_operand.vmem [shape: f32[16,16,128], index: 0, kind: input, shape index: {}]
  %s1 = inlined_call_operand.vmem [shape: f32[1,128], index: 1, kind: input, shape index: {}]
  %s2 = inlined_call_operand.vmem [shape: f32[1,128], index: 2, kind: input, shape index: {}]
  %s3 = inlined_call_operand.vmem [shape: bf16[4,128], index: 3, kind: input, shape index: {}]
  %s4 = inlined_call_operand.vmem [shape: bf16[128,256], index: 4, kind: input, shape index: {}]
  %s5 = inlined_call_operand.vmem [shape: bf16[16,16,128], index: 5, kind: output, shape index: {0}]
  %s6 = inlined_call_operand.vmem [shape: bf16[4,16,16], index: 6, kind: output, shape index: {1}]
  %s7 = inlined_call_operand.vmem [shape: bf16[16,16,256], index: 7, kind: output, shape index: {2}]
  %8 = xla_tuple %s5, %s6, %s7
  %s9 = sld [smem:[#allocation0]]
  $region106: #{attention_mix.2} parent=0
    _
  %s11 = ssub.s32 1, %s9
  %s12 = scalar_select 0, %s11, %s9
  $region1: #{attention_mix.2} parent=0
    #allocation2 [shape = 'u8[16384]{0}', space=vmem, size = 0x4000, scoped, tag = 'output window, operand 1']
    loop: start=0, step=1, limit=4
    $region2: #{attention_mix.2} parent=1 // loop_pre_header
      _
    $region3: #{attention_mix.2} parent=1 // loop_header
      %s14 = sphi 0, %s18
      %p15 = scmp.ge.s32.totalorder %s14, 4
      %s21 = sphi 0, %s33
      %s22 = sphi 0, %s29
      %s23 = sphi 0, %s21
      %s24 = sphi 0, %s22
      %s25 = sphi 0, %s23
      %s26 = sphi 0, %s24
      %s38 = sphi 0, %s40
      %s41 = sphi 0, %s38
      %s42 = sphi 0, %s41
      %s58 = sphi 0, %s42
      %s62 = sphi 0, %s62
      %s64 = sphi 0, %s62
      %s65 = sphi 0, %s64
      %s79 = sphi 0, %s65
      %s83 = sphi 0, %s83
      %s85 = sphi 0, %s83
      %s86 = sphi 0, %s85
      %s100 = sphi 0, %s86
      %s104 = sphi 0, %s104
      %s106 = sphi 0, %s104
      %s107 = sphi 0, %s106
      %s121 = sphi 0, %s107
      %s125 = sphi 0, %s125
      %s127 = sphi 0, %s125
      %s128 = sphi 0, %s127
      %s142 = sphi 0, %s128
      %s150 = sphi 0, %s152
      %s153 = sphi 0, %s150
      %s154 = sphi 0, %s153
      %s170 = sphi 0, %s154
      %s178 = sphi 0, %s180
      %s181 = sphi 0, %s178
      %s182 = sphi 0, %s181
      %s198 = sphi 0, %s182
      %s206 = sphi 0, %s208
      %s209 = sphi 0, %s206
      %s210 = sphi 0, %s209
      %s226 = sphi 0, %s210
    $region4: #{attention_mix.2} parent=1 // loop_header_branch
      %17 = sbr.rel (%p15) target = $region8
    $region5: #{attention_mix.2} parent=1 // loop_body
      %s19 = ssub.s32 %s14, 1
      %s20 = ssub.s32 %s14, 2
      %s27 = sadd.s32 1, %s22
      %p28 = scmp.ge.s32.totalorder %s27, 1
      %s29 = scalar_select %p28, 0, %s27
      %s30 = sadd.s32 1, %s21
      %s31 = scalar_select %p28, %s30, %s21
      %p32 = scmp.ge.s32.totalorder %s31, 2
      %s33 = scalar_select %p32, 0, %s31
      %s34 = ssub.s32 %s21, %s33
      %s35 = ssub.s32 %s22, %s29
      %s36 = sor.u32 %s34, %s35
      %p37 = scmp.eq.s32.totalorder %s36, 0
      %s39 = sadd.s32 %s38, 1
      %s40 = scalar_select %p37, %s38, %s39
      %p43 = pneg %p37
      %p44 = scmp.eq.s32.totalorder %s14, 1
      %p45 = por %p43, %p44
      %p46 = scmp.ne.s32.totalorder %s38, %s41
      %p47 = scmp.eq.s32.totalorder %s14, 0
      %p48 = por %p46, %p47
      %p49 = scmp.ne.s32.totalorder %s38, %s41
      %p50 = scmp.eq.s32.totalorder %s19, 1
      %p51 = por %p49, %p50
      %p52 = scmp.ne.s32.totalorder %s41, %s42
      %p53 = scmp.eq.s32.totalorder %s19, 0
      %p54 = por %p52, %p53
      %p55 = scmp.ne.s32.totalorder %s41, %s42
      %p56 = scmp.eq.s32.totalorder %s20, 1
      %p57 = por %p55, %p56
      %p59 = scmp.ne.s32.totalorder %s42, %s58
      %p60 = scmp.eq.s32.totalorder %s20, 0
      %p61 = por %p59, %p60
      %s63 = sadd.s32 %s62, 1
      %p66 = scmp.eq.s32.totalorder %s14, 1
      %p67 = scmp.ne.s32.totalorder %s62, %s64
      %p68 = scmp.eq.s32.totalorder %s14, 0
      %p69 = por %p67, %p68
      %p70 = scmp.ne.s32.totalorder %s62, %s64
      %p71 = scmp.eq.s32.totalorder %s19, 1
      %p72 = por %p70, %p71
      %p73 = scmp.ne.s32.totalorder %s64, %s65
      %p74 = scmp.eq.s32.totalorder %s19, 0
      %p75 = por %p73, %p74
      %p76 = scmp.ne.s32.totalorder %s64, %s65
      %p77 = scmp.eq.s32.totalorder %s20, 1
      %p78 = por %p76, %p77
      %p80 = scmp.ne.s32.totalorder %s65, %s79
      %p81 = scmp.eq.s32.totalorder %s20, 0
      %p82 = por %p80, %p81
      %s84 = sadd.s32 %s83, 1
      %p87 = scmp.eq.s32.totalorder %s14, 1
      %p88 = scmp.ne.s32.totalorder %s83, %s85
      %p89 = scmp.eq.s32.totalorder %s14, 0
      %p90 = por %p88, %p89
      %p91 = scmp.ne.s32.totalorder %s83, %s85
      %p92 = scmp.eq.s32.totalorder %s19, 1
      %p93 = por %p91, %p92
      %p94 = scmp.ne.s32.totalorder %s85, %s86
      %p95 = scmp.eq.s32.totalorder %s19, 0
      %p96 = por %p94, %p95
      %p97 = scmp.ne.s32.totalorder %s85, %s86
      %p98 = scmp.eq.s32.totalorder %s20, 1
      %p99 = por %p97, %p98
      %p101 = scmp.ne.s32.totalorder %s86, %s100
      %p102 = scmp.eq.s32.totalorder %s20, 0
      %p103 = por %p101, %p102
      %s105 = sadd.s32 %s104, 1
      %p108 = scmp.eq.s32.totalorder %s14, 1
      %p109 = scmp.ne.s32.totalorder %s104, %s106
      %p110 = scmp.eq.s32.totalorder %s14, 0
      %p111 = por %p109, %p110
      %p112 = scmp.ne.s32.totalorder %s104, %s106
      %p113 = scmp.eq.s32.totalorder %s19, 1
      %p114 = por %p112, %p113
      %p115 = scmp.ne.s32.totalorder %s106, %s107
      %p116 = scmp.eq.s32.totalorder %s19, 0
      %p117 = por %p115, %p116
      %p118 = scmp.ne.s32.totalorder %s106, %s107
      %p119 = scmp.eq.s32.totalorder %s20, 1
      %p120 = por %p118, %p119
      %p122 = scmp.ne.s32.totalorder %s107, %s121
      %p123 = scmp.eq.s32.totalorder %s20, 0
      %p124 = por %p122, %p123
      %s126 = sadd.s32 %s125, 1
      %p129 = scmp.eq.s32.totalorder %s14, 1
      %p130 = scmp.ne.s32.totalorder %s125, %s127
      %p131 = scmp.eq.s32.totalorder %s14, 0
      %p132 = por %p130, %p131
      %p133 = scmp.ne.s32.totalorder %s125, %s127
      %p134 = scmp.eq.s32.totalorder %s19, 1
      %p135 = por %p133, %p134
      %p136 = scmp.ne.s32.totalorder %s127, %s128
      %p137 = scmp.eq.s32.totalorder %s19, 0
      %p138 = por %p136, %p137
      %p139 = scmp.ne.s32.totalorder %s127, %s128
      %p140 = scmp.eq.s32.totalorder %s20, 1
      %p141 = por %p139, %p140
      %p143 = scmp.ne.s32.totalorder %s128, %s142
      %p144 = scmp.eq.s32.totalorder %s20, 0
      %p145 = por %p143, %p144
      %s146 = ssub.s32 %s21, %s33
      %s147 = ssub.s32 %s22, %s29
      %s148 = sor.u32 %s146, %s147
      %p149 = scmp.eq.s32.totalorder %s148, 0
      %s151 = sadd.s32 %s150, 1
      %s152 = scalar_select %p149, %s150, %s151
      %p155 = pneg %p149
      %p156 = scmp.eq.s32.totalorder %s14, 1
      %p157 = por %p155, %p156
      %p158 = scmp.ne.s32.totalorder %s150, %s153
      %p159 = scmp.eq.s32.totalorder %s14, 0
      %p160 = por %p158, %p159
      %p161 = scmp.ne.s32.totalorder %s150, %s153
      %p162 = scmp.eq.s32.totalorder %s19, 1
      %p163 = por %p161, %p162
      %p164 = scmp.ne.s32.totalorder %s153, %s154
      %p165 = scmp.eq.s32.totalorder %s19, 0
      %p166 = por %p164, %p165
      %p167 = scmp.ne.s32.totalorder %s153, %s154
      %p168 = scmp.eq.s32.totalorder %s20, 1
      %p169 = por %p167, %p168
      %p171 = scmp.ne.s32.totalorder %s154, %s170
      %p172 = scmp.eq.s32.totalorder %s20, 0
      %p173 = por %p171, %p172
      %s174 = ssub.s32 %s21, %s33
      %s175 = ssub.s32 %s22, %s29
      %s176 = sor.u32 %s174, %s175
      %p177 = scmp.eq.s32.totalorder %s176, 0
      %s179 = sadd.s32 %s178, 1
      %s180 = scalar_select %p177, %s178, %s179
      %p183 = pneg %p177
      %p184 = scmp.eq.s32.totalorder %s14, 1
      %p185 = por %p183, %p184
      %p186 = scmp.ne.s32.totalorder %s178, %s181
      %p187 = scmp.eq.s32.totalorder %s14, 0
      %p188 = por %p186, %p187
      %p189 = scmp.ne.s32.totalorder %s178, %s181
      %p190 = scmp.eq.s32.totalorder %s19, 1
      %p191 = por %p189, %p190
      %p192 = scmp.ne.s32.totalorder %s181, %s182
      %p193 = scmp.eq.s32.totalorder %s19, 0
      %p194 = por %p192, %p193
      %p195 = scmp.ne.s32.totalorder %s181, %s182
      %p196 = scmp.eq.s32.totalorder %s20, 1
      %p197 = por %p195, %p196
      %p199 = scmp.ne.s32.totalorder %s182, %s198
      %p200 = scmp.eq.s32.totalorder %s20, 0
      %p201 = por %p199, %p200
      %s202 = ssub.s32 %s21, %s33
      %s203 = ssub.s32 %s22, %s29
      %s204 = sor.u32 %s202, %s203
      %p205 = scmp.eq.s32.totalorder %s204, 0
      %s207 = sadd.s32 %s206, 1
      %s208 = scalar_select %p205, %s206, %s207
      %p211 = pneg %p205
      %p212 = scmp.eq.s32.totalorder %s14, 1
      %p213 = por %p211, %p212
      %p214 = scmp.ne.s32.totalorder %s206, %s209
      %p215 = scmp.eq.s32.totalorder %s14, 0
      %p216 = por %p214, %p215
      %p217 = scmp.ne.s32.totalorder %s206, %s209
      %p218 = scmp.eq.s32.totalorder %s19, 1
      %p219 = por %p217, %p218
      %p220 = scmp.ne.s32.totalorder %s209, %s210
      %p221 = scmp.eq.s32.totalorder %s19, 0
      %p222 = por %p220, %p221
      %p223 = scmp.ne.s32.totalorder %s209, %s210
      %p224 = scmp.eq.s32.totalorder %s20, 1
      %p225 = por %p223, %p224
      %p227 = scmp.ne.s32.totalorder %s210, %s226
      %p228 = scmp.eq.s32.totalorder %s20, 0
      %p229 = por %p227, %p228
      %p230 = scmp.le.s32.totalorder 1, %s14
      %p231 = scmp.lt.s32.totalorder %s14, 3
      %p232 = pnand %p230, %p231
      %p233 = pneg %p232
      // Predicated region
      $region9: #{attention_mix.2} parent=5 // pred_check
        _
      $region10: #{attention_mix.2} parent=5 // pred_check_branch
        %235 = sbr.rel (%p232) target = $region12
      $region11: #{attention_mix.2} parent=5 // pred_region
        %s236 = ssub.s32 %s14, 1
        // Predicated region
        $region13: #{attention_mix.2} parent=11 // pred_check
          %p237 = pneg %p75
        $region14: #{attention_mix.2} parent=11 // pred_check_branch
          %239 = sbr.rel (%p237) target = $region16
        $region15: #{attention_mix.2} parent=11 // pred_region
          _
        $region16: #{attention_mix.2} parent=11 // pred_fallthru
          _
        // Predicated region
        $region17: #{attention_mix.2} parent=11 // pred_check
          %p240 = pneg %p96
        $region18: #{attention_mix.2} parent=11 // pred_check_branch
          %242 = sbr.rel (%p240) target = $region20
        $region19: #{attention_mix.2} parent=11 // pred_region
          _
        $region20: #{attention_mix.2} parent=11 // pred_fallthru
          _
        // Predicated region
        $region21: #{attention_mix.2} parent=11 // pred_check
          %p243 = pneg %p117
        $region22: #{attention_mix.2} parent=11 // pred_check_branch
          %245 = sbr.rel (%p243) target = $region24
        $region23: #{attention_mix.2} parent=11 // pred_region
          _
        $region24: #{attention_mix.2} parent=11 // pred_fallthru
          _
        // Predicated region
        $region25: #{attention_mix.2} parent=11 // pred_check
          %p246 = pneg %p138
        $region26: #{attention_mix.2} parent=11 // pred_check_branch
          %248 = sbr.rel (%p246) target = $region28
        $region27: #{attention_mix.2} parent=11 // pred_region
          _
        $region28: #{attention_mix.2} parent=11 // pred_fallthru
          _
      $region12: #{attention_mix.2} parent=5 // pred_fallthru
        _
      %p249 = scmp.lt.s32.totalorder %s14, 2
      // Predicated region
      $region29: #{attention_mix.2} parent=5 // pred_check
        %p250 = pneg %p249
      $region30: #{attention_mix.2} parent=5 // pred_check_branch
        %252 = sbr.rel (%p250) target = $region32
      $region31: #{attention_mix.2} parent=5 // pred_region
        // Predicated region
        $region33: #{attention_mix.2} parent=31 // pred_check
          %p253 = pneg %p48
        $region34: #{attention_mix.2} parent=31 // pred_check_branch
          %255 = sbr.rel (%p253) target = $region36
        $region35: #{attention_mix.2} parent=31 // pred_region
          %s256 = smul.u32 8, %s21
          %s257 = smul.u32 2, %s22
          %p258 = scmp.lt.s32.totalorder %s256, 15
          %s259 = scalar_select %p258, %s256, 15
          %p260 = scmp.lt.s32.totalorder %s257, 1
          %s261 = scalar_select %p260, %s257, 1
          %s262 = smul.addr %s259, 2
          %s263 = sadd.s32 %s261, %s262
          %s264 = smul.addr %s263, 8
          %s265 = scalar_lea.vmem %s0, %s264
          %s266 = smul.u32 8, %s21
          %s267 = smul.u32 2, %s22
        $region36: #{attention_mix.2} parent=31 // pred_fallthru
          _
      $region32: #{attention_mix.2} parent=5 // pred_fallthru
        _
      %p268 = scmp.le.s32.totalorder 1, %s14
      %p269 = scmp.lt.s32.totalorder %s14, 3
      %p270 = pnand %p268, %p269
      %p271 = pneg %p270
      // Predicated region
      $region37: #{attention_mix.2} parent=5 // pred_check
        _
      $region38: #{attention_mix.2} parent=5 // pred_check_branch
        %273 = sbr.rel (%p270) target = $region40
      $region39: #{attention_mix.2} parent=5 // pred_region
        %s274 = ssub.s32 %s14, 1
        %s275 = smul.u32 8, %s23
        %s276 = smul.u32 2, %s24
        %p277 = scmp.lt.s32.totalorder %s275, 15
        %s278 = scalar_select %p277, %s275, 15
        %p279 = scmp.lt.s32.totalorder %s276, 1
        %s280 = scalar_select %p279, %s276, 1
        %s281 = smul.addr %s278, 2
        %s282 = sadd.s32 %s280, %s281
        %s283 = smul.addr %s282, 8
        %s284 = scalar_lea.vmem %s0, %s283
        %p285 = pneg %p54
        %p286 = pneg %p51
        %p287 = pneg %p75
        %p288 = pneg %p72
        %p289 = pneg %p96
        %p290 = pneg %p93
        %p291 = pneg %p117
        %p292 = pneg %p114
        %p293 = pneg %p138
        %p294 = pneg %p135
        %p295 = pneg %p166
        %p296 = pneg %p163
        %s297 = smul.u32 8, %s23
        %s298 = smul.u32 2, %s24
        %p299 = scmp.lt.s32.totalorder %s297, 15
        %s300 = scalar_select %p299, %s297, 15
        %p301 = scmp.lt.s32.totalorder %s298, 1
        %s302 = scalar_select %p301, %s298, 1
        %s303 = smul.addr %s300, 2
        %s304 = sadd.s32 %s302, %s303
        %s305 = smul.addr %s304, 4
        %s306 = scalar_lea.vmem %s5, %s305
        %p307 = pneg %p194
        %p308 = pneg %p191
        %s309 = sand.u32 %s181, 1
        %s310 = sand.u32 %s181, 1
        %s311 = smul.addr %s310, 16
        %s312 = scalar_lea.vmem [#allocation2], %s311
        %p313 = pneg %p222
        %p314 = pneg %p219
        %s315 = smul.u32 8, %s23
        %s316 = smul.u32 2, %s24
        %p317 = scmp.lt.s32.totalorder %s315, 15
        %s318 = scalar_select %p317, %s315, 15
        %p319 = scmp.lt.s32.totalorder %s316, 1
        %s320 = scalar_select %p319, %s316, 1
        %s321 = smul.addr %s320, 2
        %s322 = smul.addr %s318, 4
        %s323 = sadd.s32 %s321, %s322
        %s324 = smul.addr %s323, 4
        %s325 = scalar_lea.vmem %s7, %s324
        %s326 = smul.u32 8, %s23
        %s327 = smul.u32 2, %s24
        %p328 = scmp.lt.s32.totalorder %s326, 15
        %s329 = scalar_select %p328, %s326, 15
        %p330 = scmp.lt.s32.totalorder %s327, 1
        %s331 = scalar_select %p330, %s327, 1
        %s332 = smul.addr %s329, 2
        %s333 = sadd.s32 %s331, %s332
        %s334 = smul.addr %s333, 8
        %s335 = scalar_lea.vmem %s0, %s334
        %s336 = smul.u32 8, %s23
        %s337 = smul.u32 2, %s24
        %s338 = smul.u32 8, %s23
        %s339 = smul.u32 2, %s24
        %p340 = scmp.lt.s32.totalorder %s338, 15
        %s341 = scalar_select %p340, %s338, 15
        %p342 = scmp.lt.s32.totalorder %s339, 1
        %s343 = scalar_select %p342, %s339, 1
        %s344 = smul.addr %s341, 2
        %s345 = sadd.s32 %s343, %s344
        %s346 = smul.addr %s345, 4
        %s347 = scalar_lea.vmem %s5, %s346
        %s348 = smul.u32 8, %s23
        %s349 = smul.u32 2, %s24
        %s350 = smul.u32 8, %s23
        %s351 = smul.u32 2, %s24
        %p352 = scmp.lt.s32.totalorder %s350, 15
        %s353 = scalar_select %p352, %s350, 15
        %p354 = scmp.lt.s32.totalorder %s351, 1
        %s355 = scalar_select %p354, %s351, 1
        %s356 = smul.addr %s355, 2
        %s357 = smul.addr %s353, 4
        %s358 = sadd.s32 %s356, %s357
        %s359 = smul.addr %s358, 4
        %s360 = scalar_lea.vmem %s7, %s359
        %s361 = smul.u32 8, %s23
        %s362 = smul.u32 2, %s24
        %v364 = vld [vmem:[%s335] sm:$0xff]
        %v365 = vld [vmem:[%s335 + $0x8] sm:$0xff]
        %v366 = vld [vmem:[%s335 + $0x10] sm:$0xff]
        %v367 = vld [vmem:[%s335 + $0x18] sm:$0xff]
        %v368 = vld [vmem:[%s335 + $0x20] sm:$0xff]
        %v369 = vld [vmem:[%s335 + $0x28] sm:$0xff]
        %v370 = vld [vmem:[%s335 + $0x30] sm:$0xff]
        %v371 = vld [vmem:[%s335 + $0x38] sm:$0xff]
        %v372 = vld [vmem:[%s335 + $0x40] sm:$0xff]
        %v373 = vld [vmem:[%s335 + $0x48] sm:$0xff]
        %v374 = vld [vmem:[%s335 + $0x50] sm:$0xff]
        %v375 = vld [vmem:[%s335 + $0x58] sm:$0xff]
        %v376 = vld [vmem:[%s335 + $0x60] sm:$0xff]
        %v377 = vld [vmem:[%s335 + $0x68] sm:$0xff]
        %v378 = vld [vmem:[%s335 + $0x70] sm:$0xff]
        %v379 = vld [vmem:[%s335 + $0x78] sm:$0xff]
        %380 = vadd.xlane.f32.xlu0 %v364
        %v381 = vpop.xlane.xlu0 %380
        %382 = vadd.xlane.f32.xlu0 %v365
        %v383 = vpop.xlane.xlu0 %382
        %384 = vadd.xlane.f32.xlu0 %v366
        %v385 = vpop.xlane.xlu0 %384
        %386 = vadd.xlane.f32.xlu0 %v367
        %v387 = vpop.xlane.xlu0 %386
        %388 = vadd.xlane.f32.xlu0 %v368
        %v389 = vpop.xlane.xlu0 %388
        %390 = vadd.xlane.f32.xlu0 %v369
        %v391 = vpop.xlane.xlu0 %390
        %392 = vadd.xlane.f32.xlu0 %v370
        %v393 = vpop.xlane.xlu0 %392
        %394 = vadd.xlane.f32.xlu0 %v371
        %v395 = vpop.xlane.xlu0 %394
        %396 = vadd.xlane.f32.xlu0 %v372
        %v397 = vpop.xlane.xlu0 %396
        %398 = vadd.xlane.f32.xlu0 %v373
        %v399 = vpop.xlane.xlu0 %398
        %400 = vadd.xlane.f32.xlu0 %v374
        %v401 = vpop.xlane.xlu0 %400
        %402 = vadd.xlane.f32.xlu0 %v375
        %v403 = vpop.xlane.xlu0 %402
        %404 = vadd.xlane.f32.xlu0 %v376
        %v405 = vpop.xlane.xlu0 %404
        %406 = vadd.xlane.f32.xlu0 %v377
        %v407 = vpop.xlane.xlu0 %406
        %408 = vadd.xlane.f32.xlu0 %v378
        %v409 = vpop.xlane.xlu0 %408
        %410 = vadd.xlane.f32.xlu0 %v379
        %v411 = vpop.xlane.xlu0 %410
        %v412 = vrcp.pop 128.0
        %v413 = vmul.f32 %v381, %v412
        %v414 = vmul.f32 %v383, %v412
        %v415 = vmul.f32 %v385, %v412
        %v416 = vmul.f32 %v387, %v412
        %v417 = vmul.f32 %v389, %v412
        %v418 = vmul.f32 %v391, %v412
        %v419 = vmul.f32 %v393, %v412
        %v420 = vmul.f32 %v395, %v412
        %v421 = vmul.f32 %v397, %v412
        %v422 = vmul.f32 %v399, %v412
        %v423 = vmul.f32 %v401, %v412
        %v424 = vmul.f32 %v403, %v412
        %v425 = vmul.f32 %v405, %v412
        %v426 = vmul.f32 %v407, %v412
        %v427 = vmul.f32 %v409, %v412
        %v428 = vmul.f32 %v411, %v412
        %v429 = vsub.f32 %v364, %v413
        %v430 = vsub.f32 %v365, %v414
        %v431 = vsub.f32 %v366, %v415
        %v432 = vsub.f32 %v367, %v416
        %v433 = vsub.f32 %v368, %v417
        %v434 = vsub.f32 %v369, %v418
        %v435 = vsub.f32 %v370, %v419
        %v436 = vsub.f32 %v371, %v420
        %v437 = vsub.f32 %v372, %v421
        %v438 = vsub.f32 %v373, %v422
        %v439 = vsub.f32 %v374, %v423
        %v440 = vsub.f32 %v375, %v424
        %v441 = vsub.f32 %v376, %v425
        %v442 = vsub.f32 %v377, %v426
        %v443 = vsub.f32 %v378, %v427
        %v444 = vsub.f32 %v379, %v428
        %v445 = vmul.f32 %v429, %v429
        %v446 = vmul.f32 %v430, %v430
        %v447 = vmul.f32 %v431, %v431
        %v448 = vmul.f32 %v432, %v432
        %v449 = vmul.f32 %v433, %v433
        %v450 = vmul.f32 %v434, %v434
        %v451 = vmul.f32 %v435, %v435
        %v452 = vmul.f32 %v436, %v436
        %v453 = vmul.f32 %v437, %v437
        %v454 = vmul.f32 %v438, %v438
        %v455 = vmul.f32 %v439, %v439
        %v456 = vmul.f32 %v440, %v440
        %v457 = vmul.f32 %v441, %v441
        %v458 = vmul.f32 %v442, %v442
        %v459 = vmul.f32 %v443, %v443
        %v460 = vmul.f32 %v444, %v444
        %461 = vadd.xlane.f32.xlu0 %v445
        %v462 = vpop.xlane.xlu0 %461
        %463 = vadd.xlane.f32.xlu0 %v446
        %v464 = vpop.xlane.xlu0 %463
        %465 = vadd.xlane.f32.xlu0 %v447
        %v466 = vpop.xlane.xlu0 %465
        %467 = vadd.xlane.f32.xlu0 %v448
        %v468 = vpop.xlane.xlu0 %467
        %469 = vadd.xlane.f32.xlu0 %v449
        %v470 = vpop.xlane.xlu0 %469
        %471 = vadd.xlane.f32.xlu0 %v450
        %v472 = vpop.xlane.xlu0 %471
        %473 = vadd.xlane.f32.xlu0 %v451
        %v474 = vpop.xlane.xlu0 %473
        %475 = vadd.xlane.f32.xlu0 %v452
        %v476 = vpop.xlane.xlu0 %475
        %477 = vadd.xlane.f32.xlu0 %v453
        %v478 = vpop.xlane.xlu0 %477
        %479 = vadd.xlane.f32.xlu0 %v454
        %v480 = vpop.xlane.xlu0 %479
        %481 = vadd.xlane.f32.xlu0 %v455
        %v482 = vpop.xlane.xlu0 %481
        %483 = vadd.xlane.f32.xlu0 %v456
        %v484 = vpop.xlane.xlu0 %483
        %485 = vadd.xlane.f32.xlu0 %v457
        %v486 = vpop.xlane.xlu0 %485
        %487 = vadd.xlane.f32.xlu0 %v458
        %v488 = vpop.xlane.xlu0 %487
        %489 = vadd.xlane.f32.xlu0 %v459
        %v490 = vpop.xlane.xlu0 %489
        %491 = vadd.xlane.f32.xlu0 %v460
        %v492 = vpop.xlane.xlu0 %491
        %v493 = vmul.f32 %v462, %v412
        %v494 = vmul.f32 %v464, %v412
        %v495 = vmul.f32 %v466, %v412
        %v496 = vmul.f32 %v468, %v412
        %v497 = vmul.f32 %v470, %v412
        %v498 = vmul.f32 %v472, %v412
        %v499 = vmul.f32 %v474, %v412
        %v500 = vmul.f32 %v476, %v412
        %v501 = vmul.f32 %v478, %v412
        %v502 = vmul.f32 %v480, %v412
        %v503 = vmul.f32 %v482, %v412
        %v504 = vmul.f32 %v484, %v412
        %v505 = vmul.f32 %v486, %v412
        %v506 = vmul.f32 %v488, %v412
        %v507 = vmul.f32 %v490, %v412
        %v508 = vmul.f32 %v492, %v412
        %v509 = vadd.f32 %v493, 1e-05
        %v510 = vadd.f32 %v494, 1e-05
        %v511 = vadd.f32 %v495, 1e-05
        %v512 = vadd.f32 %v496, 1e-05
        %v513 = vadd.f32 %v497, 1e-05
        %v514 = vadd.f32 %v498, 1e-05
        %v515 = vadd.f32 %v499, 1e-05
        %v516 = vadd.f32 %v500, 1e-05
        %v517 = vadd.f32 %v501, 1e-05
        %v518 = vadd.f32 %v502, 1e-05
        %v519 = vadd.f32 %v503, 1e-05
        %v520 = vadd.f32 %v504, 1e-05
        %v521 = vadd.f32 %v505, 1e-05
        %v522 = vadd.f32 %v506, 1e-05
        %v523 = vadd.f32 %v507, 1e-05
        %v524 = vadd.f32 %v508, 1e-05
        %v525 = vrsqrt.pop %v509
        %v526 = vrsqrt.pop %v510
        %v527 = vrsqrt.pop %v511
        %v528 = vrsqrt.pop %v512
        %v529 = vrsqrt.pop %v513
        %v530 = vrsqrt.pop %v514
        %v531 = vrsqrt.pop %v515
        %v532 = vrsqrt.pop %v516
        %v533 = vrsqrt.pop %v517
        %v534 = vrsqrt.pop %v518
        %v535 = vrsqrt.pop %v519
        %v536 = vrsqrt.pop %v520
        %v537 = vrsqrt.pop %v521
        %v538 = vrsqrt.pop %v522
        %v539 = vrsqrt.pop %v523
        %v540 = vrsqrt.pop %v524
        %v541 = vmul.f32 %v429, %v525
        %v542 = vmul.f32 %v430, %v526
        %v543 = vmul.f32 %v431, %v527
        %v544 = vmul.f32 %v432, %v528
        %v545 = vmul.f32 %v433, %v529
        %v546 = vmul.f32 %v434, %v530
        %v547 = vmul.f32 %v435, %v531
        %v548 = vmul.f32 %v436, %v532
        %v549 = vmul.f32 %v437, %v533
        %v550 = vmul.f32 %v438, %v534
        %v551 = vmul.f32 %v439, %v535
        %v552 = vmul.f32 %v440, %v536
        %v553 = vmul.f32 %v441, %v537
        %v554 = vmul.f32 %v442, %v538
        %v555 = vmul.f32 %v443, %v539
        %v556 = vmul.f32 %v444, %v540
        %v557 = vld [vmem:[%s1] sm:$0x1]
        %v559 = vlaneseq
        %v560 = vshrl.u32 %v559, 7
        %v561 = vsub.s32 0, %v560
        %v562 = vrot.slane %v557, %v561
        %v564 = vmul.f32 %v541, %v562
        %v565 = vmul.f32 %v542, %v562
        %v566 = vmul.f32 %v543, %v562
        %v567 = vmul.f32 %v544, %v562
        %v568 = vmul.f32 %v545, %v562
        %v569 = vmul.f32 %v546, %v562
        %v570 = vmul.f32 %v547, %v562
        %v571 = vmul.f32 %v548, %v562
        %v572 = vmul.f32 %v549, %v562
        %v573 = vmul.f32 %v550, %v562
        %v574 = vmul.f32 %v551, %v562
        %v575 = vmul.f32 %v552, %v562
        %v576 = vmul.f32 %v553, %v562
        %v577 = vmul.f32 %v554, %v562
        %v578 = vmul.f32 %v555, %v562
        %v579 = vmul.f32 %v556, %v562
        %v580 = vld [vmem:[%s2] sm:$0x1]
        %v582 = vlaneseq
        %v583 = vshrl.u32 %v582, 7
        %v584 = vsub.s32 0, %v583
        %v585 = vrot.slane %v580, %v584
        %v587 = vadd.f32 %v564, %v585
        %v588 = vadd.f32 %v565, %v585
        %v589 = vadd.f32 %v566, %v585
        %v590 = vadd.f32 %v567, %v585
        %v591 = vadd.f32 %v568, %v585
        %v592 = vadd.f32 %v569, %v585
        %v593 = vadd.f32 %v570, %v585
        %v594 = vadd.f32 %v571, %v585
        %v595 = vadd.f32 %v572, %v585
        %v596 = vadd.f32 %v573, %v585
        %v597 = vadd.f32 %v574, %v585
        %v598 = vadd.f32 %v575, %v585
        %v599 = vadd.f32 %v576, %v585
        %v600 = vadd.f32 %v577, %v585
        %v601 = vadd.f32 %v578, %v585
        %v602 = vadd.f32 %v579, %v585
        %v603 = vpack.c.bf16 %v588, %v587
        %v604 = vpack.c.bf16 %v590, %v589
        %v605 = vpack.c.bf16 %v592, %v591
        %v606 = vpack.c.bf16 %v594, %v593
        %v607 = vpack.c.bf16 %v596, %v595
        %v608 = vpack.c.bf16 %v598, %v597
        %v609 = vpack.c.bf16 %v600, %v599
        %v610 = vpack.c.bf16 %v602, %v601
        %v619 = vunpack.c.l.b16 %v603
        %v620 = vunpack.c.h.b16 %v603
        %v621 = vunpack.c.l.b16 %v604
        %v622 = vunpack.c.h.b16 %v604
        %v623 = vunpack.c.l.b16 %v605
        %v624 = vunpack.c.h.b16 %v605
        %v625 = vunpack.c.l.b16 %v606
        %v626 = vunpack.c.h.b16 %v606
        %v627 = vunpack.c.l.b16 %v607
        %v628 = vunpack.c.h.b16 %v607
        %v629 = vunpack.c.l.b16 %v608
        %v630 = vunpack.c.h.b16 %v608
        %v631 = vunpack.c.l.b16 %v609
        %v632 = vunpack.c.h.b16 %v609
        %v633 = vunpack.c.l.b16 %v610
        %v634 = vunpack.c.h.b16 %v610
        %v635 = vpack.c.b16 %v619, %v619
        %v636 = vpack.c.b16 %v620, %v620
        %v637 = vpack.c.b16 %v621, %v621
        %v638 = vpack.c.b16 %v622, %v622
        %v639 = vpack.c.b16 %v623, %v623
        %v640 = vpack.c.b16 %v624, %v624
        %v641 = vpack.c.b16 %v625, %v625
        %v642 = vpack.c.b16 %v626, %v626
        %v643 = vpack.c.b16 %v627, %v627
        %v644 = vpack.c.b16 %v628, %v628
        %v645 = vpack.c.b16 %v629, %v629
        %v646 = vpack.c.b16 %v630, %v630
        %v647 = vpack.c.b16 %v631, %v631
        %v648 = vpack.c.b16 %v632, %v632
        %v649 = vpack.c.b16 %v633, %v633
        %v650 = vpack.c.b16 %v634, %v634
        %667 = vst [vmem:[%s347] sm:$0xf] %v635
        %668 = vst [vmem:[%s347 + $0x4] sm:$0xf] %v636
        %669 = vst [vmem:[%s347 + $0x8] sm:$0xf] %v637
        %670 = vst [vmem:[%s347 + $0xc] sm:$0xf] %v638
        %671 = vst [vmem:[%s347 + $0x10] sm:$0xf] %v639
        %672 = vst [vmem:[%s347 + $0x14] sm:$0xf] %v640
        %673 = vst [vmem:[%s347 + $0x18] sm:$0xf] %v641
        %674 = vst [vmem:[%s347 + $0x1c] sm:$0xf] %v642
        %675 = vst [vmem:[%s347 + $0x20] sm:$0xf] %v643
        %676 = vst [vmem:[%s347 + $0x24] sm:$0xf] %v644
        %677 = vst [vmem:[%s347 + $0x28] sm:$0xf] %v645
        %678 = vst [vmem:[%s347 + $0x2c] sm:$0xf] %v646
        %679 = vst [vmem:[%s347 + $0x30] sm:$0xf] %v647
        %680 = vst [vmem:[%s347 + $0x34] sm:$0xf] %v648
        %681 = vst [vmem:[%s347 + $0x38] sm:$0xf] %v649
        %682 = vst [vmem:[%s347 + $0x3c] sm:$0xf] %v650
        %v683 = vld [vmem:[%s4] sm:$0xff]
        %v684 = vld [vmem:[%s4 + $0x8] sm:$0xff]
        %v685 = vld [vmem:[%s4 + $0x10] sm:$0xff]
        %v686 = vld [vmem:[%s4 + $0x18] sm:$0xff]
        %v687 = vld [vmem:[%s4 + $0x20] sm:$0xff]
        %v688 = vld [vmem:[%s4 + $0x28] sm:$0xff]
        %v689 = vld [vmem:[%s4 + $0x30] sm:$0xff]
        %v690 = vld [vmem:[%s4 + $0x38] sm:$0xff]
        %v691 = vld [vmem:[%s4 + $0x40] sm:$0xff]
        %v692 = vld [vmem:[%s4 + $0x48] sm:$0xff]
        %v693 = vld [vmem:[%s4 + $0x50] sm:$0xff]
        %v694 = vld [vmem:[%s4 + $0x58] sm:$0xff]
        %v695 = vld [vmem:[%s4 + $0x60] sm:$0xff]
        %v696 = vld [vmem:[%s4 + $0x68] sm:$0xff]
        %v697 = vld [vmem:[%s4 + $0x70] sm:$0xff]
        %v698 = vld [vmem:[%s4 + $0x78] sm:$0xff]
        %v715 = vunpack.c.l.b16 %v683
        %v716 = vunpack.c.h.b16 %v683
        %v717 = vunpack.c.l.b16 %v684
        %v718 = vunpack.c.h.b16 %v684
        %v719 = vunpack.c.l.b16 %v685
        %v720 = vunpack.c.h.b16 %v685
        %v721 = vunpack.c.l.b16 %v686
        %v722 = vunpack.c.h.b16 %v686
        %v723 = vunpack.c.l.b16 %v687
        %v724 = vunpack.c.h.b16 %v687
        %v725 = vunpack.c.l.b16 %v688
        %v726 = vunpack.c.h.b16 %v688
        %v727 = vunpack.c.l.b16 %v689
        %v728 = vunpack.c.h.b16 %v689
        %v729 = vunpack.c.l.b16 %v690
        %v730 = vunpack.c.h.b16 %v690
        %v731 = vunpack.c.l.b16 %v691
        %v732 = vunpack.c.h.b16 %v691
        %v733 = vunpack.c.l.b16 %v692
        %v734 = vunpack.c.h.b16 %v692
        %v735 = vunpack.c.l.b16 %v693
        %v736 = vunpack.c.h.b16 %v693
        %v737 = vunpack.c.l.b16 %v694
        %v738 = vunpack.c.h.b16 %v694
        %v739 = vunpack.c.l.b16 %v695
        %v740 = vunpack.c.h.b16 %v695
        %v741 = vunpack.c.l.b16 %v696
        %v742 = vunpack.c.h.b16 %v696
        %v743 = vunpack.c.l.b16 %v697
        %v744 = vunpack.c.h.b16 %v697
        %v745 = vunpack.c.l.b16 %v698
        %v746 = vunpack.c.h.b16 %v698
        %v747 = vpack.c.b16 %v717, %v715
        %v748 = vpack.c.b16 %v718, %v716
        %v749 = vpack.c.b16 %v721, %v719
        %v750 = vpack.c.b16 %v722, %v720
        %v751 = vpack.c.b16 %v725, %v723
        %v752 = vpack.c.b16 %v726, %v724
        %v753 = vpack.c.b16 %v729, %v727
        %v754 = vpack.c.b16 %v730, %v728
        %v755 = vpack.c.b16 %v733, %v731
        %v756 = vpack.c.b16 %v734, %v732
        %v757 = vpack.c.b16 %v737, %v735
        %v758 = vpack.c.b16 %v738, %v736
        %v759 = vpack.c.b16 %v741, %v739
        %v760 = vpack.c.b16 %v742, %v740
        %v761 = vpack.c.b16 %v745, %v743
        %v762 = vpack.c.b16 %v746, %v744
        %779 = vmatprep.subr.bf16.mxu0 %v748
        %780 = vmatpush1.bf16.msra.mxu0 %v747
        %781 = vmatprep.subr.bf16.mxu0 %v750
        %782 = vmatpush1.bf16.msra.mxu0 %v749
        %783 = vmatprep.subr.bf16.mxu0 %v752
        %784 = vmatpush1.bf16.msra.mxu0 %v751
        %785 = vmatprep.subr.bf16.mxu0 %v754
        %786 = vmatpush1.bf16.msra.mxu0 %v753
        %787 = vmatprep.subr.bf16.mxu0 %v756
        %788 = vmatpush1.bf16.msra.mxu0 %v755
        %789 = vmatprep.subr.bf16.mxu0 %v758
        %790 = vmatpush1.bf16.msra.mxu0 %v757
        %791 = vmatprep.subr.bf16.mxu0 %v760
        %792 = vmatpush1.bf16.msra.mxu0 %v759
        %793 = vmatprep.subr.bf16.mxu0 %v762
        %794 = vmatpush1.bf16.msra.mxu0 %v761
        %795 = vmatprep.subr.bf16.mxu0 0
        %796 = vmatpush1.bf16.msra.mxu0 0
        %797 = vmatprep.subr.bf16.mxu0 0
        %798 = vmatpush1.bf16.msra.mxu0 0
        %799 = vmatprep.subr.bf16.mxu0 0
        %800 = vmatpush1.bf16.msra.mxu0 0
        %801 = vmatprep.subr.bf16.mxu0 0
        %802 = vmatpush1.bf16.msra.mxu0 0
        %803 = vmatprep.subr.bf16.mxu0 0
        %804 = vmatpush1.bf16.msra.mxu0 0
        %805 = vmatprep.subr.bf16.mxu0 0
        %806 = vmatpush1.bf16.msra.mxu0 0
        %807 = vmatprep.subr.bf16.mxu0 0
        %808 = vmatpush1.bf16.msra.mxu0 0
        %809 = vmatprep.subr.bf16.mxu0 0
        %810 = vmatpush1.bf16.msra.mxu0 0
        %811 = vmatprep.mubr.bf16.mxu0 0
        %812 = vmatmul.mubr.bf16.gmra.mrb[0].mxu0 %v603
        %v813 = vpop.f32.mrb[0].mxu0
        %v814 = vadd.f32 0.0, %v813
        %v815 = vpop.f32.mrb[0].mxu0
        %v816 = vadd.f32 0.0, %v815
        %v817 = vpop.f32.mrb[0].mxu0
        %v818 = vadd.f32 0.0, %v817
        %v819 = vpop.f32.mrb[0].mxu0
        %v820 = vadd.f32 0.0, %v819
        %821 = vmatprep.mubr.bf16.mxu0 0
        %822 = vmatmul.mubr.bf16.gmra.mrb[0].mxu0 %v604
        %v823 = vpop.f32.mrb[0].mxu0
        %v824 = vadd.f32 0.0, %v823
        %v825 = vpop.f32.mrb[0].mxu0
        %v826 = vadd.f32 0.0, %v825
        %v827 = vpop.f32.mrb[0].mxu0
        %v828 = vadd.f32 0.0, %v827
        %v829 = vpop.f32.mrb[0].mxu0
        %v830 = vadd.f32 0.0, %v829
        %831 = vmatprep.mubr.bf16.mxu0 0
        %832 = vmatmul.mubr.bf16.gmra.mrb[0].mxu0 %v605
        %v833 = vpop.f32.mrb[0].mxu0
        %v834 = vadd.f32 0.0, %v833
        %v835 = vpop.f32.mrb[0].mxu0
        %v836 = vadd.f32 0.0, %v835
        %v837 = vpop.f32.mrb[0].mxu0
        %v838 = vadd.f32 0.0, %v837
        %v839 = vpop.f32.mrb[0].mxu0
        %v840 = vadd.f32 0.0, %v839
        %841 = vmatprep.mubr.bf16.mxu0 0
        %842 = vmatmul.mubr.bf16.gmra.mrb[0].mxu0 %v606
        %v843 = vpop.f32.mrb[0].mxu0
        %v844 = vadd.f32 0.0, %v843
        %v845 = vpop.f32.mrb[0].mxu0
        %v846 = vadd.f32 0.0, %v845
        %v847 = vpop.f32.mrb[0].mxu0
        %v848 = vadd.f32 0.0, %v847
        %v849 = vpop.f32.mrb[0].mxu0
        %v850 = vadd.f32 0.0, %v849
        %851 = vmatprep.mubr.bf16.mxu0 0
        %852 = vmatmul.mubr.bf16.gmra.mrb[0].mxu0 %v607
        %v853 = vpop.f32.mrb[0].mxu0
        %v854 = vadd.f32 0.0, %v853
        %v855 = vpop.f32.mrb[0].mxu0
        %v856 = vadd.f32 0.0, %v855
        %v857 = vpop.f32.mrb[0].mxu0
        %v858 = vadd.f32 0.0, %v857
        %v859 = vpop.f32.mrb[0].mxu0
        %v860 = vadd.f32 0.0, %v859
        %861 = vmatprep.mubr.bf16.mxu0 0
        %862 = vmatmul.mubr.bf16.gmra.mrb[0].mxu0 %v608
        %v863 = vpop.f32.mrb[0].mxu0
        %v864 = vadd.f32 0.0, %v863
        %v865 = vpop.f32.mrb[0].mxu0
        %v866 = vadd.f32 0.0, %v865
        %v867 = vpop.f32.mrb[0].mxu0
        %v868 = vadd.f32 0.0, %v867
        %v869 = vpop.f32.mrb[0].mxu0
        %v870 = vadd.f32 0.0, %v869
        %871 = vmatprep.mubr.bf16.mxu0 0
        %872 = vmatmul.mubr.bf16.gmra.mrb[0].mxu0 %v609
        %v873 = vpop.f32.mrb[0].mxu0
        %v874 = vadd.f32 0.0, %v873
        %v875 = vpop.f32.mrb[0].mxu0
        %v876 = vadd.f32 0.0, %v875
        %v877 = vpop.f32.mrb[0].mxu0
        %v878 = vadd.f32 0.0, %v877
        %v879 = vpop.f32.mrb[0].mxu0
        %v880 = vadd.f32 0.0, %v879
        %881 = vmatprep.mubr.bf16.mxu0 0
        %882 = vmatmul.mubr.bf16.gmra.mrb[0].mxu0 %v610
        %v883 = vpop.f32.mrb[0].mxu0
        %v884 = vadd.f32 0.0, %v883
        %v885 = vpop.f32.mrb[0].mxu0
        %v886 = vadd.f32 0.0, %v885
        %v887 = vpop.f32.mrb[0].mxu0
        %v888 = vadd.f32 0.0, %v887
        %v889 = vpop.f32.mrb[0].mxu0
        %v890 = vadd.f32 0.0, %v889
        %891 = vdwg.mxu0
        %v892 = vpack.c.bf16 %v818, %v814
        %v893 = vpack.c.bf16 %v820, %v816
        %v894 = vpack.c.bf16 %v828, %v824
        %v895 = vpack.c.bf16 %v830, %v826
        %v896 = vpack.c.bf16 %v838, %v834
        %v897 = vpack.c.bf16 %v840, %v836
        %v898 = vpack.c.bf16 %v848, %v844
        %v899 = vpack.c.bf16 %v850, %v846
        %v900 = vpack.c.bf16 %v858, %v854
        %v901 = vpack.c.bf16 %v860, %v856
        %v902 = vpack.c.bf16 %v868, %v864
        %v903 = vpack.c.bf16 %v870, %v866
        %v904 = vpack.c.bf16 %v878, %v874
        %v905 = vpack.c.bf16 %v880, %v876
        %v906 = vpack.c.bf16 %v888, %v884
        %v907 = vpack.c.bf16 %v890, %v886
        %v924 = vunpack.c.l.b16 %v892
        %v925 = vunpack.c.l.b16 %v893
        %v926 = vunpack.c.h.b16 %v892
        %v927 = vunpack.c.h.b16 %v893
        %v928 = vunpack.c.l.b16 %v894
        %v929 = vunpack.c.l.b16 %v895
        %v930 = vunpack.c.h.b16 %v894
        %v931 = vunpack.c.h.b16 %v895
        %v932 = vunpack.c.l.b16 %v896
        %v933 = vunpack.c.l.b16 %v897
        %v934 = vunpack.c.h.b16 %v896
        %v935 = vunpack.c.h.b16 %v897
        %v936 = vunpack.c.l.b16 %v898
        %v937 = vunpack.c.l.b16 %v899
        %v938 = vunpack.c.h.b16 %v898
        %v939 = vunpack.c.h.b16 %v899
        %v940 = vunpack.c.l.b16 %v900
        %v941 = vunpack.c.l.b16 %v901
        %v942 = vunpack.c.h.b16 %v900
        %v943 = vunpack.c.h.b16 %v901
        %v944 = vunpack.c.l.b16 %v902
        %v945 = vunpack.c.l.b16 %v903
        %v946 = vunpack.c.h.b16 %v902
        %v947 = vunpack.c.h.b16 %v903
        %v948 = vunpack.c.l.b16 %v904
        %v949 = vunpack.c.l.b16 %v905
        %v950 = vunpack.c.h.b16 %v904
        %v951 = vunpack.c.h.b16 %v905
        %v952 = vunpack.c.l.b16 %v906
        %v953 = vunpack.c.l.b16 %v907
        %v954 = vunpack.c.h.b16 %v906
        %v955 = vunpack.c.h.b16 %v907
        %v956 = vpack.c.b16 %v925, %v924
        %v957 = vpack.c.b16 %v927, %v926
        %v958 = vpack.c.b16 %v929, %v928
        %v959 = vpack.c.b16 %v931, %v930
        %v960 = vpack.c.b16 %v933, %v932
        %v961 = vpack.c.b16 %v935, %v934
        %v962 = vpack.c.b16 %v937, %v936
        %v963 = vpack.c.b16 %v939, %v938
        %v964 = vpack.c.b16 %v941, %v940
        %v965 = vpack.c.b16 %v943, %v942
        %v966 = vpack.c.b16 %v945, %v944
        %v967 = vpack.c.b16 %v947, %v946
        %v968 = vpack.c.b16 %v949, %v948
        %v969 = vpack.c.b16 %v951, %v950
        %v970 = vpack.c.b16 %v953, %v952
        %v971 = vpack.c.b16 %v955, %v954
        %988 = vst [vmem:[%s360] sm:$0xff] %v956
        %989 = vst [vmem:[%s360 + $0x8] sm:$0xff] %v957
        %990 = vst [vmem:[%s360 + $0x10] sm:$0xff] %v958
        %991 = vst [vmem:[%s360 + $0x18] sm:$0xff] %v959
        %992 = vst [vmem:[%s360 + $0x20] sm:$0xff] %v960
        %993 = vst [vmem:[%s360 + $0x28] sm:$0xff] %v961
        %994 = vst [vmem:[%s360 + $0x30] sm:$0xff] %v962
        %995 = vst [vmem:[%s360 + $0x38] sm:$0xff] %v963
        %996 = vst [vmem:[%s360 + $0x40] sm:$0xff] %v964
        %997 = vst [vmem:[%s360 + $0x48] sm:$0xff] %v965
        %998 = vst [vmem:[%s360 + $0x50] sm:$0xff] %v966
        %999 = vst [vmem:[%s360 + $0x58] sm:$0xff] %v967
        %1000 = vst [vmem:[%s360 + $0x60] sm:$0xff] %v968
        %1001 = vst [vmem:[%s360 + $0x68] sm:$0xff] %v969
        %1002 = vst [vmem:[%s360 + $0x70] sm:$0xff] %v970
        %1003 = vst [vmem:[%s360 + $0x78] sm:$0xff] %v971
        %v1004 = vld [vmem:[%s3] sm:$0x3]
        %1005 = vmatprep.subr.bf16.mxu0 0
        %1006 = vmatpush1.bf16.xpose.msra.mxu0 %v603
        %1007 = vmatprep.subr.bf16.mxu0 0
        %1008 = vmatpush1.bf16.xpose.msra.mxu0 0
        %1009 = vmatprep.subr.bf16.mxu0 0
        %1010 = vmatpush1.bf16.xpose.msra.mxu0 0
        %1011 = vmatprep.subr.bf16.mxu0 0
        %1012 = vmatpush1.bf16.xpose.msra.mxu0 0
        %1013 = vmatprep.subr.bf16.mxu0 0
        %1014 = vmatpush1.bf16.xpose.msra.mxu0 0
        %1015 = vmatprep.subr.bf16.mxu0 0
        %1016 = vmatpush1.bf16.xpose.msra.mxu0 0
        %1017 = vmatprep.subr.bf16.mxu0 0
        %1018 = vmatpush1.bf16.xpose.msra.mxu0 0
        %1019 = vmatprep.subr.bf16.mxu0 0
        %1020 = vmatpush1.bf16.xpose.msra.mxu0 0
        %1021 = vmatprep.subr.bf16.mxu0 0
        %1022 = vmatpush1.bf16.xpose.msra.mxu0 0
        %1023 = vmatprep.subr.bf16.mxu0 0
        %1024 = vmatpush1.bf16.xpose.msra.mxu0 0
        %1025 = vmatprep.subr.bf16.mxu0 0
        %1026 = vmatpush1.bf16.xpose.msra.mxu0 0
        %1027 = vmatprep.subr.bf16.mxu0 0
        %1028 = vmatpush1.bf16.xpose.msra.mxu0 0
        %1029 = vmatprep.subr.bf16.mxu0 0
        %1030 = vmatpush1.bf16.xpose.msra.mxu0 0
        %1031 = vmatprep.subr.bf16.mxu0 0
        %1032 = vmatpush1.bf16.xpose.msra.mxu0 0
        %1033 = vmatprep.subr.bf16.mxu0 0
        %1034 = vmatpush1.bf16.xpose.msra.mxu0 0
        %1035 = vmatprep.subr.bf16.mxu0 0
        %1036 = vmatpush1.bf16.xpose.msra.mxu0 0
        %1037 = vmatprep.mubr.bf16.mxu0 0
        %1038 = vmatmul.mubr.bf16.gmra.mrb[0].mxu0 %v1004
        %v1039 = vpop.f32.mrb[0].mxu0
        %v1040 = vadd.f32 0.0, %v1039
        %v1041 = vpop.f32.mrb[0].mxu0
        %v1042 = vpop.f32.mrb[0].mxu0
        %v1043 = vpop.f32.mrb[0].mxu0
        %1044 = vdwg.mxu0
        %v1045 = vpack.c.bf16 %v1040, %v1040
        %v1048 = vunpack.c.l.s4 1966171168
        %v1049 = vunpack.c.0.s8 %v1048
        %v1050 = vlaneseq
        %v1051 = vshrl.u32 %v1050, 7
        %v1052 = vsub.s32 %v1049, %v1051
        %v1053 = vrot.slane %v1045, %v1052
        %v1054 = vcombine.high %v1053, %v1053
        %v1056 = vunpack.c.l.s4 1966171168
        %v1057 = vunpack.c.0.s8 %v1056
        %v1058 = vlaneseq
        %v1059 = vshrl.u32 %v1058, 7
        %v1060 = vsub.s32 %v1057, %v1059
        %v1061 = vrot.slane %v1053, %v1060
        %v1063 = vunpack.c.l.s4 1966171168
        %v1064 = vunpack.c.0.s8 %v1063
        %v1065 = vlaneseq
        %v1066 = vshrl.u32 %v1065, 7
        %v1067 = vsub.s32 %v1064, %v1066
        %v1068 = vrot.slane %v1054, %v1067
        %v1069 = vunpack.i.l.s16 %v1061
        %v1070 = vunpack.i.h.s16 %v1061
        %v1071 = vunpack.i.l.s16 %v1068
        %v1072 = vunpack.i.h.s16 %v1068
        %v1073 = vpack.i.b16 %v1069, %v1069
        %v1074 = vpack.i.b16 %v1070, %v1070
        %v1075 = vpack.i.b16 %v1071, %v1071
        %v1076 = vpack.i.b16 %v1072, %v1072
        %v1078 = vunpack.c.l.s4 286326784
        %v1079 = vunpack.c.0.s8 %v1078
        %v1080 = vlaneseq
        %v1081 = vshrl.u32 %v1080, 7
        %v1082 = vsub.s32 %v1079, %v1081
        %v1083 = vrot.slane %v1073, %v1082
        %v1085 = vunpack.c.l.s4 286326784
        %v1086 = vunpack.c.0.s8 %v1085
        %v1087 = vlaneseq
        %v1088 = vshrl.u32 %v1087, 7
        %v1089 = vsub.s32 %v1086, %v1088
        %v1090 = vrot.slane %v1074, %v1089
        %v1092 = vunpack.c.l.s4 286326784
        %v1093 = vunpack.c.0.s8 %v1092
        %v1094 = vlaneseq
        %v1095 = vshrl.u32 %v1094, 7
        %v1096 = vsub.s32 %v1093, %v1095
        %v1097 = vrot.slane %v1075, %v1096
        %v1099 = vunpack.c.l.s4 286326784
        %v1100 = vunpack.c.0.s8 %v1099
        %v1101 = vlaneseq
        %v1102 = vshrl.u32 %v1101, 7
        %v1103 = vsub.s32 %v1100, %v1102
        %v1104 = vrot.slane %v1076, %v1103
        %vm1109 = vcmask 122880
        %vm1110 = vsmask.f32 256
        %vm1111 = vmand %vm1109, %vm1110
        %v1112 = vld [vmem:[%s312] sm:$0x1]
        %v1113 = vsel %vm1111, %v1083, %v1112
        %1114 = vst [vmem:[%s312] sm:$0x1] %v1113
        %v1115 = vld [vmem:[%s312 + $0x4] sm:$0x1]
        %v1116 = vsel %vm1111, %v1090, %v1115
        %1117 = vst [vmem:[%s312 + $0x4] sm:$0x1] %v1116
        %v1118 = vld [vmem:[%s312 + $0x8] sm:$0x1]
        %v1119 = vsel %vm1111, %v1097, %v1118
        %1120 = vst [vmem:[%s312 + $0x8] sm:$0x1] %v1119
        %v1121 = vld [vmem:[%s312 + $0xc] sm:$0x1]
        %v1122 = vsel %vm1111, %v1104, %v1121
        %1123 = vst [vmem:[%s312 + $0xc] sm:$0x1] %v1122
        %v1124 = vld [vmem:[%s3] sm:$0x3]
        %1125 = vmatprep.subr.bf16.mxu0 0
        %1126 = vmatpush1.bf16.xpose.msra.mxu0 %v604
        %1127 = vmatprep.subr.bf16.mxu0 0
        %1128 = vmatpush1.bf16.xpose.msra.mxu0 0
        %1129 = vmatprep.subr.bf16.mxu0 0
        %1130 = vmatpush1.bf16.xpose.msra.mxu0 0
        %1131 = vmatprep.subr.bf16.mxu0 0
        %1132 = vmatpush1.bf16.xpose.msra.mxu0 0
        %1133 = vmatprep.subr.bf16.mxu0 0
        %1134 = vmatpush1.bf16.xpose.msra.mxu0 0
        %1135 = vmatprep.subr.bf16.mxu0 0
        %1136 = vmatpush1.bf16.xpose.msra.mxu0 0
        %1137 = vmatprep.subr.bf16.mxu0 0
        %1138 = vmatpush1.bf16.xpose.msra.mxu0 0
        %1139 = vmatprep.subr.bf16.mxu0 0
        %1140 = vmatpush1.bf16.xpose.msra.mxu0 0
        %1141 = vmatprep.subr.bf16.mxu0 0
        %1142 = vmatpush1.bf16.xpose.msra.mxu0 0
        %1143 = vmatprep.subr.bf16.mxu0 0
        %1144 = vmatpush1.bf16.xpose.msra.mxu0 0
        %1145 = vmatprep.subr.bf16.mxu0 0
        %1146 = vmatpush1.bf16.xpose.msra.mxu0 0
        %1147 = vmatprep.subr.bf16.mxu0 0
        %1148 = vmatpush1.bf16.xpose.msra.mxu0 0
        %1149 = vmatprep.subr.bf16.mxu0 0
        %1150 = vmatpush1.bf16.xpose.msra.mxu0 0
        %1151 = vmatprep.subr.bf16.mxu0 0
        %1152 = vmatpush1.bf16.xpose.msra.mxu0 0
        %1153 = vmatprep.subr.bf16.mxu0 0
        %1154 = vmatpush1.bf16.xpose.msra.mxu0 0
        %1155 = vmatprep.subr.bf16.mxu0 0
        %1156 = vmatpush1.bf16.xpose.msra.mxu0 0
        %1157 = vmatprep.mubr.bf16.mxu0 0
        %1158 = vmatmul.mubr.bf16.gmra.mrb[0].mxu0 %v1124
        %v1159 = vpop.f32.mrb[0].mxu0
        %v1160 = vadd.f32 0.0, %v1159
        %v1161 = vpop.f32.mrb[0].mxu0
        %v1162 = vpop.f32.mrb[0].mxu0
        %v1163 = vpop.f32.mrb[0].mxu0
        %1164 = vdwg.mxu0
        %v1165 = vpack.c.bf16 %v1160, %v1160
        %v1168 = vunpack.c.l.s4 1966171168
        %v1169 = vunpack.c.0.s8 %v1168
        %v1170 = vlaneseq
        %v1171 = vshrl.u32 %v1170, 7
        %v1172 = vsub.s32 %v1169, %v1171
        %v1173 = vrot.slane %v1165, %v1172
        %v1174 = vcombine.high %v1173, %v1173
        %v1176 = vunpack.c.l.s4 1966171168
        %v1177 = vunpack.c.0.s8 %v1176
        %v1178 = vlaneseq
        %v1179 = vshrl.u32 %v1178, 7
        %v1180 = vsub.s32 %v1177, %v1179
        %v1181 = vrot.slane %v1173, %v1180
        %v1183 = vunpack.c.l.s4 1966171168
        %v1184 = vunpack.c.0.s8 %v1183
        %v1185 = vlaneseq
        %v1186 = vshrl.u32 %v1185, 7
        %v1187 = vsub.s32 %v1184, %v1186
        %v1188 = vrot.slane %v1174, %v1187
        %v1189 = vunpack.i.l.s16 %v1181
        %v1190 = vunpack.i.h.s16 %v1181
        %v1191 = vunpack.i.l.s16 %v1188
        %v1192 = vunpack.i.h.s16 %v1188
        %v1193 = vpack.i.b16 %v1189, %v1189
        %v1194 = vpack.i.b16 %v1190, %v1190
        %v1195 = vpack.i.b16 %v1191, %v1191
        %v1196 = vpack.i.b16 %v1192, %v1192
        %v1198 = vunpack.c.l.s4 286326784
        %v1199 = vunpack.c.0.s8 %v1198
        %v1200 = vlaneseq
        %v1201 = vshrl.u32 %v1200, 7
        %v1202 = vsub.s32 %v1199, %v1201
        %v1203 = vrot.slane %v1193, %v1202
        %v1205 = vunpack.c.l.s4 286326784
        %v1206 = vunpack.c.0.s8 %v1205
        %v1207 = vlaneseq
        %v1208 = vshrl.u32 %v1207, 7
        %v1209 = vsub.s32 %v1206, %v1208
        %v1210 = vrot.slane %v1194, %v1209
        %v1212 = vunpack.c.l.s4 286326784
        %v1213 = vunpack.c.0.s8 %v1212
        %v1214 = vlaneseq
        %v1215 = vshrl.u32 %v1214, 7
        %v1216 = vsub.s32 %v1213, %v1215
        %v1217 = vrot.slane %v1195, %v1216
        %v1219 = vunpack.c.l.s4 286326784
        %v1220 = vunpack.c.0.s8 %v1219
        %v1221 = vlaneseq
        %v1222 = vshrl.u32 %v1221, 7
        %v1223 = vsub.s32 %v1220, %v1222
        %v1224 = vrot.slane %v1196, %v1223
        %vm1229 = vsmask.f32 7938
        %vm1230 = vmand %vm1109, %vm1229
        %v1231 = vld [vmem:[%s312] sm:$0x1]
        %v1232 = vsel %vm1230, %v1203, %v1231
        %1233 = vst [vmem:[%s312] sm:$0x1] %v1232
        %v1234 = vld [vmem:[%s312 + $0x4] sm:$0x1]
        %v1235 = vsel %vm1230, %v1210, %v1234
        %1236 = vst [vmem:[%s312 + $0x4] sm:$0x1] %v1235
        %v1237 = vld [vmem:[%s312 + $0x8] sm:$0x1]
        %v1238 = vsel %vm1230, %v1217, %v1237
        %1239 = vst [vmem:[%s312 + $0x8] sm:$0x1] %v1238
        %v1240 = vld [vmem:[%s312 + $0xc] sm:$0x1]
        %v1241 = vsel %vm1230, %v1224, %v1240
        %1242 = vst [vmem:[%s312 + $0xc] sm:$0x1] %v1241
        %v1243 = vld [vmem:[%s3] sm:$0x3]
        %1244 = vmatprep.subr.bf16.mxu0 0
        %1245 = vmatpush1.bf16.xpose.msra.mxu0 %v605
        %1246 = vmatprep.subr.bf16.mxu0 0
        %1247 = vmatpush1.bf16.xpose.msra.mxu0 0
        %1248 = vmatprep.subr.bf16.mxu0 0
        %1249 = vmatpush1.bf16.xpose.msra.mxu0 0
        %1250 = vmatprep.subr.bf16.mxu0 0
        %1251 = vmatpush1.bf16.xpose.msra.mxu0 0
        %1252 = vmatprep.subr.bf16.mxu0 0
        %1253 = vmatpush1.bf16.xpose.msra.mxu0 0
        %1254 = vmatprep.subr.bf16.mxu0 0
        %1255 = vmatpush1.bf16.xpose.msra.mxu0 0
        %1256 = vmatprep.subr.bf16.mxu0 0
        %1257 = vmatpush1.bf16.xpose.msra.mxu0 0
        %1258 = vmatprep.subr.bf16.mxu0 0
        %1259 = vmatpush1.bf16.xpose.msra.mxu0 0
        %1260 = vmatprep.subr.bf16.mxu0 0
        %1261 = vmatpush1.bf16.xpose.msra.mxu0 0
        %1262 = vmatprep.subr.bf16.mxu0 0
        %1263 = vmatpush1.bf16.xpose.msra.mxu0 0
        %1264 = vmatprep.subr.bf16.mxu0 0
        %1265 = vmatpush1.bf16.xpose.msra.mxu0 0
        %1266 = vmatprep.subr.bf16.mxu0 0
        %1267 = vmatpush1.bf16.xpose.msra.mxu0 0
        %1268 = vmatprep.subr.bf16.mxu0 0
        %1269 = vmatpush1.bf16.xpose.msra.mxu0 0
        %1270 = vmatprep.subr.bf16.mxu0 0
        %1271 = vmatpush1.bf16.xpose.msra.mxu0 0
        %1272 = vmatprep.subr.bf16.mxu0 0
        %1273 = vmatpush1.bf16.xpose.msra.mxu0 0
        %1274 = vmatprep.subr.bf16.mxu0 0
        %1275 = vmatpush1.bf16.xpose.msra.mxu0 0
        %1276 = vmatprep.mubr.bf16.mxu0 0
        %1277 = vmatmul.mubr.bf16.gmra.mrb[0].mxu0 %v1243
        %v1278 = vpop.f32.mrb[0].mxu0
        %v1279 = vadd.f32 0.0, %v1278
        %v1280 = vpop.f32.mrb[0].mxu0
        %v1281 = vpop.f32.mrb[0].mxu0
        %v1282 = vpop.f32.mrb[0].mxu0
        %1283 = vdwg.mxu0
        %v1284 = vpack.c.bf16 %v1279, %v1279
        %v1287 = vunpack.c.l.s4 1966171168
        %v1288 = vunpack.c.0.s8 %v1287
        %v1289 = vlaneseq
        %v1290 = vshrl.u32 %v1289, 7
        %v1291 = vsub.s32 %v1288, %v1290
        %v1292 = vrot.slane %v1284, %v1291
        %v1293 = vcombine.high %v1292, %v1292
        %v1295 = vunpack.c.l.s4 1966171168
        %v1296 = vunpack.c.0.s8 %v1295
        %v1297 = vlaneseq
        %v1298 = vshrl.u32 %v1297, 7
        %v1299 = vsub.s32 %v1296, %v1298
        %v1300 = vrot.slane %v1292, %v1299
        %v1302 = vunpack.c.l.s4 1966171168
        %v1303 = vunpack.c.0.s8 %v1302
        %v1304 = vlaneseq
        %v1305 = vshrl.u32 %v1304, 7
        %v1306 = vsub.s32 %v1303, %v1305
        %v1307 = vrot.slane %v1293, %v1306
        %v1308 = vunpack.i.l.s16 %v1300
        %v1309 = vunpack.i.h.s16 %v1300
        %v1310 = vunpack.i.l.s16 %v1307
        %v1311 = vunpack.i.h.s16 %v1307
        %v1312 = vpack.i.b16 %v1308, %v1308
        %v1313 = vpack.i.b16 %v1309, %v1309
        %v1314 = vpack.i.b16 %v1310, %v1310
        %v1315 = vpack.i.b16 %v1311, %v1311
        %v1317 = vunpack.c.l.s4 286326784
        %v1318 = vunpack.c.0.s8 %v1317
        %v1319 = vlaneseq
        %v1320 = vshrl.u32 %v1319, 7
        %v1321 = vsub.s32 %v1318, %v1320
        %v1322 = vrot.slane %v1312, %v1321
        %v1324 = vunpack.c.l.s4 286326784
        %v1325 = vunpack.c.0.s8 %v1324
        %v1326 = vlaneseq
        %v1327 = vshrl.u32 %v1326, 7
        %v1328 = vsub.s32 %v1325, %v1327
        %v1329 = vrot.slane %v1313, %v1328
        %v1331 = vunpack.c.l.s4 286326784
        %v1332 = vunpack.c.0.s8 %v1331
        %v1333 = vlaneseq
        %v1334 = vshrl.u32 %v1333, 7
        %v1335 = vsub.s32 %v1332, %v1334
        %v1336 = vrot.slane %v1314, %v1335
        %v1338 = vunpack.c.l.s4 286326784
        %v1339 = vunpack.c.0.s8 %v1338
        %v1340 = vlaneseq
        %v1341 = vshrl.u32 %v1340, 7
        %v1342 = vsub.s32 %v1339, %v1341
        %v1343 = vrot.slane %v1315, %v1342
        %vm1348 = vcmask 123905
        %vm1349 = vsmask.f32 1280
        %vm1350 = vmand %vm1348, %vm1349
        %v1351 = vld [vmem:[%s312] sm:$0x2]
        %v1352 = vsel %vm1350, %v1322, %v1351
        %1353 = vst [vmem:[%s312] sm:$0x2] %v1352
        %v1354 = vld [vmem:[%s312 + $0x4] sm:$0x2]
        %v1355 = vsel %vm1350, %v1329, %v1354
        %1356 = vst [vmem:[%s312 + $0x4] sm:$0x2] %v1355
        %v1357 = vld [vmem:[%s312 + $0x8] sm:$0x2]
        %v1358 = vsel %vm1350, %v1336, %v1357
        %1359 = vst [vmem:[%s312 + $0x8] sm:$0x2] %v1358
        %v1360 = vld [vmem:[%s312 + $0xc] sm:$0x2]
        %v1361 = vsel %vm1350, %v1343, %v1360
        %1362 = vst [vmem:[%s312 + $0xc] sm:$0x2] %v1361
        %v1363 = vld [vmem:[%s3] sm:$0x3]
        %1364 = vmatprep.subr.bf16.mxu0 0
        %1365 = vmatpush1.bf16.xpose.msra.mxu0 %v606
        %1366 = vmatprep.subr.bf16.mxu0 0
        %1367 = vmatpush1.bf16.xpose.msra.mxu0 0
        %1368 = vmatprep.subr.bf16.mxu0 0
        %1369 = vmatpush1.bf16.xpose.msra.mxu0 0
        %1370 = vmatprep.subr.bf16.mxu0 0
        %1371 = vmatpush1.bf16.xpose.msra.mxu0 0
        %1372 = vmatprep.subr.bf16.mxu0 0
        %1373 = vmatpush1.bf16.xpose.msra.mxu0 0
        %1374 = vmatprep.subr.bf16.mxu0 0
        %1375 = vmatpush1.bf16.xpose.msra.mxu0 0
        %1376 = vmatprep.subr.bf16.mxu0 0
        %1377 = vmatpush1.bf16.xpose.msra.mxu0 0
        %1378 = vmatprep.subr.bf16.mxu0 0
        %1379 = vmatpush1.bf16.xpose.msra.mxu0 0
        %1380 = vmatprep.subr.bf16.mxu0 0
        %1381 = vmatpush1.bf16.xpose.msra.mxu0 0
        %1382 = vmatprep.subr.bf16.mxu0 0
        %1383 = vmatpush1.bf16.xpose.msra.mxu0 0
        %1384 = vmatprep.subr.bf16.mxu0 0
        %1385 = vmatpush1.bf16.xpose.msra.mxu0 0
        %1386 = vmatprep.subr.bf16.mxu0 0
        %1387 = vmatpush1.bf16.xpose.msra.mxu0 0
        %1388 = vmatprep.subr.bf16.mxu0 0
        %1389 = vmatpush1.bf16.xpose.msra.mxu0 0
        %1390 = vmatprep.subr.bf16.mxu0 0
        %1391 = vmatpush1.bf16.xpose.msra.mxu0 0
        %1392 = vmatprep.subr.bf16.mxu0 0
        %1393 = vmatpush1.bf16.xpose.msra.mxu0 0
        %1394 = vmatprep.subr.bf16.mxu0 0
        %1395 = vmatpush1.bf16.xpose.msra.mxu0 0
        %1396 = vmatprep.mubr.bf16.mxu0 0
        %1397 = vmatmul.mubr.bf16.gmra.mrb[0].mxu0 %v1363
        %v1398 = vpop.f32.mrb[0].mxu0
        %v1399 = vadd.f32 0.0, %v1398
        %v1400 = vpop.f32.mrb[0].mxu0
        %v1401 = vpop.f32.mrb[0].mxu0
        %v1402 = vpop.f32.mrb[0].mxu0
        %1403 = vdwg.mxu0
        %v1404 = vpack.c.bf16 %v1399, %v1399
        %v1407 = vunpack.c.l.s4 1966171168
        %v1408 = vunpack.c.0.s8 %v1407
        %v1409 = vlaneseq
        %v1410 = vshrl.u32 %v1409, 7
        %v1411 = vsub.s32 %v1408, %v1410
        %v1412 = vrot.slane %v1404, %v1411
        %v1413 = vcombine.high %v1412, %v1412
        %v1415 = vunpack.c.l.s4 1966171168
        %v1416 = vunpack.c.0.s8 %v1415
        %v1417 = vlaneseq
        %v1418 = vshrl.u32 %v1417, 7
        %v1419 = vsub.s32 %v1416, %v1418
        %v1420 = vrot.slane %v1412, %v1419
        %v1422 = vunpack.c.l.s4 1966171168
        %v1423 = vunpack.c.0.s8 %v1422
        %v1424 = vlaneseq
        %v1425 = vshrl.u32 %v1424, 7
        %v1426 = vsub.s32 %v1423, %v1425
        %v1427 = vrot.slane %v1413, %v1426
        %v1428 = vunpack.i.l.s16 %v1420
        %v1429 = vunpack.i.h.s16 %v1420
        %v1430 = vunpack.i.l.s16 %v1427
        %v1431 = vunpack.i.h.s16 %v1427
        %v1432 = vpack.i.b16 %v1428, %v1428
        %v1433 = vpack.i.b16 %v1429, %v1429
        %v1434 = vpack.i.b16 %v1430, %v1430
        %v1435 = vpack.i.b16 %v1431, %v1431
        %v1437 = vunpack.c.l.s4 286326784
        %v1438 = vunpack.c.0.s8 %v1437
        %v1439 = vlaneseq
        %v1440 = vshrl.u32 %v1439, 7
        %v1441 = vsub.s32 %v1438, %v1440
        %v1442 = vrot.slane %v1432, %v1441
        %v1444 = vunpack.c.l.s4 286326784
        %v1445 = vunpack.c.0.s8 %v1444
        %v1446 = vlaneseq
        %v1447 = vshrl.u32 %v1446, 7
        %v1448 = vsub.s32 %v1445, %v1447
        %v1449 = vrot.slane %v1433, %v1448
        %v1451 = vunpack.c.l.s4 286326784
        %v1452 = vunpack.c.0.s8 %v1451
        %v1453 = vlaneseq
        %v1454 = vshrl.u32 %v1453, 7
        %v1455 = vsub.s32 %v1452, %v1454
        %v1456 = vrot.slane %v1434, %v1455
        %v1458 = vunpack.c.l.s4 286326784
        %v1459 = vunpack.c.0.s8 %v1458
        %v1460 = vlaneseq
        %v1461 = vshrl.u32 %v1460, 7
        %v1462 = vsub.s32 %v1459, %v1461
        %v1463 = vrot.slane %v1435, %v1462
        %vm1468 = vsmask.f32 7942
        %vm1469 = vmand %vm1348, %vm1468
        %v1470 = vld [vmem:[%s312] sm:$0x2]
        %v1471 = vsel %vm1469, %v1442, %v1470
        %1472 = vst [vmem:[%s312] sm:$0x2] %v1471
        %v1473 = vld [vmem:[%s312 + $0x4] sm:$0x2]
        %v1474 = vsel %vm1469, %v1449, %v1473
        %1475 = vst [vmem:[%s312 + $0x4] sm:$0x2] %v1474
        %v1476 = vld [vmem:[%s312 + $0x8] sm:$0x2]
        %v1477 = vsel %vm1469, %v1456, %v1476
        %1478 = vst [vmem:[%s312 + $0x8] sm:$0x2] %v1477
        %v1479 = vld [vmem:[%s312 + $0xc] sm:$0x2]
        %v1480 = vsel %vm1469, %v1463, %v1479
        %1481 = vst [vmem:[%s312 + $0xc] sm:$0x2] %v1480
        %v1482 = vld [vmem:[%s3] sm:$0x3]
        %1483 = vmatprep.subr.bf16.mxu0 0
        %1484 = vmatpush1.bf16.xpose.msra.mxu0 %v607
        %1485 = vmatprep.subr.bf16.mxu0 0
        %1486 = vmatpush1.bf16.xpose.msra.mxu0 0
        %1487 = vmatprep.subr.bf16.mxu0 0
        %1488 = vmatpush1.bf16.xpose.msra.mxu0 0
        %1489 = vmatprep.subr.bf16.mxu0 0
        %1490 = vmatpush1.bf16.xpose.msra.mxu0 0
        %1491 = vmatprep.subr.bf16.mxu0 0
        %1492 = vmatpush1.bf16.xpose.msra.mxu0 0
        %1493 = vmatprep.subr.bf16.mxu0 0
        %1494 = vmatpush1.bf16.xpose.msra.mxu0 0
        %1495 = vmatprep.subr.bf16.mxu0 0
        %1496 = vmatpush1.bf16.xpose.msra.mxu0 0
        %1497 = vmatprep.subr.bf16.mxu0 0
        %1498 = vmatpush1.bf16.xpose.msra.mxu0 0
        %1499 = vmatprep.subr.bf16.mxu0 0
        %1500 = vmatpush1.bf16.xpose.msra.mxu0 0
        %1501 = vmatprep.subr.bf16.mxu0 0
        %1502 = vmatpush1.bf16.xpose.msra.mxu0 0
        %1503 = vmatprep.subr.bf16.mxu0 0
        %1504 = vmatpush1.bf16.xpose.msra.mxu0 0
        %1505 = vmatprep.subr.bf16.mxu0 0
        %1506 = vmatpush1.bf16.xpose.msra.mxu0 0
        %1507 = vmatprep.subr.bf16.mxu0 0
        %1508 = vmatpush1.bf16.xpose.msra.mxu0 0
        %1509 = vmatprep.subr.bf16.mxu0 0
        %1510 = vmatpush1.bf16.xpose.msra.mxu0 0
        %1511 = vmatprep.subr.bf16.mxu0 0
        %1512 = vmatpush1.bf16.xpose.msra.mxu0 0
        %1513 = vmatprep.subr.bf16.mxu0 0
        %1514 = vmatpush1.bf16.xpose.msra.mxu0 0
        %1515 = vmatprep.mubr.bf16.mxu0 0
        %1516 = vmatmul.mubr.bf16.gmra.mrb[0].mxu0 %v1482
        %v1517 = vpop.f32.mrb[0].mxu0
        %v1518 = vadd.f32 0.0, %v1517
        %v1519 = vpop.f32.mrb[0].mxu0
        %v1520 = vpop.f32.mrb[0].mxu0
        %v1521 = vpop.f32.mrb[0].mxu0
        %1522 = vdwg.mxu0
        %v1523 = vpack.c.bf16 %v1518, %v1518
        %v1526 = vunpack.c.l.s4 1966171168
        %v1527 = vunpack.c.0.s8 %v1526
        %v1528 = vlaneseq
        %v1529 = vshrl.u32 %v1528, 7
        %v1530 = vsub.s32 %v1527, %v1529
        %v1531 = vrot.slane %v1523, %v1530
        %v1532 = vcombine.high %v1531, %v1531
        %v1534 = vunpack.c.l.s4 1966171168
        %v1535 = vunpack.c.0.s8 %v1534
        %v1536 = vlaneseq
        %v1537 = vshrl.u32 %v1536, 7
        %v1538 = vsub.s32 %v1535, %v1537
        %v1539 = vrot.slane %v1531, %v1538
        %v1541 = vunpack.c.l.s4 1966171168
        %v1542 = vunpack.c.0.s8 %v1541
        %v1543 = vlaneseq
        %v1544 = vshrl.u32 %v1543, 7
        %v1545 = vsub.s32 %v1542, %v1544
        %v1546 = vrot.slane %v1532, %v1545
        %v1547 = vunpack.i.l.s16 %v1539
        %v1548 = vunpack.i.h.s16 %v1539
        %v1549 = vunpack.i.l.s16 %v1546
        %v1550 = vunpack.i.h.s16 %v1546
        %v1551 = vpack.i.b16 %v1547, %v1547
        %v1552 = vpack.i.b16 %v1548, %v1548
        %v1553 = vpack.i.b16 %v1549, %v1549
        %v1554 = vpack.i.b16 %v1550, %v1550
        %v1556 = vunpack.c.l.s4 286326784
        %v1557 = vunpack.c.0.s8 %v1556
        %v1558 = vlaneseq
        %v1559 = vshrl.u32 %v1558, 7
        %v1560 = vsub.s32 %v1557, %v1559
        %v1561 = vrot.slane %v1551, %v1560
        %v1563 = vunpack.c.l.s4 286326784
        %v1564 = vunpack.c.0.s8 %v1563
        %v1565 = vlaneseq
        %v1566 = vshrl.u32 %v1565, 7
        %v1567 = vsub.s32 %v1564, %v1566
        %v1568 = vrot.slane %v1552, %v1567
        %v1570 = vunpack.c.l.s4 286326784
        %v1571 = vunpack.c.0.s8 %v1570
        %v1572 = vlaneseq
        %v1573 = vshrl.u32 %v1572, 7
        %v1574 = vsub.s32 %v1571, %v1573
        %v1575 = vrot.slane %v1553, %v1574
        %v1577 = vunpack.c.l.s4 286326784
        %v1578 = vunpack.c.0.s8 %v1577
        %v1579 = vlaneseq
        %v1580 = vshrl.u32 %v1579, 7
        %v1581 = vsub.s32 %v1578, %v1580
        %v1582 = vrot.slane %v1554, %v1581
        %vm1587 = vcmask 124930
        %vm1588 = vsmask.f32 2304
        %vm1589 = vmand %vm1587, %vm1588
        %v1590 = vld [vmem:[%s312] sm:$0x4]
        %v1591 = vsel %vm1589, %v1561, %v1590
        %1592 = vst [vmem:[%s312] sm:$0x4] %v1591
        %v1593 = vld [vmem:[%s312 + $0x4] sm:$0x4]
        %v1594 = vsel %vm1589, %v1568, %v1593
        %1595 = vst [vmem:[%s312 + $0x4] sm:$0x4] %v1594
        %v1596 = vld [vmem:[%s312 + $0x8] sm:$0x4]
        %v1597 = vsel %vm1589, %v1575, %v1596
        %1598 = vst [vmem:[%s312 + $0x8] sm:$0x4] %v1597
        %v1599 = vld [vmem:[%s312 + $0xc] sm:$0x4]
        %v1600 = vsel %vm1589, %v1582, %v1599
        %1601 = vst [vmem:[%s312 + $0xc] sm:$0x4] %v1600
        %v1602 = vld [vmem:[%s3] sm:$0x3]
        %1603 = vmatprep.subr.bf16.mxu0 0
        %1604 = vmatpush1.bf16.xpose.msra.mxu0 %v608
        %1605 = vmatprep.subr.bf16.mxu0 0
        %1606 = vmatpush1.bf16.xpose.msra.mxu0 0
        %1607 = vmatprep.subr.bf16.mxu0 0
        %1608 = vmatpush1.bf16.xpose.msra.mxu0 0
        %1609 = vmatprep.subr.bf16.mxu0 0
        %1610 = vmatpush1.bf16.xpose.msra.mxu0 0
        %1611 = vmatprep.subr.bf16.mxu0 0
        %1612 = vmatpush1.bf16.xpose.msra.mxu0 0
        %1613 = vmatprep.subr.bf16.mxu0 0
        %1614 = vmatpush1.bf16.xpose.msra.mxu0 0
        %1615 = vmatprep.subr.bf16.mxu0 0
        %1616 = vmatpush1.bf16.xpose.msra.mxu0 0
        %1617 = vmatprep.subr.bf16.mxu0 0
        %1618 = vmatpush1.bf16.xpose.msra.mxu0 0
        %1619 = vmatprep.subr.bf16.mxu0 0
        %1620 = vmatpush1.bf16.xpose.msra.mxu0 0
        %1621 = vmatprep.subr.bf16.mxu0 0
        %1622 = vmatpush1.bf16.xpose.msra.mxu0 0
        %1623 = vmatprep.subr.bf16.mxu0 0
        %1624 = vmatpush1.bf16.xpose.msra.mxu0 0
        %1625 = vmatprep.subr.bf16.mxu0 0
        %1626 = vmatpush1.bf16.xpose.msra.mxu0 0
        %1627 = vmatprep.subr.bf16.mxu0 0
        %1628 = vmatpush1.bf16.xpose.msra.mxu0 0
        %1629 = vmatprep.subr.bf16.mxu0 0
        %1630 = vmatpush1.bf16.xpose.msra.mxu0 0
        %1631 = vmatprep.subr.bf16.mxu0 0
        %1632 = vmatpush1.bf16.xpose.msra.mxu0 0
        %1633 = vmatprep.subr.bf16.mxu0 0
        %1634 = vmatpush1.bf16.xpose.msra.mxu0 0
        %1635 = vmatprep.mubr.bf16.mxu0 0
        %1636 = vmatmul.mubr.bf16.gmra.mrb[0].mxu0 %v1602
        %v1637 = vpop.f32.mrb[0].mxu0
        %v1638 = vadd.f32 0.0, %v1637
        %v1639 = vpop.f32.mrb[0].mxu0
        %v1640 = vpop.f32.mrb[0].mxu0
        %v1641 = vpop.f32.mrb[0].mxu0
        %1642 = vdwg.mxu0
        %v1643 = vpack.c.bf16 %v1638, %v1638
        %v1646 = vunpack.c.l.s4 1966171168
        %v1647 = vunpack.c.0.s8 %v1646
        %v1648 = vlaneseq
        %v1649 = vshrl.u32 %v1648, 7
        %v1650 = vsub.s32 %v1647, %v1649
        %v1651 = vrot.slane %v1643, %v1650
        %v1652 = vcombine.high %v1651, %v1651
        %v1654 = vunpack.c.l.s4 1966171168
        %v1655 = vunpack.c.0.s8 %v1654
        %v1656 = vlaneseq
        %v1657 = vshrl.u32 %v1656, 7
        %v1658 = vsub.s32 %v1655, %v1657
        %v1659 = vrot.slane %v1651, %v1658
        %v1661 = vunpack.c.l.s4 1966171168
        %v1662 = vunpack.c.0.s8 %v1661
        %v1663 = vlaneseq
        %v1664 = vshrl.u32 %v1663, 7
        %v1665 = vsub.s32 %v1662, %v1664
        %v1666 = vrot.slane %v1652, %v1665
        %v1667 = vunpack.i.l.s16 %v1659
        %v1668 = vunpack.i.h.s16 %v1659
        %v1669 = vunpack.i.l.s16 %v1666
        %v1670 = vunpack.i.h.s16 %v1666
        %v1671 = vpack.i.b16 %v1667, %v1667
        %v1672 = vpack.i.b16 %v1668, %v1668
        %v1673 = vpack.i.b16 %v1669, %v1669
        %v1674 = vpack.i.b16 %v1670, %v1670
        %v1676 = vunpack.c.l.s4 286326784
        %v1677 = vunpack.c.0.s8 %v1676
        %v1678 = vlaneseq
        %v1679 = vshrl.u32 %v1678, 7
        %v1680 = vsub.s32 %v1677, %v1679
        %v1681 = vrot.slane %v1671, %v1680
        %v1683 = vunpack.c.l.s4 286326784
        %v1684 = vunpack.c.0.s8 %v1683
        %v1685 = vlaneseq
        %v1686 = vshrl.u32 %v1685, 7
        %v1687 = vsub.s32 %v1684, %v1686
        %v1688 = vrot.slane %v1672, %v1687
        %v1690 = vunpack.c.l.s4 286326784
        %v1691 = vunpack.c.0.s8 %v1690
        %v1692 = vlaneseq
        %v1693 = vshrl.u32 %v1692, 7
        %v1694 = vsub.s32 %v1691, %v1693
        %v1695 = vrot.slane %v1673, %v1694
        %v1697 = vunpack.c.l.s4 286326784
        %v1698 = vunpack.c.0.s8 %v1697
        %v1699 = vlaneseq
        %v1700 = vshrl.u32 %v1699, 7
        %v1701 = vsub.s32 %v1698, %v1700
        %v1702 = vrot.slane %v1674, %v1701
        %vm1707 = vsmask.f32 7946
        %vm1708 = vmand %vm1587, %vm1707
        %v1709 = vld [vmem:[%s312] sm:$0x4]
        %v1710 = vsel %vm1708, %v1681, %v1709
        %1711 = vst [vmem:[%s312] sm:$0x4] %v1710
        %v1712 = vld [vmem:[%s312 + $0x4] sm:$0x4]
        %v1713 = vsel %vm1708, %v1688, %v1712
        %1714 = vst [vmem:[%s312 + $0x4] sm:$0x4] %v1713
        %v1715 = vld [vmem:[%s312 + $0x8] sm:$0x4]
        %v1716 = vsel %vm1708, %v1695, %v1715
        %1717 = vst [vmem:[%s312 + $0x8] sm:$0x4] %v1716
        %v1718 = vld [vmem:[%s312 + $0xc] sm:$0x4]
        %v1719 = vsel %vm1708, %v1702, %v1718
        %1720 = vst [vmem:[%s312 + $0xc] sm:$0x4] %v1719
        %v1721 = vld [vmem:[%s3] sm:$0x3]
        %1722 = vmatprep.subr.bf16.mxu0 0
        %1723 = vmatpush1.bf16.xpose.msra.mxu0 %v609
        %1724 = vmatprep.subr.bf16.mxu0 0
        %1725 = vmatpush1.bf16.xpose.msra.mxu0 0
        %1726 = vmatprep.subr.bf16.mxu0 0
        %1727 = vmatpush1.bf16.xpose.msra.mxu0 0
        %1728 = vmatprep.subr.bf16.mxu0 0
        %1729 = vmatpush1.bf16.xpose.msra.mxu0 0
        %1730 = vmatprep.subr.bf16.mxu0 0
        %1731 = vmatpush1.bf16.xpose.msra.mxu0 0
        %1732 = vmatprep.subr.bf16.mxu0 0
        %1733 = vmatpush1.bf16.xpose.msra.mxu0 0
        %1734 = vmatprep.subr.bf16.mxu0 0
        %1735 = vmatpush1.bf16.xpose.msra.mxu0 0
        %1736 = vmatprep.subr.bf16.mxu0 0
        %1737 = vmatpush1.bf16.xpose.msra.mxu0 0
        %1738 = vmatprep.subr.bf16.mxu0 0
        %1739 = vmatpush1.bf16.xpose.msra.mxu0 0
        %1740 = vmatprep.subr.bf16.mxu0 0
        %1741 = vmatpush1.bf16.xpose.msra.mxu0 0
        %1742 = vmatprep.subr.bf16.mxu0 0
        %1743 = vmatpush1.bf16.xpose.msra.mxu0 0
        %1744 = vmatprep.subr.bf16.mxu0 0
        %1745 = vmatpush1.bf16.xpose.msra.mxu0 0
        %1746 = vmatprep.subr.bf16.mxu0 0
        %1747 = vmatpush1.bf16.xpose.msra.mxu0 0
        %1748 = vmatprep.subr.bf16.mxu0 0
        %1749 = vmatpush1.bf16.xpose.msra.mxu0 0
        %1750 = vmatprep.subr.bf16.mxu0 0
        %1751 = vmatpush1.bf16.xpose.msra.mxu0 0
        %1752 = vmatprep.subr.bf16.mxu0 0
        %1753 = vmatpush1.bf16.xpose.msra.mxu0 0
        %1754 = vmatprep.mubr.bf16.mxu0 0
        %1755 = vmatmul.mubr.bf16.gmra.mrb[0].mxu0 %v1721
        %v1756 = vpop.f32.mrb[0].mxu0
        %v1757 = vadd.f32 0.0, %v1756
        %v1758 = vpop.f32.mrb[0].mxu0
        %v1759 = vpop.f32.mrb[0].mxu0
        %v1760 = vpop.f32.mrb[0].mxu0
        %1761 = vdwg.mxu0
        %v1762 = vpack.c.bf16 %v1757, %v1757
        %v1765 = vunpack.c.l.s4 1966171168
        %v1766 = vunpack.c.0.s8 %v1765
        %v1767 = vlaneseq
        %v1768 = vshrl.u32 %v1767, 7
        %v1769 = vsub.s32 %v1766, %v1768
        %v1770 = vrot.slane %v1762, %v1769
        %v1771 = vcombine.high %v1770, %v1770
        %v1773 = vunpack.c.l.s4 1966171168
        %v1774 = vunpack.c.0.s8 %v1773
        %v1775 = vlaneseq
        %v1776 = vshrl.u32 %v1775, 7
        %v1777 = vsub.s32 %v1774, %v1776
        %v1778 = vrot.slane %v1770, %v1777
        %v1780 = vunpack.c.l.s4 1966171168
        %v1781 = vunpack.c.0.s8 %v1780
        %v1782 = vlaneseq
        %v1783 = vshrl.u32 %v1782, 7
        %v1784 = vsub.s32 %v1781, %v1783
        %v1785 = vrot.slane %v1771, %v1784
        %v1786 = vunpack.i.l.s16 %v1778
        %v1787 = vunpack.i.h.s16 %v1778
        %v1788 = vunpack.i.l.s16 %v1785
        %v1789 = vunpack.i.h.s16 %v1785
        %v1790 = vpack.i.b16 %v1786, %v1786
        %v1791 = vpack.i.b16 %v1787, %v1787
        %v1792 = vpack.i.b16 %v1788, %v1788
        %v1793 = vpack.i.b16 %v1789, %v1789
        %v1795 = vunpack.c.l.s4 286326784
        %v1796 = vunpack.c.0.s8 %v1795
        %v1797 = vlaneseq
        %v1798 = vshrl.u32 %v1797, 7
        %v1799 = vsub.s32 %v1796, %v1798
        %v1800 = vrot.slane %v1790, %v1799
        %v1802 = vunpack.c.l.s4 286326784
        %v1803 = vunpack.c.0.s8 %v1802
        %v1804 = vlaneseq
        %v1805 = vshrl.u32 %v1804, 7
        %v1806 = vsub.s32 %v1803, %v1805
        %v1807 = vrot.slane %v1791, %v1806
        %v1809 = vunpack.c.l.s4 286326784
        %v1810 = vunpack.c.0.s8 %v1809
        %v1811 = vlaneseq
        %v1812 = vshrl.u32 %v1811, 7
        %v1813 = vsub.s32 %v1810, %v1812
        %v1814 = vrot.slane %v1792, %v1813
        %v1816 = vunpack.c.l.s4 286326784
        %v1817 = vunpack.c.0.s8 %v1816
        %v1818 = vlaneseq
        %v1819 = vshrl.u32 %v1818, 7
        %v1820 = vsub.s32 %v1817, %v1819
        %v1821 = vrot.slane %v1793, %v1820
        %vm1826 = vcmask 125955
        %vm1827 = vsmask.f32 3328
        %vm1828 = vmand %vm1826, %vm1827
        %v1829 = vld [vmem:[%s312] sm:$0x8]
        %v1830 = vsel %vm1828, %v1800, %v1829
        %1831 = vst [vmem:[%s312] sm:$0x8] %v1830
        %v1832 = vld [vmem:[%s312 + $0x4] sm:$0x8]
        %v1833 = vsel %vm1828, %v1807, %v1832
        %1834 = vst [vmem:[%s312 + $0x4] sm:$0x8] %v1833
        %v1835 = vld [vmem:[%s312 + $0x8] sm:$0x8]
        %v1836 = vsel %vm1828, %v1814, %v1835
        %1837 = vst [vmem:[%s312 + $0x8] sm:$0x8] %v1836
        %v1838 = vld [vmem:[%s312 + $0xc] sm:$0x8]
        %v1839 = vsel %vm1828, %v1821, %v1838
        %1840 = vst [vmem:[%s312 + $0xc] sm:$0x8] %v1839
        %v1841 = vld [vmem:[%s3] sm:$0x3]
        %1842 = vmatprep.subr.bf16.mxu0 0
        %1843 = vmatpush1.bf16.xpose.msra.mxu0 %v610
        %1844 = vmatprep.subr.bf16.mxu0 0
        %1845 = vmatpush1.bf16.xpose.msra.mxu0 0
        %1846 = vmatprep.subr.bf16.mxu0 0
        %1847 = vmatpush1.bf16.xpose.msra.mxu0 0
        %1848 = vmatprep.subr.bf16.mxu0 0
        %1849 = vmatpush1.bf16.xpose.msra.mxu0 0
        %1850 = vmatprep.subr.bf16.mxu0 0
        %1851 = vmatpush1.bf16.xpose.msra.mxu0 0
        %1852 = vmatprep.subr.bf16.mxu0 0
        %1853 = vmatpush1.bf16.xpose.msra.mxu0 0
        %1854 = vmatprep.subr.bf16.mxu0 0
        %1855 = vmatpush1.bf16.xpose.msra.mxu0 0
        %1856 = vmatprep.subr.bf16.mxu0 0
        %1857 = vmatpush1.bf16.xpose.msra.mxu0 0
        %1858 = vmatprep.subr.bf16.mxu0 0
        %1859 = vmatpush1.bf16.xpose.msra.mxu0 0
        %1860 = vmatprep.subr.bf16.mxu0 0
        %1861 = vmatpush1.bf16.xpose.msra.mxu0 0
        %1862 = vmatprep.subr.bf16.mxu0 0
        %1863 = vmatpush1.bf16.xpose.msra.mxu0 0
        %1864 = vmatprep.subr.bf16.mxu0 0
        %1865 = vmatpush1.bf16.xpose.msra.mxu0 0
        %1866 = vmatprep.subr.bf16.mxu0 0
        %1867 = vmatpush1.bf16.xpose.msra.mxu0 0
        %1868 = vmatprep.subr.bf16.mxu0 0
        %1869 = vmatpush1.bf16.xpose.msra.mxu0 0
        %1870 = vmatprep.subr.bf16.mxu0 0
        %1871 = vmatpush1.bf16.xpose.msra.mxu0 0
        %1872 = vmatprep.subr.bf16.mxu0 0
        %1873 = vmatpush1.bf16.xpose.msra.mxu0 0
        %1874 = vmatprep.mubr.bf16.mxu0 0
        %1875 = vmatmul.mubr.bf16.gmra.mrb[0].mxu0 %v1841
        %v1876 = vpop.f32.mrb[0].mxu0
        %v1877 = vadd.f32 0.0, %v1876
        %v1878 = vpop.f32.mrb[0].mxu0
        %v1879 = vpop.f32.mrb[0].mxu0
        %v1880 = vpop.f32.mrb[0].mxu0
        %1881 = vdwg.mxu0
        %v1882 = vpack.c.bf16 %v1877, %v1877
        %v1885 = vunpack.c.l.s4 1966171168
        %v1886 = vunpack.c.0.s8 %v1885
        %v1887 = vlaneseq
        %v1888 = vshrl.u32 %v1887, 7
        %v1889 = vsub.s32 %v1886, %v1888
        %v1890 = vrot.slane %v1882, %v1889
        %v1891 = vcombine.high %v1890, %v1890
        %v1893 = vunpack.c.l.s4 1966171168
        %v1894 = vunpack.c.0.s8 %v1893
        %v1895 = vlaneseq
        %v1896 = vshrl.u32 %v1895, 7
        %v1897 = vsub.s32 %v1894, %v1896
        %v1898 = vrot.slane %v1890, %v1897
        %v1900 = vunpack.c.l.s4 1966171168
        %v1901 = vunpack.c.0.s8 %v1900
        %v1902 = vlaneseq
        %v1903 = vshrl.u32 %v1902, 7
        %v1904 = vsub.s32 %v1901, %v1903
        %v1905 = vrot.slane %v1891, %v1904
        %v1906 = vunpack.i.l.s16 %v1898
        %v1907 = vunpack.i.h.s16 %v1898
        %v1908 = vunpack.i.l.s16 %v1905
        %v1909 = vunpack.i.h.s16 %v1905
        %v1910 = vpack.i.b16 %v1906, %v1906
        %v1911 = vpack.i.b16 %v1907, %v1907
        %v1912 = vpack.i.b16 %v1908, %v1908
        %v1913 = vpack.i.b16 %v1909, %v1909
        %v1915 = vunpack.c.l.s4 286326784
        %v1916 = vunpack.c.0.s8 %v1915
        %v1917 = vlaneseq
        %v1918 = vshrl.u32 %v1917, 7
        %v1919 = vsub.s32 %v1916, %v1918
        %v1920 = vrot.slane %v1910, %v1919
        %v1922 = vunpack.c.l.s4 286326784
        %v1923 = vunpack.c.0.s8 %v1922
        %v1924 = vlaneseq
        %v1925 = vshrl.u32 %v1924, 7
        %v1926 = vsub.s32 %v1923, %v1925
        %v1927 = vrot.slane %v1911, %v1926
        %v1929 = vunpack.c.l.s4 286326784
        %v1930 = vunpack.c.0.s8 %v1929
        %v1931 = vlaneseq
        %v1932 = vshrl.u32 %v1931, 7
        %v1933 = vsub.s32 %v1930, %v1932
        %v1934 = vrot.slane %v1912, %v1933
        %v1936 = vunpack.c.l.s4 286326784
        %v1937 = vunpack.c.0.s8 %v1936
        %v1938 = vlaneseq
        %v1939 = vshrl.u32 %v1938, 7
        %v1940 = vsub.s32 %v1937, %v1939
        %v1941 = vrot.slane %v1913, %v1940
        %vm1946 = vsmask.f32 7950
        %vm1947 = vmand %vm1826, %vm1946
        %v1948 = vld [vmem:[%s312] sm:$0x8]
        %v1949 = vsel %vm1947, %v1920, %v1948
        %1950 = vst [vmem:[%s312] sm:$0x8] %v1949
        %v1951 = vld [vmem:[%s312 + $0x4] sm:$0x8]
        %v1952 = vsel %vm1947, %v1927, %v1951
        %1953 = vst [vmem:[%s312 + $0x4] sm:$0x8] %v1952
        %v1954 = vld [vmem:[%s312 + $0x8] sm:$0x8]
        %v1955 = vsel %vm1947, %v1934, %v1954
        %1956 = vst [vmem:[%s312 + $0x8] sm:$0x8] %v1955
        %v1957 = vld [vmem:[%s312 + $0xc] sm:$0x8]
        %v1958 = vsel %vm1947, %v1941, %v1957
        %1959 = vst [vmem:[%s312 + $0xc] sm:$0x8] %v1958
        %s1960 = smul.u32 8, %s23
        %s1961 = smul.u32 2, %s24
        %p1962 = scmp.lt.s32.totalorder %s1960, 15
        %s1963 = scalar_select %p1962, %s1960, 15
        %p1964 = scmp.lt.s32.totalorder %s1961, 1
        %s1965 = scalar_select %p1964, %s1961, 1
        %s1966 = smul.addr %s1963, 2
        %s1967 = sadd.s32 %s1965, %s1966
        %s1968 = smul.addr %s1967, 4
        %s1969 = scalar_lea.vmem %s5, %s1968
        %s1970 = sand.u32 %s181, 1
        %s1971 = sand.u32 %s181, 1
        %s1972 = smul.addr %s1971, 16
        %s1973 = scalar_lea.vmem [#allocation2], %s1972
        %s1974 = smul.u32 8, %s23
        %s1975 = smul.u32 2, %s24
        %p1976 = scmp.lt.s32.totalorder %s1974, 15
        %s1977 = scalar_select %p1976, %s1974, 15
        %p1978 = scmp.lt.s32.totalorder %s1975, 1
        %s1979 = scalar_select %p1978, %s1975, 1
        %s1980 = smul.addr %s1979, 2
        %s1981 = smul.addr %s1977, 4
        %s1982 = sadd.s32 %s1980, %s1981
        %s1983 = smul.addr %s1982, 4
        %s1984 = scalar_lea.vmem %s7, %s1983
        // Predicated region
        $region41: #{attention_mix.2} parent=39 // pred_check
          %p1985 = pneg %p163
        $region42: #{attention_mix.2} parent=39 // pred_check_branch
          %1987 = sbr.rel (%p1985) target = $region44
        $region43: #{attention_mix.2} parent=39 // pred_region
          %s1988 = smul.u32 8, %s23
          %s1989 = smul.u32 2, %s24
        $region44: #{attention_mix.2} parent=39 // pred_fallthru
          _
        // Predicated region
        $region45: #{attention_mix.2} parent=39 // pred_check
          %p1990 = pneg %p191
        $region46: #{attention_mix.2} parent=39 // pred_check_branch
          %1992 = sbr.rel (%p1990) target = $region48
        $region47: #{attention_mix.2} parent=39 // pred_region
          %s1993 = sadd.s32 %s24, %s23
          %s1994 = smul.addr %s1993, 4
          %s1995 = scalar_lea.vmem %s6, %s1994
          // Predicated region
          $region49: #{attention_mix.2} parent=47 // pred_check
            _
          $region50: #{attention_mix.2} parent=47 // pred_check_branch
            %1997 = sbr.rel (0) target = $region52
          $region51: #{attention_mix.2} parent=47 // pred_region
            // Predicated region
            $region53: #{attention_mix.2} parent=51 // pred_check
              _
            $region54: #{attention_mix.2} parent=51 // pred_check_branch
              %1999 = sbr.rel target = $region56
            $region55: #{attention_mix.2} parent=51 // pred_region
              // Predicated region
              $region68: #{attention_mix.2} parent=55 // pred_check
                _
              $region69: #{attention_mix.2} parent=55 // pred_check_branch
                %2020 = sbr.rel (0) target = $region71
              $region70: #{attention_mix.2} parent=55 // pred_region
                loop: start=0, step=1, limit=1
                $region72: #{attention_mix.2} parent=70 // loop_pre_header
                  _
                $region73: #{attention_mix.2} parent=70 // loop_header
                  %s2022 = sphi 0, %s2026
                  %p2023 = scmp.ge.s32.totalorder %s2022, 1
                  %s2027 = sphi %s1973, %s1973
                  %s2028 = sphi %s1995, %s1995
                $region74: #{attention_mix.2} parent=70 // loop_header_branch
                  %2025 = sbr.rel (%p2023) target = $region78
                $region75: #{attention_mix.2} parent=70 // loop_body
                  _
                $region76: #{attention_mix.2} parent=70 // loop_footer
                  %s2026 = sadd.s32 1, %s2022
                $region77: #{attention_mix.2} parent=70 // loop_footer_branch
                  %2021 = sbr.rel target = $region73
                $region78: #{attention_mix.2} parent=70 // loop_exit
                  _
                loop: start=0, step=1, limit=1
                $region79: #{attention_mix.2} parent=70 // loop_pre_header
                  _
                $region80: #{attention_mix.2} parent=70 // loop_header
                  %s2031 = sphi 0, %s2035
                  %p2032 = scmp.ge.s32.totalorder %s2031, 1
                  %s2036 = sphi %s1973, %s1973
                  %s2037 = sphi %s1995, %s1995
                $region81: #{attention_mix.2} parent=70 // loop_header_branch
                  %2034 = sbr.rel (%p2032) target = $region85
                $region82: #{attention_mix.2} parent=70 // loop_body
                  %v2038 = vld [vmem:[%s2036] sm:$0xf]
                  %2039 = vst [vmem:[%s2037] sm:$0xf] %v2038
                  %v2040 = vld [vmem:[%s2036 + $0x4] sm:$0xf]
                  %2041 = vst [vmem:[%s2037 + $0x8] sm:$0xf] %v2040
                  %v2042 = vld [vmem:[%s2036 + $0x8] sm:$0xf]
                  %2043 = vst [vmem:[%s2037 + $0x10] sm:$0xf] %v2042
                  %v2044 = vld [vmem:[%s2036 + $0xc] sm:$0xf]
                  %2045 = vst [vmem:[%s2037 + $0x18] sm:$0xf] %v2044
                $region83: #{attention_mix.2} parent=70 // loop_footer
                  %s2035 = sadd.s32 1, %s2031
                $region84: #{attention_mix.2} parent=70 // loop_footer_branch
                  %2030 = sbr.rel target = $region80
                $region85: #{attention_mix.2} parent=70 // loop_exit
                  _
              $region71: #{attention_mix.2} parent=55 // pred_fallthru
                _
            $region56: #{attention_mix.2} parent=51 // pred_fallthru
              _
            // Predicated region
            $region57: #{attention_mix.2} parent=51 // pred_check
              _
            $region58: #{attention_mix.2} parent=51 // pred_check_branch
              %2001 = sbr.rel (0) target = $region60
            $region59: #{attention_mix.2} parent=51 // pred_region
              loop: start=0, step=1, limit=1
              $region61: #{attention_mix.2} parent=59 // loop_pre_header
                _
              $region62: #{attention_mix.2} parent=59 // loop_header
                %s2004 = sphi 0, %s2008
                %p2005 = scmp.ge.s32.totalorder %s2004, 1
                %s2009 = sphi %s1973, %s1973
                %s2010 = sphi %s1995, %s1995
              $region63: #{attention_mix.2} parent=59 // loop_header_branch
                %2007 = sbr.rel (%p2005) target = $region67
              $region64: #{attention_mix.2} parent=59 // loop_body
                %v2011 = vld [vmem:[%s2009] sm:$0xf]
                %2012 = vst [vmem:[%s2010] sm:$0xf] %v2011
                %v2013 = vld [vmem:[%s2009 + $0x4] sm:$0xf]
                %2014 = vst [vmem:[%s2010 + $0x8] sm:$0xf] %v2013
                %v2015 = vld [vmem:[%s2009 + $0x8] sm:$0xf]
                %2016 = vst [vmem:[%s2010 + $0x10] sm:$0xf] %v2015
                %v2017 = vld [vmem:[%s2009 + $0xc] sm:$0xf]
                %2018 = vst [vmem:[%s2010 + $0x18] sm:$0xf] %v2017
              $region65: #{attention_mix.2} parent=59 // loop_footer
                %s2008 = sadd.s32 1, %s2004
              $region66: #{attention_mix.2} parent=59 // loop_footer_branch
                %2003 = sbr.rel target = $region62
              $region67: #{attention_mix.2} parent=59 // loop_exit
                _
            $region60: #{attention_mix.2} parent=51 // pred_fallthru
              _
          $region52: #{attention_mix.2} parent=47 // pred_fallthru
            _
          %2046 = vnop
        $region48: #{attention_mix.2} parent=39 // pred_fallthru
          _
        // Predicated region
        $region86: #{attention_mix.2} parent=39 // pred_check
          %p2047 = pneg %p219
        $region87: #{attention_mix.2} parent=39 // pred_check_branch
          %2049 = sbr.rel (%p2047) target = $region89
        $region88: #{attention_mix.2} parent=39 // pred_region
          %s2050 = smul.u32 8, %s23
          %s2051 = smul.u32 2, %s24
        $region89: #{attention_mix.2} parent=39 // pred_fallthru
          _
      $region40: #{attention_mix.2} parent=5 // pred_fallthru
        _
      %p2052 = scmp.le.s32.totalorder 2, %s14
      // Predicated region
      $region90: #{attention_mix.2} parent=5 // pred_check
        %p2053 = pneg %p2052
      $region91: #{attention_mix.2} parent=5 // pred_check_branch
        %2055 = sbr.rel (%p2053) target = $region93
      $region92: #{attention_mix.2} parent=5 // pred_region
        %s2056 = ssub.s32 %s14, 2
        // Predicated region
        $region94: #{attention_mix.2} parent=92 // pred_check
          %p2057 = pneg %p169
        $region95: #{attention_mix.2} parent=92 // pred_check_branch
          %2059 = sbr.rel (%p2057) target = $region97
        $region96: #{attention_mix.2} parent=92 // pred_region
          %s2060 = smul.u32 8, %s25
          %s2061 = smul.u32 2, %s26
          %p2062 = scmp.lt.s32.totalorder %s2060, 15
          %s2063 = scalar_select %p2062, %s2060, 15
          %p2064 = scmp.lt.s32.totalorder %s2061, 1
          %s2065 = scalar_select %p2064, %s2061, 1
          %s2066 = smul.addr %s2063, 2
          %s2067 = sadd.s32 %s2065, %s2066
          %s2068 = smul.addr %s2067, 4
          %s2069 = scalar_lea.vmem %s5, %s2068
        $region97: #{attention_mix.2} parent=92 // pred_fallthru
          _
        // Predicated region
        $region98: #{attention_mix.2} parent=92 // pred_check
          %p2070 = pneg %p197
        $region99: #{attention_mix.2} parent=92 // pred_check_branch
          %2072 = sbr.rel (%p2070) target = $region101
        $region100: #{attention_mix.2} parent=92 // pred_region
          %s2073 = sand.u32 %s182, 1
          %s2074 = sand.u32 %s182, 1
          %s2075 = smul.addr %s2074, 16
          %s2076 = scalar_lea.vmem [#allocation2], %s2075
        $region101: #{attention_mix.2} parent=92 // pred_fallthru
          _
        // Predicated region
        $region102: #{attention_mix.2} parent=92 // pred_check
          %p2077 = pneg %p225
        $region103: #{attention_mix.2} parent=92 // pred_check_branch
          %2079 = sbr.rel (%p2077) target = $region105
        $region104: #{attention_mix.2} parent=92 // pred_region
          %s2080 = smul.u32 8, %s25
          %s2081 = smul.u32 2, %s26
          %p2082 = scmp.lt.s32.totalorder %s2080, 15
          %s2083 = scalar_select %p2082, %s2080, 15
          %p2084 = scmp.lt.s32.totalorder %s2081, 1
          %s2085 = scalar_select %p2084, %s2081, 1
          %s2086 = smul.addr %s2085, 2
          %s2087 = smul.addr %s2083, 4
          %s2088 = sadd.s32 %s2086, %s2087
          %s2089 = smul.addr %s2088, 4
          %s2090 = scalar_lea.vmem %s7, %s2089
        $region105: #{attention_mix.2} parent=92 // pred_fallthru
          _
      $region93: #{attention_mix.2} parent=5 // pred_fallthru
        _
    $region6: #{attention_mix.2} parent=1 // loop_footer
      %s18 = sadd.s32 1, %s14
    $region7: #{attention_mix.2} parent=1 // loop_footer_branch
      %13 = sbr.rel target = $region3
    $region8: #{attention_mix.2} parent=1 // loop_exit
      _

</llo_original>
